<compile_context>
chip_gen: v7x
topology: tpu7x:2x2x1
jax: 0.10.0
libtpu: 0.0.40
codegen_flags: <defaults>
</compile_context>

<pallas_src>
import functools

import jax
import jax.numpy as jnp
from jax.experimental import pallas as pl
from jax.experimental.pallas import tpu as pltpu


def _time_derivative_kernel(t_ref, x_ref, w1x_ref, w1t_ref, b1_ref,
                            w2_ref, b2_ref, o_ref):
    # t_ref : SMEM (1,) scalar
    # x_ref : [TB, D]   w1x_ref : [D, H] (bf16)   w1t_ref/b1_ref : [1, H] (f32)
    # w2_ref: [H, D] (bf16)    b2_ref : [1, D] (f32)   o_ref : [TB, D]
    t = t_ref[0]

    # MXU matmul #1: bf16 inputs (weights arrive pre-cast), f32 accumulation.
    h = jnp.dot(x_ref[...].astype(jnp.bfloat16), w1x_ref[...],
                preferred_element_type=jnp.float32)

    # Time fold + bias + tanh kept in f32 (v5e VPU/EUP have no bf16 path).
    h = jnp.tanh(h + (t * w1t_ref[...] + b1_ref[...]))

    # MXU matmul #2; lane-dense (TB, D) output tile -> unmasked full-width vst.
    out = jnp.dot(h.astype(jnp.bfloat16), w2_ref[...],
                  preferred_element_type=jnp.float32) + b2_ref[...]
    o_ref[...] = out.astype(o_ref.dtype)


def _resident_spec(shape, single_buffer):
    """Constant-index (VMEM-resident) BlockSpec; optionally single-buffered."""
    index_map = lambda i: (0,) * len(shape)
    if single_buffer:
        # Blocks whose index never moves don't need double buffering
        # (saves resident VMEM — matters most on v7x's 64 MiB).
        return pl.BlockSpec(shape, index_map, pipeline_mode=pl.Buffered(1))
    return pl.BlockSpec(shape, index_map)


@functools.partial(jax.jit, static_argnames=("tb", "single_buffer_weights"))
def _time_derivative_call(t, x, w1x, w1t, b1, w2, b2, *, tb,
                          single_buffer_weights):
    B, D = x.shape
    H = w1x.shape[1]
    grid = (pl.cdiv(B, tb),)  # ragged last tile handled by Pallas write clamp

    itemsize = lambda a: jnp.dtype(a.dtype).itemsize
    flops = 4 * B * D * H                              # two (B,D)x(D,H) matmuls
    bytes_accessed = (B * D * 2 * itemsize(x)          # x read + out write
                      + w1x.size * itemsize(w1x) + w2.size * itemsize(w2)
                      + (w1t.size + b1.size + b2.size) * 4 + 4)

    return pl.pallas_call(
        _time_derivative_kernel,
        out_shape=jax.ShapeDtypeStruct((B, D), x.dtype),
        grid=grid,
        in_specs=[
            pl.BlockSpec(memory_space=pltpu.SMEM),              # t (scalar)
            pl.BlockSpec((tb, D), lambda i: (i, 0)),            # x tile (pipelined)
            _resident_spec((D, H), single_buffer_weights),      # W1_x (bf16)
            _resident_spec((1, H), single_buffer_weights),      # w1_t
            _resident_spec((1, H), single_buffer_weights),      # b1
            _resident_spec((H, D), single_buffer_weights),      # W2 (bf16)
            _resident_spec((1, D), single_buffer_weights),      # b2
        ],
        out_specs=pl.BlockSpec((tb, D), lambda i: (i, 0)),
        compiler_params=pltpu.CompilerParams(
            dimension_semantics=("parallel",),                  # v7x: 2 TCs split tiles
            vmem_limit_bytes=32 * 1024 * 1024,
        ),
        cost_estimate=pl.CostEstimate(
            flops=flops, transcendentals=B * H, bytes_accessed=bytes_accessed),
    )(t, x, w1x, w1t, b1, w2, b2)


def _choose_tile(B, tb):
    """Pick the batch row tile: big (overhead-amortizing) but >= ~8 grid steps."""
    if B <= tb:
        return B                       # single full-batch tile (always legal)
    tb = max(8, (tb // 8) * 8)         # sublane multiple
    # v7x megacore: keep >= ~8 grid steps (>=4 per TensorCore) when the batch
    # allows it, but never shrink tiles below 256 rows (per-step overhead
    # ~0.35 us would dominate again).
    while tb > 256 and pl.cdiv(B, tb) < 8:
        tb = max(256, (tb // 2 // 8) * 8)
    return tb


def time_derivative(t, x, params, *, tb=512):
    """f(t, x) = tanh(x @ W1x + t*w1t + b1) @ W2 + b2.   t: (1,), x: [B, D]."""
    w1x, w1t, b1, w2, b2 = params
    tb = _choose_tile(x.shape[0], tb)
    try:
        return _time_derivative_call(t, x, w1x, w1t, b1, w2, b2,
                                     tb=tb, single_buffer_weights=True)
    except Exception:
        # Fallback if this JAX build rejects single-buffered pipeline_mode on
        # constant-index blocks; default double buffering is correct, just
        # uses 2x the (small) resident weight VMEM.
        return _time_derivative_call(t, x, w1x, w1t, b1, w2, b2,
                                     tb=tb, single_buffer_weights=False)


def init_params(key, dim, hidden):
    k1, k2, k3 = jax.random.split(key, 3)
    s1 = 1.0 / jnp.sqrt(dim + 1)
    s2 = 1.0 / jnp.sqrt(hidden)
    # Matmul weights stored in bf16 (the MXU input dtype): cast once here
    # instead of every grid step; halves weight DMA bytes and VMEM residency.
    w1x = (jax.random.normal(k1, (dim, hidden), jnp.float32) * s1).astype(jnp.bfloat16)
    w1t = jax.random.normal(k2, (1, hidden), jnp.float32) * s1
    b1 = jnp.zeros((1, hidden), jnp.float32)
    w2 = (jax.random.normal(k3, (hidden, dim), jnp.float32) * s2).astype(jnp.bfloat16)
    b2 = jnp.zeros((1, dim), jnp.float32)
    return (w1x, w1t, b1, w2, b2)


def reference(t, x, params):
    """Pure-JAX reference mirroring the kernel's bf16-MXU / f32-accumulate math."""
    w1x, w1t, b1, w2, b2 = params
    h = jnp.dot(x.astype(jnp.bfloat16), w1x, preferred_element_type=jnp.float32)
    h = jnp.tanh(h + t[0] * w1t + b1)
    return jnp.dot(h.astype(jnp.bfloat16), w2, preferred_element_type=jnp.float32) + b2


if __name__ == "__main__":
    key = jax.random.PRNGKey(0)
    kx, kp, kx2 = jax.random.split(key, 3)

    # MXU/lane-friendly sizing: D multiple of 128, H multiple of 256 (v6e/v7x
    # MXUs are 2x256x256); B gives 8 grid steps at TB=512 (>=4 per v7x core).
    B, D, H = 4096, 128, 256
    params = init_params(kp, D, H)
    t = jnp.array([0.5], jnp.float32)

    # f32 I/O path.
    x = jax.random.normal(kx, (B, D), jnp.float32)
    out = jax.block_until_ready(time_derivative(t, x, params))
    ref = reference(t, x, params)
    assert out.shape == (B, D) and out.dtype == x.dtype
    err = float(jnp.max(jnp.abs(out - ref)))
    assert jnp.allclose(out, ref, atol=1e-2, rtol=1e-2), f"f32 path mismatch {err}"

    # Ragged batch (not a multiple of the row tile) + bf16 I/O path: no wrapper
    # pad/slice — Pallas clamps the partial last tile's writes, and batch rows
    # never mix in the contraction, so pad garbage cannot leak into valid rows.
    B2 = 1200
    x2 = jax.random.normal(kx2, (B2, D), jnp.float32).astype(jnp.bfloat16)
    out2 = jax.block_until_ready(time_derivative(t, x2, params))
    ref2 = reference(t, x2, params)
    assert out2.shape == (B2, D) and out2.dtype == jnp.bfloat16
    err2 = float(jnp.max(jnp.abs(out2.astype(jnp.float32) - ref2)))
    assert jnp.allclose(out2.astype(jnp.float32), ref2, atol=5e-2, rtol=5e-2), \
        f"bf16/ragged path mismatch {err2}"

    print("KERNEL_OK")
</pallas_src>

<mosaic_0001>
module attributes {stable_mosaic.version = 11 : i64} {
  func.func @_time_derivative_kernel(%arg0: i32, %arg1: memref<1xf32, #tpu.memory_space<smem>>, %arg2: memref<512x128xf32, #tpu.memory_space<vmem>>, %arg3: memref<128x256xbf16, #tpu.memory_space<vmem>>, %arg4: memref<1x256xf32, #tpu.memory_space<vmem>>, %arg5: memref<1x256xf32, #tpu.memory_space<vmem>>, %arg6: memref<256x128xbf16, #tpu.memory_space<vmem>>, %arg7: memref<1x128xf32, #tpu.memory_space<vmem>>, %arg8: memref<512x128xf32, #tpu.memory_space<vmem>>) attributes {dimension_semantics = [#tpu.dimension_semantics<parallel>], iteration_bounds = array<i64: 8>, scalar_prefetch = 0 : i64, scratch_operands = 0 : i64, tpu.core_type = #tpu.core_type<tc>, window_params = [{transform_indices = @transform_0, window_bounds = array<i64: 1>}, {transform_indices = @transform_1, window_bounds = array<i64: 512, 128>}, {pipeline_mode = #tpu.pipeline_mode<synchronous>, transform_indices = @transform_2, window_bounds = array<i64: 128, 256>}, {pipeline_mode = #tpu.pipeline_mode<synchronous>, transform_indices = @transform_3, window_bounds = array<i64: 1, 256>}, {pipeline_mode = #tpu.pipeline_mode<synchronous>, transform_indices = @transform_4, window_bounds = array<i64: 1, 256>}, {pipeline_mode = #tpu.pipeline_mode<synchronous>, transform_indices = @transform_5, window_bounds = array<i64: 256, 128>}, {pipeline_mode = #tpu.pipeline_mode<synchronous>, transform_indices = @transform_6, window_bounds = array<i64: 1, 128>}, {transform_indices = @transform_7, window_bounds = array<i64: 512, 128>}]} {
    %c0 = arith.constant 0 : index
    %0 = memref.load %arg1[%c0] : memref<1xf32, #tpu.memory_space<smem>>
    %c0_0 = arith.constant 0 : index
    %c0_1 = arith.constant 0 : index
    %1 = vector.load %arg2[%c0_0, %c0_1] : memref<512x128xf32, #tpu.memory_space<vmem>>, vector<512x128xf32>
    %2 = arith.truncf %1 : vector<512x128xf32> to vector<512x128xbf16>
    %c0_2 = arith.constant 0 : index
    %c0_3 = arith.constant 0 : index
    %3 = vector.load %arg3[%c0_2, %c0_3] : memref<128x256xbf16, #tpu.memory_space<vmem>>, vector<128x256xbf16>
    %cst = arith.constant dense<0.000000e+00> : vector<512x256xf32>
    %4 = tpu.matmul %2, %3, %cst {dimension_numbers = #tpu.dot_dimension_numbers<[1], [0], [0], [1], [0, 0, 1, 1], [], []>} : vector<512x128xbf16>, vector<128x256xbf16>, vector<512x256xf32> -> vector<512x256xf32>
    %c0_4 = arith.constant 0 : index
    %c0_5 = arith.constant 0 : index
    %5 = vector.load %arg4[%c0_4, %c0_5] : memref<1x256xf32, #tpu.memory_space<vmem>>, vector<1x256xf32>
    %6 = vector.broadcast %0 : f32 to vector<1x256xf32>
    %7 = arith.mulf %6, %5 : vector<1x256xf32>
    %c0_6 = arith.constant 0 : index
    %c0_7 = arith.constant 0 : index
    %8 = vector.load %arg5[%c0_6, %c0_7] : memref<1x256xf32, #tpu.memory_space<vmem>>, vector<1x256xf32>
    %9 = arith.addf %7, %8 : vector<1x256xf32>
    %10 = vector.broadcast %9 : vector<1x256xf32> to vector<512x256xf32>
    %11 = arith.addf %4, %10 : vector<512x256xf32>
    %12 = math.tanh %11 : vector<512x256xf32>
    %13 = arith.truncf %12 : vector<512x256xf32> to vector<512x256xbf16>
    %c0_8 = arith.constant 0 : index
    %c0_9 = arith.constant 0 : index
    %14 = vector.load %arg6[%c0_8, %c0_9] : memref<256x128xbf16, #tpu.memory_space<vmem>>, vector<256x128xbf16>
    %cst_10 = arith.constant dense<0.000000e+00> : vector<512x128xf32>
    %15 = tpu.matmul %13, %14, %cst_10 {dimension_numbers = #tpu.dot_dimension_numbers<[1], [0], [0], [1], [0, 0, 1, 1], [], []>} : vector<512x256xbf16>, vector<256x128xbf16>, vector<512x128xf32> -> vector<512x128xf32>
    %c0_11 = arith.constant 0 : index
    %c0_12 = arith.constant 0 : index
    %16 = vector.load %arg7[%c0_11, %c0_12] : memref<1x128xf32, #tpu.memory_space<vmem>>, vector<1x128xf32>
    %17 = vector.broadcast %16 : vector<1x128xf32> to vector<512x128xf32>
    %18 = arith.addf %15, %17 : vector<512x128xf32>
    %c0_13 = arith.constant 0 : index
    %c0_14 = arith.constant 0 : index
    %19 = vector.load %arg8[%c0_13, %c0_14] : memref<512x128xf32, #tpu.memory_space<vmem>>, vector<512x128xf32>
    tpu.vector_store %arg8[%c0_13, %c0_14], %18 {strides = array<i32>} : memref<512x128xf32, #tpu.memory_space<vmem>>, vector<512x128xf32>,
    return
  }
  func.func @transform_0(%arg0: i32) -> i32 {
    %c0_i32 = arith.constant 0 : i32
    %c0_i32_0 = arith.constant 0 : i32
    return %c0_i32 : i32
  }
  func.func @transform_1(%arg0: i32) -> (i32, i32) {
    %c0_i32 = arith.constant 0 : i32
    %c0_i32_0 = arith.constant 0 : i32
    return %arg0, %c0_i32 : i32, i32
  }
  func.func @transform_2(%arg0: i32) -> (i32, i32) {
    %c0_i32 = arith.constant 0 : i32
    %c0_i32_0 = arith.constant 0 : i32
    %c0_i32_1 = arith.constant 0 : i32
    return %c0_i32, %c0_i32_0 : i32, i32
  }
  func.func @transform_3(%arg0: i32) -> (i32, i32) {
    %c0_i32 = arith.constant 0 : i32
    %c0_i32_0 = arith.constant 0 : i32
    %c0_i32_1 = arith.constant 0 : i32
    return %c0_i32, %c0_i32_0 : i32, i32
  }
  func.func @transform_4(%arg0: i32) -> (i32, i32) {
    %c0_i32 = arith.constant 0 : i32
    %c0_i32_0 = arith.constant 0 : i32
    %c0_i32_1 = arith.constant 0 : i32
    return %c0_i32, %c0_i32_0 : i32, i32
  }
  func.func @transform_5(%arg0: i32) -> (i32, i32) {
    %c0_i32 = arith.constant 0 : i32
    %c0_i32_0 = arith.constant 0 : i32
    %c0_i32_1 = arith.constant 0 : i32
    return %c0_i32, %c0_i32_0 : i32, i32
  }
  func.func @transform_6(%arg0: i32) -> (i32, i32) {
    %c0_i32 = arith.constant 0 : i32
    %c0_i32_0 = arith.constant 0 : i32
    %c0_i32_1 = arith.constant 0 : i32
    return %c0_i32, %c0_i32_0 : i32, i32
  }
  func.func @transform_7(%arg0: i32) -> (i32, i32) {
    %c0_i32 = arith.constant 0 : i32
    %c0_i32_0 = arith.constant 0 : i32
    return %arg0, %c0_i32 : i32, i32
  }
}

module attributes {stable_mosaic.version = 11 : i64} {
  func.func @_time_derivative_kernel(%arg0: i32, %arg1: memref<1xf32, #tpu.memory_space<smem>>, %arg2: memref<512x128xf32, #tpu.memory_space<vmem>>, %arg3: memref<128x256xbf16, #tpu.memory_space<vmem>>, %arg4: memref<1x256xf32, #tpu.memory_space<vmem>>, %arg5: memref<1x256xf32, #tpu.memory_space<vmem>>, %arg6: memref<256x128xbf16, #tpu.memory_space<vmem>>, %arg7: memref<1x128xf32, #tpu.memory_space<vmem>>, %arg8: memref<512x128xf32, #tpu.memory_space<vmem>>) attributes {dimension_semantics = [#tpu.dimension_semantics<parallel>], iteration_bounds = array<i64: 8>, scalar_prefetch = 0 : i64, scratch_operands = 0 : i64, tpu.core_type = #tpu.core_type<tc>, window_params = [{transform_indices = @transform_0, window_bounds = array<i64: 1>}, {transform_indices = @transform_1, window_bounds = array<i64: 512, 128>}, {pipeline_mode = #tpu.pipeline_mode<synchronous>, transform_indices = @transform_2, window_bounds = array<i64: 128, 256>}, {pipeline_mode = #tpu.pipeline_mode<synchronous>, transform_indices = @transform_3, window_bounds = array<i64: 1, 256>}, {pipeline_mode = #tpu.pipeline_mode<synchronous>, transform_indices = @transform_4, window_bounds = array<i64: 1, 256>}, {pipeline_mode = #tpu.pipeline_mode<synchronous>, transform_indices = @transform_5, window_bounds = array<i64: 256, 128>}, {pipeline_mode = #tpu.pipeline_mode<synchronous>, transform_indices = @transform_6, window_bounds = array<i64: 1, 128>}, {transform_indices = @transform_7, window_bounds = array<i64: 512, 128>}]} {
    %c0 = arith.constant 0 : index
    %0 = memref.load %arg1[%c0] : memref<1xf32, #tpu.memory_space<smem>>
    %c0_0 = arith.constant 0 : index
    %c0_1 = arith.constant 0 : index
    %1 = vector.load %arg2[%c0_0, %c0_1] : memref<512x128xf32, #tpu.memory_space<vmem>>, vector<512x128xf32>
    %2 = arith.truncf %1 : vector<512x128xf32> to vector<512x128xbf16>
    %c0_2 = arith.constant 0 : index
    %c0_3 = arith.constant 0 : index
    %3 = vector.load %arg3[%c0_2, %c0_3] : memref<128x256xbf16, #tpu.memory_space<vmem>>, vector<128x256xbf16>
    %cst = arith.constant dense<0.000000e+00> : vector<512x256xf32>
    %4 = tpu.matmul %2, %3, %cst {dimension_numbers = #tpu.dot_dimension_numbers<[1], [0], [0], [1], [0, 0, 1, 1], [], []>} : vector<512x128xbf16>, vector<128x256xbf16>, vector<512x256xf32> -> vector<512x256xf32>
    %c0_4 = arith.constant 0 : index
    %c0_5 = arith.constant 0 : index
    %5 = vector.load %arg4[%c0_4, %c0_5] : memref<1x256xf32, #tpu.memory_space<vmem>>, vector<1x256xf32>
    %6 = vector.broadcast %0 : f32 to vector<1x256xf32>
    %7 = arith.mulf %6, %5 : vector<1x256xf32>
    %c0_6 = arith.constant 0 : index
    %c0_7 = arith.constant 0 : index
    %8 = vector.load %arg5[%c0_6, %c0_7] : memref<1x256xf32, #tpu.memory_space<vmem>>, vector<1x256xf32>
    %9 = arith.addf %7, %8 : vector<1x256xf32>
    %10 = vector.broadcast %9 : vector<1x256xf32> to vector<512x256xf32>
    %11 = arith.addf %4, %10 : vector<512x256xf32>
    %12 = math.tanh %11 : vector<512x256xf32>
    %13 = arith.truncf %12 : vector<512x256xf32> to vector<512x256xbf16>
    %c0_8 = arith.constant 0 : index
    %c0_9 = arith.constant 0 : index
    %14 = vector.load %arg6[%c0_8, %c0_9] : memref<256x128xbf16, #tpu.memory_space<vmem>>, vector<256x128xbf16>
    %cst_10 = arith.constant dense<0.000000e+00> : vector<512x128xf32>
    %15 = tpu.matmul %13, %14, %cst_10 {dimension_numbers = #tpu.dot_dimension_numbers<[1], [0], [0], [1], [0, 0, 1, 1], [], []>} : vector<512x256xbf16>, vector<256x128xbf16>, vector<512x128xf32> -> vector<512x128xf32>
    %c0_11 = arith.constant 0 : index
    %c0_12 = arith.constant 0 : index
    %16 = vector.load %arg7[%c0_11, %c0_12] : memref<1x128xf32, #tpu.memory_space<vmem>>, vector<1x128xf32>
    %17 = vector.broadcast %16 : vector<1x128xf32> to vector<512x128xf32>
    %18 = arith.addf %15, %17 : vector<512x128xf32>
    %c0_13 = arith.constant 0 : index
    %c0_14 = arith.constant 0 : index
    %19 = vector.load %arg8[%c0_13, %c0_14] : memref<512x128xf32, #tpu.memory_space<vmem>>, vector<512x128xf32>
    tpu.vector_store %arg8[%c0_13, %c0_14], %18 {strides = array<i32>} : memref<512x128xf32, #tpu.memory_space<vmem>>, vector<512x128xf32>,
    return
  }
  func.func @transform_0(%arg0: i32) -> i32 {
    %c0_i32 = arith.constant 0 : i32
    %c0_i32_0 = arith.constant 0 : i32
    return %c0_i32 : i32
  }
  func.func @transform_1(%arg0: i32) -> (i32, i32) {
    %c0_i32 = arith.constant 0 : i32
    %c0_i32_0 = arith.constant 0 : i32
    return %arg0, %c0_i32 : i32, i32
  }
  func.func @transform_2(%arg0: i32) -> (i32, i32) {
    %c0_i32 = arith.constant 0 : i32
    %c0_i32_0 = arith.constant 0 : i32
    %c0_i32_1 = arith.constant 0 : i32
    return %c0_i32, %c0_i32_0 : i32, i32
  }
  func.func @transform_3(%arg0: i32) -> (i32, i32) {
    %c0_i32 = arith.constant 0 : i32
    %c0_i32_0 = arith.constant 0 : i32
    %c0_i32_1 = arith.constant 0 : i32
    return %c0_i32, %c0_i32_0 : i32, i32
  }
  func.func @transform_4(%arg0: i32) -> (i32, i32) {
    %c0_i32 = arith.constant 0 : i32
    %c0_i32_0 = arith.constant 0 : i32
    %c0_i32_1 = arith.constant 0 : i32
    return %c0_i32, %c0_i32_0 : i32, i32
  }
  func.func @transform_5(%arg0: i32) -> (i32, i32) {
    %c0_i32 = arith.constant 0 : i32
    %c0_i32_0 = arith.constant 0 : i32
    %c0_i32_1 = arith.constant 0 : i32
    return %c0_i32, %c0_i32_0 : i32, i32
  }
  func.func @transform_6(%arg0: i32) -> (i32, i32) {
    %c0_i32 = arith.constant 0 : i32
    %c0_i32_0 = arith.constant 0 : i32
    %c0_i32_1 = arith.constant 0 : i32
    return %c0_i32, %c0_i32_0 : i32, i32
  }
  func.func @transform_7(%arg0: i32) -> (i32, i32) {
    %c0_i32 = arith.constant 0 : i32
    %c0_i32_0 = arith.constant 0 : i32
    return %arg0, %c0_i32 : i32, i32
  }
}

</mosaic_0001>

<llo_original>
// kernel: _time_derivative_call.1
$region0: #{_time_derivative_call.1}
  #allocation0 [shape = 'u32[]', space=smem, size = 0x4, offset = 0x4, fixed_abs, tag = 'smem constant byte address 0x4 - core index']
  #allocation1 [shape = 'u32[144,128]{1,0:T(1,128)}', space=vmem, size = 0x12000, scoped, tag = 'internal scratch']
  #allocation2 [shape = 'f32[1]{0:T(128)S(6)}', space=smem, size = 0x200, scoped, tag = 'scoped memory for _time_derivative_call.1']
  %s0 = inlined_call_operand.<no memory space> [shape: f32[1], index: 0, kind: input, shape index: {}]
  %s1 = inlined_call_operand.hbm [shape: f32[4096,128], index: 1, kind: input, shape index: {}]
  %s2 = inlined_call_operand.hbm [shape: bf16[128,256], index: 2, kind: input, shape index: {}]
  %s3 = inlined_call_operand.hbm [shape: f32[1,256], index: 3, kind: input, shape index: {}]
  %s4 = inlined_call_operand.hbm [shape: f32[1,256], index: 4, kind: input, shape index: {}]
  %s5 = inlined_call_operand.hbm [shape: bf16[256,128], index: 5, kind: input, shape index: {}]
  %s6 = inlined_call_operand.hbm [shape: f32[1,128], index: 6, kind: input, shape index: {}]
  %s7 = inlined_call_operand.hbm [shape: f32[4096,128], index: 7, kind: output, shape index: {}]
  %s8 = sld [smem:[#allocation0]]
  $region85: #{_time_derivative_call.1} parent=0
    _
  %s10 = ssub.s32 1, %s8
  %s11 = scalar_select 0, %s10, %s8
  %12 = sst [smem:[#allocation2]] %s0
  $region1: #{_time_derivative_call.1} parent=0
    #allocation3 [shape = 'u8[524288]{0}', space=vmem, size = 0x80000, scoped, tag = 'input window, operand 1']
    #allocation4 [shape = 's32[2]{0}', space=sflag, size = 0x8, scoped, tag = 'scoped memory for _time_derivative_call.1']
    #allocation5 [shape = 's32[2]{0}', space=sflag, size = 0x8, scoped, tag = 'scoped memory for _time_derivative_call.1']
    #allocation6 [shape = 'u8[65536]{0}', space=vmem, size = 0x10000, scoped, tag = 'input window, operand 2, single buffered']
    #allocation7 [shape = 's32[1]{0}', space=sflag, size = 0x4, scoped, tag = 'scoped memory for _time_derivative_call.1']
    #allocation8 [shape = 'u8[1024]{0}', space=vmem, size = 0x400, scoped, tag = 'input window, operand 3, single buffered']
    #allocation9 [shape = 'u8[1024]{0}', space=vmem, size = 0x400, scoped, tag = 'input window, operand 4, single buffered']
    #allocation10 [shape = 's32[1]{0}', space=sflag, size = 0x4, scoped, tag = 'scoped memory for _time_derivative_call.1']
    #allocation11 [shape = 'u8[65536]{0}', space=vmem, size = 0x10000, scoped, tag = 'input window, operand 5, single buffered']
    #allocation12 [shape = 'u8[512]{0}', space=vmem, size = 0x400, scoped, tag = 'input window, operand 6, single buffered']
    #allocation13 [shape = 's32[1]{0}', space=sflag, size = 0x4, scoped, tag = 'scoped memory for _time_derivative_call.1']
    #allocation14 [shape = 'u8[524288]{0}', space=vmem, size = 0x80000, scoped, tag = 'output window, operand 0']
    %13 = vsyncpa [#allocation4], 0
    %s14 = scalar_lea.sflag [#allocation4], 1
    %15 = vsyncpa %s14, 0
    %16 = vsyncpa [#allocation7], 0
    %17 = vsyncpa [#allocation10], 0
    %18 = vsyncpa [#allocation13], 0
    %19 = vsyncpa [#allocation5], 0
    %s20 = scalar_lea.sflag [#allocation5], 1
    %21 = vsyncpa %s20, 0
    loop: start=0, step=1, limit=10
    $region2: #{_time_derivative_call.1} parent=1 // loop_pre_header
      _
    $region3: #{_time_derivative_call.1} parent=1 // loop_header
      %s23 = sphi 0, %s27
      %p24 = scmp.ge.s32.totalorder %s23, 10
      %s31 = sphi 0, %s31
      %s33 = sphi 0, %s31
      %s34 = sphi 0, %s33
      %s48 = sphi 0, %s34
      %s54 = sphi 0, %s56
      %s57 = sphi 0, %s54
      %s58 = sphi 0, %s57
      %s74 = sphi 0, %s58
      %s78 = sphi 0, %s78
      %s80 = sphi 0, %s78
      %s81 = sphi 0, %s80
      %s95 = sphi 0, %s81
      %s99 = sphi 0, %s99
      %s101 = sphi 0, %s99
      %s102 = sphi 0, %s101
      %s116 = sphi 0, %s102
      %s120 = sphi 0, %s120
      %s122 = sphi 0, %s120
      %s123 = sphi 0, %s122
      %s137 = sphi 0, %s123
      %s141 = sphi 0, %s141
      %s143 = sphi 0, %s141
      %s144 = sphi 0, %s143
      %s158 = sphi 0, %s144
      %s162 = sphi 0, %s162
      %s164 = sphi 0, %s162
      %s165 = sphi 0, %s164
      %s179 = sphi 0, %s165
      %s185 = sphi 0, %s187
      %s188 = sphi 0, %s185
      %s189 = sphi 0, %s188
      %s205 = sphi 0, %s189
    $region4: #{_time_derivative_call.1} parent=1 // loop_header_branch
      %26 = sbr.rel (%p24) target = $region8
    $region5: #{_time_derivative_call.1} parent=1 // loop_body
      %s28 = ssub.s32 %s23, 1
      %s29 = ssub.s32 %s23, 2
      %s30 = sadd.s32 %s23, 1
      %s32 = sadd.s32 %s31, 1
      %p35 = scmp.eq.s32.totalorder %s23, 7
      %p36 = scmp.ne.s32.totalorder %s31, %s33
      %p37 = scmp.eq.s32.totalorder %s23, 0
      %p38 = por %p36, %p37
      %p39 = scmp.ne.s32.totalorder %s31, %s33
      %p40 = scmp.eq.s32.totalorder %s28, 7
      %p41 = por %p39, %p40
      %p42 = scmp.ne.s32.totalorder %s33, %s34
      %p43 = scmp.eq.s32.totalorder %s28, 0
      %p44 = por %p42, %p43
      %p45 = scmp.ne.s32.totalorder %s33, %s34
      %p46 = scmp.eq.s32.totalorder %s29, 7
      %p47 = por %p45, %p46
      %p49 = scmp.ne.s32.totalorder %s34, %s48
      %p50 = scmp.eq.s32.totalorder %s29, 0
      %p51 = por %p49, %p50
      %s52 = ssub.s32 %s23, %s30
      %p53 = scmp.eq.s32.totalorder %s52, 0
      %s55 = sadd.s32 %s54, 1
      %s56 = scalar_select %p53, %s54, %s55
      %p59 = pneg %p53
      %p60 = scmp.eq.s32.totalorder %s23, 7
      %p61 = por %p59, %p60
      %p62 = scmp.ne.s32.totalorder %s54, %s57
      %p63 = scmp.eq.s32.totalorder %s23, 0
      %p64 = por %p62, %p63
      %p65 = scmp.ne.s32.totalorder %s54, %s57
      %p66 = scmp.eq.s32.totalorder %s28, 7
      %p67 = por %p65, %p66
      %p68 = scmp.ne.s32.totalorder %s57, %s58
      %p69 = scmp.eq.s32.totalorder %s28, 0
      %p70 = por %p68, %p69
      %p71 = scmp.ne.s32.totalorder %s57, %s58
      %p72 = scmp.eq.s32.totalorder %s29, 7
      %p73 = por %p71, %p72
      %p75 = scmp.ne.s32.totalorder %s58, %s74
      %p76 = scmp.eq.s32.totalorder %s29, 0
      %p77 = por %p75, %p76
      %s79 = sadd.s32 %s78, 1
      %p82 = scmp.eq.s32.totalorder %s23, 7
      %p83 = scmp.ne.s32.totalorder %s78, %s80
      %p84 = scmp.eq.s32.totalorder %s23, 0
      %p85 = por %p83, %p84
      %p86 = scmp.ne.s32.totalorder %s78, %s80
      %p87 = scmp.eq.s32.totalorder %s28, 7
      %p88 = por %p86, %p87
      %p89 = scmp.ne.s32.totalorder %s80, %s81
      %p90 = scmp.eq.s32.totalorder %s28, 0
      %p91 = por %p89, %p90
      %p92 = scmp.ne.s32.totalorder %s80, %s81
      %p93 = scmp.eq.s32.totalorder %s29, 7
      %p94 = por %p92, %p93
      %p96 = scmp.ne.s32.totalorder %s81, %s95
      %p97 = scmp.eq.s32.totalorder %s29, 0
      %p98 = por %p96, %p97
      %s100 = sadd.s32 %s99, 1
      %p103 = scmp.eq.s32.totalorder %s23, 7
      %p104 = scmp.ne.s32.totalorder %s99, %s101
      %p105 = scmp.eq.s32.totalorder %s23, 0
      %p106 = por %p104, %p105
      %p107 = scmp.ne.s32.totalorder %s99, %s101
      %p108 = scmp.eq.s32.totalorder %s28, 7
      %p109 = por %p107, %p108
      %p110 = scmp.ne.s32.totalorder %s101, %s102
      %p111 = scmp.eq.s32.totalorder %s28, 0
      %p112 = por %p110, %p111
      %p113 = scmp.ne.s32.totalorder %s101, %s102
      %p114 = scmp.eq.s32.totalorder %s29, 7
      %p115 = por %p113, %p114
      %p117 = scmp.ne.s32.totalorder %s102, %s116
      %p118 = scmp.eq.s32.totalorder %s29, 0
      %p119 = por %p117, %p118
      %s121 = sadd.s32 %s120, 1
      %p124 = scmp.eq.s32.totalorder %s23, 7
      %p125 = scmp.ne.s32.totalorder %s120, %s122
      %p126 = scmp.eq.s32.totalorder %s23, 0
      %p127 = por %p125, %p126
      %p128 = scmp.ne.s32.totalorder %s120, %s122
      %p129 = scmp.eq.s32.totalorder %s28, 7
      %p130 = por %p128, %p129
      %p131 = scmp.ne.s32.totalorder %s122, %s123
      %p132 = scmp.eq.s32.totalorder %s28, 0
      %p133 = por %p131, %p132
      %p134 = scmp.ne.s32.totalorder %s122, %s123
      %p135 = scmp.eq.s32.totalorder %s29, 7
      %p136 = por %p134, %p135
      %p138 = scmp.ne.s32.totalorder %s123, %s137
      %p139 = scmp.eq.s32.totalorder %s29, 0
      %p140 = por %p138, %p139
      %s142 = sadd.s32 %s141, 1
      %p145 = scmp.eq.s32.totalorder %s23, 7
      %p146 = scmp.ne.s32.totalorder %s141, %s143
      %p147 = scmp.eq.s32.totalorder %s23, 0
      %p148 = por %p146, %p147
      %p149 = scmp.ne.s32.totalorder %s141, %s143
      %p150 = scmp.eq.s32.totalorder %s28, 7
      %p151 = por %p149, %p150
      %p152 = scmp.ne.s32.totalorder %s143, %s144
      %p153 = scmp.eq.s32.totalorder %s28, 0
      %p154 = por %p152, %p153
      %p155 = scmp.ne.s32.totalorder %s143, %s144
      %p156 = scmp.eq.s32.totalorder %s29, 7
      %p157 = por %p155, %p156
      %p159 = scmp.ne.s32.totalorder %s144, %s158
      %p160 = scmp.eq.s32.totalorder %s29, 0
      %p161 = por %p159, %p160
      %s163 = sadd.s32 %s162, 1
      %p166 = scmp.eq.s32.totalorder %s23, 7
      %p167 = scmp.ne.s32.totalorder %s162, %s164
      %p168 = scmp.eq.s32.totalorder %s23, 0
      %p169 = por %p167, %p168
      %p170 = scmp.ne.s32.totalorder %s162, %s164
      %p171 = scmp.eq.s32.totalorder %s28, 7
      %p172 = por %p170, %p171
      %p173 = scmp.ne.s32.totalorder %s164, %s165
      %p174 = scmp.eq.s32.totalorder %s28, 0
      %p175 = por %p173, %p174
      %p176 = scmp.ne.s32.totalorder %s164, %s165
      %p177 = scmp.eq.s32.totalorder %s29, 7
      %p178 = por %p176, %p177
      %p180 = scmp.ne.s32.totalorder %s165, %s179
      %p181 = scmp.eq.s32.totalorder %s29, 0
      %p182 = por %p180, %p181
      %s183 = ssub.s32 %s23, %s30
      %p184 = scmp.eq.s32.totalorder %s183, 0
      %s186 = sadd.s32 %s185, 1
      %s187 = scalar_select %p184, %s185, %s186
      %p190 = pneg %p184
      %p191 = scmp.eq.s32.totalorder %s23, 7
      %p192 = por %p190, %p191
      %p193 = scmp.ne.s32.totalorder %s185, %s188
      %p194 = scmp.eq.s32.totalorder %s23, 0
      %p195 = por %p193, %p194
      %p196 = scmp.ne.s32.totalorder %s185, %s188
      %p197 = scmp.eq.s32.totalorder %s28, 7
      %p198 = por %p196, %p197
      %p199 = scmp.ne.s32.totalorder %s188, %s189
      %p200 = scmp.eq.s32.totalorder %s28, 0
      %p201 = por %p199, %p200
      %p202 = scmp.ne.s32.totalorder %s188, %s189
      %p203 = scmp.eq.s32.totalorder %s29, 7
      %p204 = por %p202, %p203
      %p206 = scmp.ne.s32.totalorder %s189, %s205
      %p207 = scmp.eq.s32.totalorder %s29, 0
      %p208 = por %p206, %p207
      %p209 = scmp.le.s32.totalorder 1, %s23
      %p210 = scmp.lt.s32.totalorder %s23, 9
      %p211 = pnand %p209, %p210
      %p212 = pneg %p211
      // Predicated region
      $region9: #{_time_derivative_call.1} parent=5 // pred_check
        _
      $region10: #{_time_derivative_call.1} parent=5 // pred_check_branch
        %214 = sbr.rel (%p211) target = $region12
      $region11: #{_time_derivative_call.1} parent=5 // pred_region
        %s215 = ssub.s32 %s23, 1
        // Predicated region
        $region13: #{_time_derivative_call.1} parent=11 // pred_check
          %p216 = pneg %p44
        $region14: #{_time_derivative_call.1} parent=11 // pred_check_branch
          %218 = sbr.rel (%p216) target = $region16
        $region15: #{_time_derivative_call.1} parent=11 // pred_region
          _
        $region16: #{_time_derivative_call.1} parent=11 // pred_fallthru
          _
        // Predicated region
        $region17: #{_time_derivative_call.1} parent=11 // pred_check
          %p219 = pneg %p91
        $region18: #{_time_derivative_call.1} parent=11 // pred_check_branch
          %221 = sbr.rel (%p219) target = $region20
        $region19: #{_time_derivative_call.1} parent=11 // pred_region
          %s223 = ssub.s32 2048, 2048
          %224 = vsyncadd [#allocation7], %s223
          %s225 = sshll.u32 [#allocation6], 4
          %s226 = int_to_ptr.vmem [resolvable:$true] %s225
          %231 = dma.hbm_to_vmem [thread:$0]  %s2, 2048, %s226, [#allocation7], 128, 128, 8
        $region20: #{_time_derivative_call.1} parent=11 // pred_fallthru
          _
        // Predicated region
        $region21: #{_time_derivative_call.1} parent=11 // pred_check
          %p232 = pneg %p112
        $region22: #{_time_derivative_call.1} parent=11 // pred_check_branch
          %234 = sbr.rel (%p232) target = $region24
        $region23: #{_time_derivative_call.1} parent=11 // pred_region
          %s236 = ssub.s32 32, 32
          %237 = vsyncadd [#allocation7], %s236
          %s239 = sshll.u32 [#allocation8], 4
          %s240 = int_to_ptr.vmem [resolvable:$true] %s239
          %242 = dma.hbm_to_vmem [thread:$0]  %s3, 32, %s240, [#allocation7]
        $region24: #{_time_derivative_call.1} parent=11 // pred_fallthru
          _
        // Predicated region
        $region25: #{_time_derivative_call.1} parent=11 // pred_check
          %p243 = pneg %p133
        $region26: #{_time_derivative_call.1} parent=11 // pred_check_branch
          %245 = sbr.rel (%p243) target = $region28
        $region27: #{_time_derivative_call.1} parent=11 // pred_region
          %s247 = ssub.s32 32, 32
          %248 = vsyncadd [#allocation10], %s247
          %s250 = sshll.u32 [#allocation9], 4
          %s251 = int_to_ptr.vmem [resolvable:$true] %s250
          %253 = dma.hbm_to_vmem [thread:$0]  %s4, 32, %s251, [#allocation10]
        $region28: #{_time_derivative_call.1} parent=11 // pred_fallthru
          _
        // Predicated region
        $region29: #{_time_derivative_call.1} parent=11 // pred_check
          %p254 = pneg %p154
        $region30: #{_time_derivative_call.1} parent=11 // pred_check_branch
          %256 = sbr.rel (%p254) target = $region32
        $region31: #{_time_derivative_call.1} parent=11 // pred_region
          %s258 = ssub.s32 2048, 2048
          %259 = vsyncadd [#allocation10], %s258
          %s260 = sshll.u32 [#allocation11], 4
          %s261 = int_to_ptr.vmem [resolvable:$true] %s260
          %266 = dma.hbm_to_vmem [thread:$0]  %s5, 2048, %s261, [#allocation10], 64, 64, 4
        $region32: #{_time_derivative_call.1} parent=11 // pred_fallthru
          _
        // Predicated region
        $region33: #{_time_derivative_call.1} parent=11 // pred_check
          %p267 = pneg %p175
        $region34: #{_time_derivative_call.1} parent=11 // pred_check_branch
          %269 = sbr.rel (%p267) target = $region36
        $region35: #{_time_derivative_call.1} parent=11 // pred_region
          %s271 = ssub.s32 16, 16
          %272 = vsyncadd [#allocation13], %s271
          %s274 = sshll.u32 [#allocation12], 4
          %s275 = int_to_ptr.vmem [resolvable:$true] %s274
          %277 = dma.hbm_to_vmem [thread:$0]  %s6, 16, %s275, [#allocation13]
        $region36: #{_time_derivative_call.1} parent=11 // pred_fallthru
          _
      $region12: #{_time_derivative_call.1} parent=5 // pred_fallthru
        _
      %p278 = scmp.lt.s32.totalorder %s23, 8
      // Predicated region
      $region37: #{_time_derivative_call.1} parent=5 // pred_check
        %p279 = pneg %p278
      $region38: #{_time_derivative_call.1} parent=5 // pred_check_branch
        %281 = sbr.rel (%p279) target = $region40
      $region39: #{_time_derivative_call.1} parent=5 // pred_region
        // Predicated region
        $region41: #{_time_derivative_call.1} parent=39 // pred_check
          %p282 = pneg %p64
        $region42: #{_time_derivative_call.1} parent=39 // pred_check_branch
          %284 = sbr.rel (%p282) target = $region44
        $region43: #{_time_derivative_call.1} parent=39 // pred_region
          %s285 = sand.u32 %s54, 1
          %s286 = scalar_lea.sflag [#allocation4], %s285
          %s287 = sand.u32 %s54, 1
          %s288 = smul.addr %s287, 512
          %s289 = scalar_lea.vmem [#allocation3], %s288
          %s290 = smul.u32 64, %s23
          %s292 = ssub.s32 8192, 8192
          %293 = vsyncadd %s286, %s292
          %s294 = smul.addr %s290, 128
          %s295 = scalar_lea.hbm %s1, %s294
          %s296 = sshll.u32 %s289, 4
          %s297 = int_to_ptr.vmem [resolvable:$true] %s296
          %302 = dma.hbm_to_vmem [thread:$0]  %s295, 8192, %s297, %s286, 128, 128, 8
        $region44: #{_time_derivative_call.1} parent=39 // pred_fallthru
          _
      $region40: #{_time_derivative_call.1} parent=5 // pred_fallthru
        _
      %p303 = scmp.le.s32.totalorder 1, %s23
      %p304 = scmp.lt.s32.totalorder %s23, 9
      %p305 = pnand %p303, %p304
      %p306 = pneg %p305
      // Predicated region
      $region45: #{_time_derivative_call.1} parent=5 // pred_check
        _
      $region46: #{_time_derivative_call.1} parent=5 // pred_check_branch
        %308 = sbr.rel (%p305) target = $region48
      $region47: #{_time_derivative_call.1} parent=5 // pred_region
        %s309 = ssub.s32 %s23, 1
        %s310 = sand.u32 %s57, 1
        %s311 = scalar_lea.sflag [#allocation4], %s310
        %s312 = sand.u32 %s57, 1
        %s313 = smul.addr %s312, 512
        %s314 = scalar_lea.vmem [#allocation3], %s313
        // Predicated region
        $region49: #{_time_derivative_call.1} parent=47 // pred_check
          %p315 = pneg %p70
        $region50: #{_time_derivative_call.1} parent=47 // pred_check_branch
          %317 = sbr.rel (%p315) target = $region52
        $region51: #{_time_derivative_call.1} parent=47 // pred_region
          %318 = dma.done %s311, 8192
        $region52: #{_time_derivative_call.1} parent=47 // pred_fallthru
          _
        // Predicated region
        $region53: #{_time_derivative_call.1} parent=47 // pred_check
          %p319 = pneg %p91
        $region54: #{_time_derivative_call.1} parent=47 // pred_check_branch
          %321 = sbr.rel (%p319) target = $region56
        $region55: #{_time_derivative_call.1} parent=47 // pred_region
          %322 = dma.done [#allocation7], 2048
        $region56: #{_time_derivative_call.1} parent=47 // pred_fallthru
          _
        // Predicated region
        $region57: #{_time_derivative_call.1} parent=47 // pred_check
          %p323 = pneg %p112
        $region58: #{_time_derivative_call.1} parent=47 // pred_check_branch
          %325 = sbr.rel (%p323) target = $region60
        $region59: #{_time_derivative_call.1} parent=47 // pred_region
          %326 = dma.done [#allocation7], 32
        $region60: #{_time_derivative_call.1} parent=47 // pred_fallthru
          _
        // Predicated region
        $region61: #{_time_derivative_call.1} parent=47 // pred_check
          %p327 = pneg %p133
        $region62: #{_time_derivative_call.1} parent=47 // pred_check_branch
          %329 = sbr.rel (%p327) target = $region64
        $region63: #{_time_derivative_call.1} parent=47 // pred_region
          %330 = dma.done [#allocation10], 32
        $region64: #{_time_derivative_call.1} parent=47 // pred_fallthru
          _
        // Predicated region
        $region65: #{_time_derivative_call.1} parent=47 // pred_check
          %p331 = pneg %p154
        $region66: #{_time_derivative_call.1} parent=47 // pred_check_branch
          %333 = sbr.rel (%p331) target = $region68
        $region67: #{_time_derivative_call.1} parent=47 // pred_region
          %334 = dma.done [#allocation10], 2048
        $region68: #{_time_derivative_call.1} parent=47 // pred_fallthru
          _
        // Predicated region
        $region69: #{_time_derivative_call.1} parent=47 // pred_check
          %p335 = pneg %p175
        $region70: #{_time_derivative_call.1} parent=47 // pred_check_branch
          %337 = sbr.rel (%p335) target = $region72
        $region71: #{_time_derivative_call.1} parent=47 // pred_region
          %338 = dma.done [#allocation13], 16
        $region72: #{_time_derivative_call.1} parent=47 // pred_fallthru
          _
        %p339 = pneg %p44
        %p340 = pneg %p41
        %s341 = sand.u32 %s57, 1
        %s342 = scalar_lea.sflag [#allocation4], %s341
        %s343 = sand.u32 %s57, 1
        %s344 = smul.addr %s343, 512
        %s345 = scalar_lea.vmem [#allocation3], %s344
        %p346 = pneg %p70
        %p347 = pneg %p67
        %p348 = pneg %p91
        %p349 = pneg %p88
        %p350 = pneg %p112
        %p351 = pneg %p109
        %p352 = pneg %p133
        %p353 = pneg %p130
        %p354 = pneg %p154
        %p355 = pneg %p151
        %p356 = pneg %p175
        %p357 = pneg %p172
        %p358 = pneg %p201
        %p359 = pneg %p198
        %s360 = sand.u32 %s188, 1
        %s361 = scalar_lea.sflag [#allocation5], %s360
        %s362 = sand.u32 %s188, 1
        %s363 = smul.addr %s362, 512
        %s364 = scalar_lea.vmem [#allocation14], %s363
        %s365 = smul.u32 64, %s28
        %s366 = smul.u32 64, %s28
        %s368 = sld [smem:[#allocation2]]
        %v369 = vld [vmem:[%s314] sm:$0xff]
        %v370 = vld [vmem:[%s314 + $0x8] sm:$0xff]
        %v371 = vld [vmem:[%s314 + $0x10] sm:$0xff]
        %v372 = vld [vmem:[%s314 + $0x18] sm:$0xff]
        %v373 = vld [vmem:[%s314 + $0x20] sm:$0xff]
        %v374 = vld [vmem:[%s314 + $0x28] sm:$0xff]
        %v375 = vld [vmem:[%s314 + $0x30] sm:$0xff]
        %v376 = vld [vmem:[%s314 + $0x38] sm:$0xff]
        %v377 = vld [vmem:[%s314 + $0x40] sm:$0xff]
        %v378 = vld [vmem:[%s314 + $0x48] sm:$0xff]
        %v379 = vld [vmem:[%s314 + $0x50] sm:$0xff]
        %v380 = vld [vmem:[%s314 + $0x58] sm:$0xff]
        %v381 = vld [vmem:[%s314 + $0x60] sm:$0xff]
        %v382 = vld [vmem:[%s314 + $0x68] sm:$0xff]
        %v383 = vld [vmem:[%s314 + $0x70] sm:$0xff]
        %v384 = vld [vmem:[%s314 + $0x78] sm:$0xff]
        %v385 = vld [vmem:[%s314 + $0x80] sm:$0xff]
        %v386 = vld [vmem:[%s314 + $0x88] sm:$0xff]
        %v387 = vld [vmem:[%s314 + $0x90] sm:$0xff]
        %v388 = vld [vmem:[%s314 + $0x98] sm:$0xff]
        %v389 = vld [vmem:[%s314 + $0xa0] sm:$0xff]
        %v390 = vld [vmem:[%s314 + $0xa8] sm:$0xff]
        %v391 = vld [vmem:[%s314 + $0xb0] sm:$0xff]
        %v392 = vld [vmem:[%s314 + $0xb8] sm:$0xff]
        %v393 = vld [vmem:[%s314 + $0xc0] sm:$0xff]
        %v394 = vld [vmem:[%s314 + $0xc8] sm:$0xff]
        %v395 = vld [vmem:[%s314 + $0xd0] sm:$0xff]
        %v396 = vld [vmem:[%s314 + $0xd8] sm:$0xff]
        %v397 = vld [vmem:[%s314 + $0xe0] sm:$0xff]
        %v398 = vld [vmem:[%s314 + $0xe8] sm:$0xff]
        %v399 = vld [vmem:[%s314 + $0xf0] sm:$0xff]
        %v400 = vld [vmem:[%s314 + $0xf8] sm:$0xff]
        %v401 = vld [vmem:[%s314 + $0x100] sm:$0xff]
        %v402 = vld [vmem:[%s314 + $0x108] sm:$0xff]
        %v403 = vld [vmem:[%s314 + $0x110] sm:$0xff]
        %v404 = vld [vmem:[%s314 + $0x118] sm:$0xff]
        %v405 = vld [vmem:[%s314 + $0x120] sm:$0xff]
        %v406 = vld [vmem:[%s314 + $0x128] sm:$0xff]
        %v407 = vld [vmem:[%s314 + $0x130] sm:$0xff]
        %v408 = vld [vmem:[%s314 + $0x138] sm:$0xff]
        %v409 = vld [vmem:[%s314 + $0x140] sm:$0xff]
        %v410 = vld [vmem:[%s314 + $0x148] sm:$0xff]
        %v411 = vld [vmem:[%s314 + $0x150] sm:$0xff]
        %v412 = vld [vmem:[%s314 + $0x158] sm:$0xff]
        %v413 = vld [vmem:[%s314 + $0x160] sm:$0xff]
        %v414 = vld [vmem:[%s314 + $0x168] sm:$0xff]
        %v415 = vld [vmem:[%s314 + $0x170] sm:$0xff]
        %v416 = vld [vmem:[%s314 + $0x178] sm:$0xff]
        %v417 = vld [vmem:[%s314 + $0x180] sm:$0xff]
        %v418 = vld [vmem:[%s314 + $0x188] sm:$0xff]
        %v419 = vld [vmem:[%s314 + $0x190] sm:$0xff]
        %v420 = vld [vmem:[%s314 + $0x198] sm:$0xff]
        %v421 = vld [vmem:[%s314 + $0x1a0] sm:$0xff]
        %v422 = vld [vmem:[%s314 + $0x1a8] sm:$0xff]
        %v423 = vld [vmem:[%s314 + $0x1b0] sm:$0xff]
        %v424 = vld [vmem:[%s314 + $0x1b8] sm:$0xff]
        %v425 = vld [vmem:[%s314 + $0x1c0] sm:$0xff]
        %v426 = vld [vmem:[%s314 + $0x1c8] sm:$0xff]
        %v427 = vld [vmem:[%s314 + $0x1d0] sm:$0xff]
        %v428 = vld [vmem:[%s314 + $0x1d8] sm:$0xff]
        %v429 = vld [vmem:[%s314 + $0x1e0] sm:$0xff]
        %v430 = vld [vmem:[%s314 + $0x1e8] sm:$0xff]
        %v431 = vld [vmem:[%s314 + $0x1f0] sm:$0xff]
        %v432 = vld [vmem:[%s314 + $0x1f8] sm:$0xff]
        %v433 = vpack.c.bf16 %v370, %v369
        %v434 = vpack.c.bf16 %v372, %v371
        %v435 = vpack.c.bf16 %v374, %v373
        %v436 = vpack.c.bf16 %v376, %v375
        %v437 = vpack.c.bf16 %v378, %v377
        %v438 = vpack.c.bf16 %v380, %v379
        %v439 = vpack.c.bf16 %v382, %v381
        %v440 = vpack.c.bf16 %v384, %v383
        %v441 = vpack.c.bf16 %v386, %v385
        %v442 = vpack.c.bf16 %v388, %v387
        %v443 = vpack.c.bf16 %v390, %v389
        %v444 = vpack.c.bf16 %v392, %v391
        %v445 = vpack.c.bf16 %v394, %v393
        %v446 = vpack.c.bf16 %v396, %v395
        %v447 = vpack.c.bf16 %v398, %v397
        %v448 = vpack.c.bf16 %v400, %v399
        %v449 = vpack.c.bf16 %v402, %v401
        %v450 = vpack.c.bf16 %v404, %v403
        %v451 = vpack.c.bf16 %v406, %v405
        %v452 = vpack.c.bf16 %v408, %v407
        %v453 = vpack.c.bf16 %v410, %v409
        %v454 = vpack.c.bf16 %v412, %v411
        %v455 = vpack.c.bf16 %v414, %v413
        %v456 = vpack.c.bf16 %v416, %v415
        %v457 = vpack.c.bf16 %v418, %v417
        %v458 = vpack.c.bf16 %v420, %v419
        %v459 = vpack.c.bf16 %v422, %v421
        %v460 = vpack.c.bf16 %v424, %v423
        %v461 = vpack.c.bf16 %v426, %v425
        %v462 = vpack.c.bf16 %v428, %v427
        %v463 = vpack.c.bf16 %v430, %v429
        %v464 = vpack.c.bf16 %v432, %v431
        %v465 = vld [vmem:[#allocation6] sm:$0xff]
        %v466 = vld [vmem:[#allocation6 + $0x8] sm:$0xff]
        %v467 = vld [vmem:[#allocation6 + $0x10] sm:$0xff]
        %v468 = vld [vmem:[#allocation6 + $0x18] sm:$0xff]
        %v469 = vld [vmem:[#allocation6 + $0x20] sm:$0xff]
        %v470 = vld [vmem:[#allocation6 + $0x28] sm:$0xff]
        %v471 = vld [vmem:[#allocation6 + $0x30] sm:$0xff]
        %v472 = vld [vmem:[#allocation6 + $0x38] sm:$0xff]
        %v473 = vld [vmem:[#allocation6 + $0x40] sm:$0xff]
        %v474 = vld [vmem:[#allocation6 + $0x48] sm:$0xff]
        %v475 = vld [vmem:[#allocation6 + $0x50] sm:$0xff]
        %v476 = vld [vmem:[#allocation6 + $0x58] sm:$0xff]
        %v477 = vld [vmem:[#allocation6 + $0x60] sm:$0xff]
        %v478 = vld [vmem:[#allocation6 + $0x68] sm:$0xff]
        %v479 = vld [vmem:[#allocation6 + $0x70] sm:$0xff]
        %v480 = vld [vmem:[#allocation6 + $0x78] sm:$0xff]
        %v481 = vld [vmem:[#allocation8] sm:$0x3]
        %v482 = vstv %s368
        %v483 = vmul.f32 %v482, %v481
        %v484 = vld [vmem:[#allocation9] sm:$0x3]
        %v485 = vadd.f32 %v483, %v484
        %v487 = vlaneseq
        %v488 = vshrl.u32 %v487, 7
        %v489 = vsub.s32 0, %v488
        %v490 = vrot.slane %v485, %v489
        %v491 = vlaneseq
        %v492 = vshrl.u32 %v491, 7
        %v493 = vsub.s32 1, %v492
        %v494 = vrot.slane %v485, %v493
        %v513 = vunpack.c.l.b16 %v465
        %v514 = vunpack.c.h.b16 %v465
        %v515 = vunpack.c.l.b16 %v466
        %v516 = vunpack.c.h.b16 %v466
        %v517 = vunpack.c.l.b16 %v467
        %v518 = vunpack.c.h.b16 %v467
        %v519 = vunpack.c.l.b16 %v468
        %v520 = vunpack.c.h.b16 %v468
        %v521 = vunpack.c.l.b16 %v469
        %v522 = vunpack.c.h.b16 %v469
        %v523 = vunpack.c.l.b16 %v470
        %v524 = vunpack.c.h.b16 %v470
        %v525 = vunpack.c.l.b16 %v471
        %v526 = vunpack.c.h.b16 %v471
        %v527 = vunpack.c.l.b16 %v472
        %v528 = vunpack.c.h.b16 %v472
        %v529 = vunpack.c.l.b16 %v473
        %v530 = vunpack.c.h.b16 %v473
        %v531 = vunpack.c.l.b16 %v474
        %v532 = vunpack.c.h.b16 %v474
        %v533 = vunpack.c.l.b16 %v475
        %v534 = vunpack.c.h.b16 %v475
        %v535 = vunpack.c.l.b16 %v476
        %v536 = vunpack.c.h.b16 %v476
        %v537 = vunpack.c.l.b16 %v477
        %v538 = vunpack.c.h.b16 %v477
        %v539 = vunpack.c.l.b16 %v478
        %v540 = vunpack.c.h.b16 %v478
        %v541 = vunpack.c.l.b16 %v479
        %v542 = vunpack.c.h.b16 %v479
        %v543 = vunpack.c.l.b16 %v480
        %v544 = vunpack.c.h.b16 %v480
        %v545 = vpack.c.b16 %v515, %v513
        %v546 = vpack.c.b16 %v516, %v514
        %v547 = vpack.c.b16 %v519, %v517
        %v548 = vpack.c.b16 %v520, %v518
        %v549 = vpack.c.b16 %v523, %v521
        %v550 = vpack.c.b16 %v524, %v522
        %v551 = vpack.c.b16 %v527, %v525
        %v552 = vpack.c.b16 %v528, %v526
        %v553 = vpack.c.b16 %v531, %v529
        %v554 = vpack.c.b16 %v532, %v530
        %v555 = vpack.c.b16 %v535, %v533
        %v556 = vpack.c.b16 %v536, %v534
        %v557 = vpack.c.b16 %v539, %v537
        %v558 = vpack.c.b16 %v540, %v538
        %v559 = vpack.c.b16 %v543, %v541
        %v560 = vpack.c.b16 %v544, %v542
        %577 = vmatprep.subr.bf16.mxu0 %v546
        %578 = vmatpush1.bf16.msra.mxu0 %v545
        %579 = vmatprep.subr.bf16.mxu0 %v548
        %580 = vmatpush1.bf16.msra.mxu0 %v547
        %581 = vmatprep.subr.bf16.mxu0 %v550
        %582 = vmatpush1.bf16.msra.mxu0 %v549
        %583 = vmatprep.subr.bf16.mxu0 %v552
        %584 = vmatpush1.bf16.msra.mxu0 %v551
        %585 = vmatprep.subr.bf16.mxu0 %v554
        %586 = vmatpush1.bf16.msra.mxu0 %v553
        %587 = vmatprep.subr.bf16.mxu0 %v556
        %588 = vmatpush1.bf16.msra.mxu0 %v555
        %589 = vmatprep.subr.bf16.mxu0 %v558
        %590 = vmatpush1.bf16.msra.mxu0 %v557
        %591 = vmatprep.subr.bf16.mxu0 %v560
        %592 = vmatpush1.bf16.msra.mxu0 %v559
        %593 = vmatprep.subr.bf16.mxu0 0
        %594 = vmatpush1.bf16.msra.mxu0 0
        %595 = vmatprep.subr.bf16.mxu0 0
        %596 = vmatpush1.bf16.msra.mxu0 0
        %597 = vmatprep.subr.bf16.mxu0 0
        %598 = vmatpush1.bf16.msra.mxu0 0
        %599 = vmatprep.subr.bf16.mxu0 0
        %600 = vmatpush1.bf16.msra.mxu0 0
        %601 = vmatprep.subr.bf16.mxu0 0
        %602 = vmatpush1.bf16.msra.mxu0 0
        %603 = vmatprep.subr.bf16.mxu0 0
        %604 = vmatpush1.bf16.msra.mxu0 0
        %605 = vmatprep.subr.bf16.mxu0 0
        %606 = vmatpush1.bf16.msra.mxu0 0
        %607 = vmatprep.subr.bf16.mxu0 0
        %608 = vmatpush1.bf16.msra.mxu0 0
        %609 = vmatprep.mubr.bf16.mxu0 0
        %610 = vmatmul.mubr.bf16.gmra.mrb[0].mxu0 %v433
        %v611 = vpop.f32.mrb[0].mxu0
        %v612 = vadd.f32 %v490, %v611
        %v613 = vpop.f32.mrb[0].mxu0
        %v614 = vadd.f32 %v494, %v613
        %v615 = vpop.f32.mrb[0].mxu0
        %v616 = vadd.f32 %v490, %v615
        %v617 = vpop.f32.mrb[0].mxu0
        %v618 = vadd.f32 %v494, %v617
        %619 = vmatprep.mubr.bf16.mxu0 0
        %620 = vmatmul.mubr.bf16.gmra.mrb[0].mxu0 %v434
        %v621 = vpop.f32.mrb[0].mxu0
        %v622 = vadd.f32 %v490, %v621
        %v623 = vpop.f32.mrb[0].mxu0
        %v624 = vadd.f32 %v494, %v623
        %v625 = vpop.f32.mrb[0].mxu0
        %v626 = vadd.f32 %v490, %v625
        %v627 = vpop.f32.mrb[0].mxu0
        %v628 = vadd.f32 %v494, %v627
        %629 = vmatprep.mubr.bf16.mxu0 0
        %630 = vmatmul.mubr.bf16.gmra.mrb[0].mxu0 %v435
        %v631 = vpop.f32.mrb[0].mxu0
        %v632 = vadd.f32 %v490, %v631
        %v633 = vpop.f32.mrb[0].mxu0
        %v634 = vadd.f32 %v494, %v633
        %v635 = vpop.f32.mrb[0].mxu0
        %v636 = vadd.f32 %v490, %v635
        %v637 = vpop.f32.mrb[0].mxu0
        %v638 = vadd.f32 %v494, %v637
        %639 = vmatprep.mubr.bf16.mxu0 0
        %640 = vmatmul.mubr.bf16.gmra.mrb[0].mxu0 %v436
        %v641 = vpop.f32.mrb[0].mxu0
        %v642 = vadd.f32 %v490, %v641
        %v643 = vpop.f32.mrb[0].mxu0
        %v644 = vadd.f32 %v494, %v643
        %v645 = vpop.f32.mrb[0].mxu0
        %v646 = vadd.f32 %v490, %v645
        %v647 = vpop.f32.mrb[0].mxu0
        %v648 = vadd.f32 %v494, %v647
        %649 = vmatprep.mubr.bf16.mxu0 0
        %650 = vmatmul.mubr.bf16.gmra.mrb[0].mxu0 %v437
        %v651 = vpop.f32.mrb[0].mxu0
        %v652 = vadd.f32 %v490, %v651
        %v653 = vpop.f32.mrb[0].mxu0
        %v654 = vadd.f32 %v494, %v653
        %v655 = vpop.f32.mrb[0].mxu0
        %v656 = vadd.f32 %v490, %v655
        %v657 = vpop.f32.mrb[0].mxu0
        %v658 = vadd.f32 %v494, %v657
        %659 = vmatprep.mubr.bf16.mxu0 0
        %660 = vmatmul.mubr.bf16.gmra.mrb[0].mxu0 %v438
        %v661 = vpop.f32.mrb[0].mxu0
        %v662 = vadd.f32 %v490, %v661
        %v663 = vpop.f32.mrb[0].mxu0
        %v664 = vadd.f32 %v494, %v663
        %v665 = vpop.f32.mrb[0].mxu0
        %v666 = vadd.f32 %v490, %v665
        %v667 = vpop.f32.mrb[0].mxu0
        %v668 = vadd.f32 %v494, %v667
        %669 = vmatprep.mubr.bf16.mxu0 0
        %670 = vmatmul.mubr.bf16.gmra.mrb[0].mxu0 %v439
        %v671 = vpop.f32.mrb[0].mxu0
        %v672 = vadd.f32 %v490, %v671
        %v673 = vpop.f32.mrb[0].mxu0
        %v674 = vadd.f32 %v494, %v673
        %v675 = vpop.f32.mrb[0].mxu0
        %v676 = vadd.f32 %v490, %v675
        %v677 = vpop.f32.mrb[0].mxu0
        %v678 = vadd.f32 %v494, %v677
        %679 = vmatprep.mubr.bf16.mxu0 0
        %680 = vmatmul.mubr.bf16.gmra.mrb[0].mxu0 %v440
        %v681 = vpop.f32.mrb[0].mxu0
        %v682 = vadd.f32 %v490, %v681
        %v683 = vpop.f32.mrb[0].mxu0
        %v684 = vadd.f32 %v494, %v683
        %v685 = vpop.f32.mrb[0].mxu0
        %v686 = vadd.f32 %v490, %v685
        %v687 = vpop.f32.mrb[0].mxu0
        %v688 = vadd.f32 %v494, %v687
        %689 = vmatprep.mubr.bf16.mxu0 0
        %690 = vmatmul.mubr.bf16.gmra.mrb[0].mxu0 %v441
        %v691 = vpop.f32.mrb[0].mxu0
        %v692 = vadd.f32 %v490, %v691
        %v693 = vpop.f32.mrb[0].mxu0
        %v694 = vadd.f32 %v494, %v693
        %v695 = vpop.f32.mrb[0].mxu0
        %v696 = vadd.f32 %v490, %v695
        %v697 = vpop.f32.mrb[0].mxu0
        %v698 = vadd.f32 %v494, %v697
        %699 = vmatprep.mubr.bf16.mxu0 0
        %700 = vmatmul.mubr.bf16.gmra.mrb[0].mxu0 %v442
        %v701 = vpop.f32.mrb[0].mxu0
        %v702 = vadd.f32 %v490, %v701
        %v703 = vpop.f32.mrb[0].mxu0
        %v704 = vadd.f32 %v494, %v703
        %v705 = vpop.f32.mrb[0].mxu0
        %v706 = vadd.f32 %v490, %v705
        %v707 = vpop.f32.mrb[0].mxu0
        %v708 = vadd.f32 %v494, %v707
        %709 = vmatprep.mubr.bf16.mxu0 0
        %710 = vmatmul.mubr.bf16.gmra.mrb[0].mxu0 %v443
        %v711 = vpop.f32.mrb[0].mxu0
        %v712 = vadd.f32 %v490, %v711
        %v713 = vpop.f32.mrb[0].mxu0
        %v714 = vadd.f32 %v494, %v713
        %v715 = vpop.f32.mrb[0].mxu0
        %v716 = vadd.f32 %v490, %v715
        %v717 = vpop.f32.mrb[0].mxu0
        %v718 = vadd.f32 %v494, %v717
        %719 = vmatprep.mubr.bf16.mxu0 0
        %720 = vmatmul.mubr.bf16.gmra.mrb[0].mxu0 %v444
        %v721 = vpop.f32.mrb[0].mxu0
        %v722 = vadd.f32 %v490, %v721
        %v723 = vpop.f32.mrb[0].mxu0
        %v724 = vadd.f32 %v494, %v723
        %v725 = vpop.f32.mrb[0].mxu0
        %v726 = vadd.f32 %v490, %v725
        %v727 = vpop.f32.mrb[0].mxu0
        %v728 = vadd.f32 %v494, %v727
        %729 = vmatprep.mubr.bf16.mxu0 0
        %730 = vmatmul.mubr.bf16.gmra.mrb[0].mxu0 %v445
        %v731 = vpop.f32.mrb[0].mxu0
        %v732 = vadd.f32 %v490, %v731
        %v733 = vpop.f32.mrb[0].mxu0
        %v734 = vadd.f32 %v494, %v733
        %v735 = vpop.f32.mrb[0].mxu0
        %v736 = vadd.f32 %v490, %v735
        %v737 = vpop.f32.mrb[0].mxu0
        %v738 = vadd.f32 %v494, %v737
        %739 = vmatprep.mubr.bf16.mxu0 0
        %740 = vmatmul.mubr.bf16.gmra.mrb[0].mxu0 %v446
        %v741 = vpop.f32.mrb[0].mxu0
        %v742 = vadd.f32 %v490, %v741
        %v743 = vpop.f32.mrb[0].mxu0
        %v744 = vadd.f32 %v494, %v743
        %v745 = vpop.f32.mrb[0].mxu0
        %v746 = vadd.f32 %v490, %v745
        %v747 = vpop.f32.mrb[0].mxu0
        %v748 = vadd.f32 %v494, %v747
        %749 = vmatprep.mubr.bf16.mxu0 0
        %750 = vmatmul.mubr.bf16.gmra.mrb[0].mxu0 %v447
        %v751 = vpop.f32.mrb[0].mxu0
        %v752 = vadd.f32 %v490, %v751
        %v753 = vpop.f32.mrb[0].mxu0
        %v754 = vadd.f32 %v494, %v753
        %v755 = vpop.f32.mrb[0].mxu0
        %v756 = vadd.f32 %v490, %v755
        %v757 = vpop.f32.mrb[0].mxu0
        %v758 = vadd.f32 %v494, %v757
        %759 = vmatprep.mubr.bf16.mxu0 0
        %760 = vmatmul.mubr.bf16.gmra.mrb[0].mxu0 %v448
        %v761 = vpop.f32.mrb[0].mxu0
        %v762 = vadd.f32 %v490, %v761
        %v763 = vpop.f32.mrb[0].mxu0
        %v764 = vadd.f32 %v494, %v763
        %v765 = vpop.f32.mrb[0].mxu0
        %v766 = vadd.f32 %v490, %v765
        %v767 = vpop.f32.mrb[0].mxu0
        %v768 = vadd.f32 %v494, %v767
        %769 = vmatprep.mubr.bf16.mxu0 0
        %770 = vmatmul.mubr.bf16.gmra.mrb[0].mxu0 %v449
        %v771 = vpop.f32.mrb[0].mxu0
        %v772 = vadd.f32 %v490, %v771
        %v773 = vpop.f32.mrb[0].mxu0
        %v774 = vadd.f32 %v494, %v773
        %v775 = vpop.f32.mrb[0].mxu0
        %v776 = vadd.f32 %v490, %v775
        %v777 = vpop.f32.mrb[0].mxu0
        %v778 = vadd.f32 %v494, %v777
        %779 = vmatprep.mubr.bf16.mxu0 0
        %780 = vmatmul.mubr.bf16.gmra.mrb[0].mxu0 %v450
        %v781 = vpop.f32.mrb[0].mxu0
        %v782 = vadd.f32 %v490, %v781
        %v783 = vpop.f32.mrb[0].mxu0
        %v784 = vadd.f32 %v494, %v783
        %v785 = vpop.f32.mrb[0].mxu0
        %v786 = vadd.f32 %v490, %v785
        %v787 = vpop.f32.mrb[0].mxu0
        %v788 = vadd.f32 %v494, %v787
        %789 = vmatprep.mubr.bf16.mxu0 0
        %790 = vmatmul.mubr.bf16.gmra.mrb[0].mxu0 %v451
        %v791 = vpop.f32.mrb[0].mxu0
        %v792 = vadd.f32 %v490, %v791
        %v793 = vpop.f32.mrb[0].mxu0
        %v794 = vadd.f32 %v494, %v793
        %v795 = vpop.f32.mrb[0].mxu0
        %v796 = vadd.f32 %v490, %v795
        %v797 = vpop.f32.mrb[0].mxu0
        %v798 = vadd.f32 %v494, %v797
        %799 = vmatprep.mubr.bf16.mxu0 0
        %800 = vmatmul.mubr.bf16.gmra.mrb[0].mxu0 %v452
        %v801 = vpop.f32.mrb[0].mxu0
        %v802 = vadd.f32 %v490, %v801
        %v803 = vpop.f32.mrb[0].mxu0
        %v804 = vadd.f32 %v494, %v803
        %v805 = vpop.f32.mrb[0].mxu0
        %v806 = vadd.f32 %v490, %v805
        %v807 = vpop.f32.mrb[0].mxu0
        %v808 = vadd.f32 %v494, %v807
        %809 = vmatprep.mubr.bf16.mxu0 0
        %810 = vmatmul.mubr.bf16.gmra.mrb[0].mxu0 %v453
        %v811 = vpop.f32.mrb[0].mxu0
        %v812 = vadd.f32 %v490, %v811
        %v813 = vpop.f32.mrb[0].mxu0
        %v814 = vadd.f32 %v494, %v813
        %v815 = vpop.f32.mrb[0].mxu0
        %v816 = vadd.f32 %v490, %v815
        %v817 = vpop.f32.mrb[0].mxu0
        %v818 = vadd.f32 %v494, %v817
        %819 = vmatprep.mubr.bf16.mxu0 0
        %820 = vmatmul.mubr.bf16.gmra.mrb[0].mxu0 %v454
        %v821 = vpop.f32.mrb[0].mxu0
        %v822 = vadd.f32 %v490, %v821
        %v823 = vpop.f32.mrb[0].mxu0
        %v824 = vadd.f32 %v494, %v823
        %v825 = vpop.f32.mrb[0].mxu0
        %v826 = vadd.f32 %v490, %v825
        %v827 = vpop.f32.mrb[0].mxu0
        %v828 = vadd.f32 %v494, %v827
        %829 = vmatprep.mubr.bf16.mxu0 0
        %830 = vmatmul.mubr.bf16.gmra.mrb[0].mxu0 %v455
        %v831 = vpop.f32.mrb[0].mxu0
        %v832 = vadd.f32 %v490, %v831
        %v833 = vpop.f32.mrb[0].mxu0
        %v834 = vadd.f32 %v494, %v833
        %v835 = vpop.f32.mrb[0].mxu0
        %v836 = vadd.f32 %v490, %v835
        %v837 = vpop.f32.mrb[0].mxu0
        %v838 = vadd.f32 %v494, %v837
        %839 = vmatprep.mubr.bf16.mxu0 0
        %840 = vmatmul.mubr.bf16.gmra.mrb[0].mxu0 %v456
        %v841 = vpop.f32.mrb[0].mxu0
        %v842 = vadd.f32 %v490, %v841
        %v843 = vpop.f32.mrb[0].mxu0
        %v844 = vadd.f32 %v494, %v843
        %v845 = vpop.f32.mrb[0].mxu0
        %v846 = vadd.f32 %v490, %v845
        %v847 = vpop.f32.mrb[0].mxu0
        %v848 = vadd.f32 %v494, %v847
        %849 = vmatprep.mubr.bf16.mxu0 0
        %850 = vmatmul.mubr.bf16.gmra.mrb[0].mxu0 %v457
        %v851 = vpop.f32.mrb[0].mxu0
        %v852 = vadd.f32 %v490, %v851
        %v853 = vpop.f32.mrb[0].mxu0
        %v854 = vadd.f32 %v494, %v853
        %v855 = vpop.f32.mrb[0].mxu0
        %v856 = vadd.f32 %v490, %v855
        %v857 = vpop.f32.mrb[0].mxu0
        %v858 = vadd.f32 %v494, %v857
        %859 = vmatprep.mubr.bf16.mxu0 0
        %860 = vmatmul.mubr.bf16.gmra.mrb[0].mxu0 %v458
        %v861 = vpop.f32.mrb[0].mxu0
        %v862 = vadd.f32 %v490, %v861
        %v863 = vpop.f32.mrb[0].mxu0
        %v864 = vadd.f32 %v494, %v863
        %v865 = vpop.f32.mrb[0].mxu0
        %v866 = vadd.f32 %v490, %v865
        %v867 = vpop.f32.mrb[0].mxu0
        %v868 = vadd.f32 %v494, %v867
        %869 = vmatprep.mubr.bf16.mxu0 0
        %870 = vmatmul.mubr.bf16.gmra.mrb[0].mxu0 %v459
        %v871 = vpop.f32.mrb[0].mxu0
        %v872 = vadd.f32 %v490, %v871
        %v873 = vpop.f32.mrb[0].mxu0
        %v874 = vadd.f32 %v494, %v873
        %v875 = vpop.f32.mrb[0].mxu0
        %v876 = vadd.f32 %v490, %v875
        %v877 = vpop.f32.mrb[0].mxu0
        %v878 = vadd.f32 %v494, %v877
        %879 = vmatprep.mubr.bf16.mxu0 0
        %880 = vmatmul.mubr.bf16.gmra.mrb[0].mxu0 %v460
        %v881 = vpop.f32.mrb[0].mxu0
        %v882 = vadd.f32 %v490, %v881
        %v883 = vpop.f32.mrb[0].mxu0
        %v884 = vadd.f32 %v494, %v883
        %v885 = vpop.f32.mrb[0].mxu0
        %v886 = vadd.f32 %v490, %v885
        %v887 = vpop.f32.mrb[0].mxu0
        %v888 = vadd.f32 %v494, %v887
        %889 = vmatprep.mubr.bf16.mxu0 0
        %890 = vmatmul.mubr.bf16.gmra.mrb[0].mxu0 %v461
        %v891 = vpop.f32.mrb[0].mxu0
        %v892 = vadd.f32 %v490, %v891
        %v893 = vpop.f32.mrb[0].mxu0
        %v894 = vadd.f32 %v494, %v893
        %v895 = vpop.f32.mrb[0].mxu0
        %v896 = vadd.f32 %v490, %v895
        %v897 = vpop.f32.mrb[0].mxu0
        %v898 = vadd.f32 %v494, %v897
        %899 = vmatprep.mubr.bf16.mxu0 0
        %900 = vmatmul.mubr.bf16.gmra.mrb[0].mxu0 %v462
        %v901 = vpop.f32.mrb[0].mxu0
        %v902 = vadd.f32 %v490, %v901
        %v903 = vpop.f32.mrb[0].mxu0
        %v904 = vadd.f32 %v494, %v903
        %v905 = vpop.f32.mrb[0].mxu0
        %v906 = vadd.f32 %v490, %v905
        %v907 = vpop.f32.mrb[0].mxu0
        %v908 = vadd.f32 %v494, %v907
        %909 = vmatprep.mubr.bf16.mxu0 0
        %910 = vmatmul.mubr.bf16.gmra.mrb[0].mxu0 %v463
        %v911 = vpop.f32.mrb[0].mxu0
        %v912 = vadd.f32 %v490, %v911
        %v913 = vpop.f32.mrb[0].mxu0
        %v914 = vadd.f32 %v494, %v913
        %v915 = vpop.f32.mrb[0].mxu0
        %v916 = vadd.f32 %v490, %v915
        %v917 = vpop.f32.mrb[0].mxu0
        %v918 = vadd.f32 %v494, %v917
        %919 = vmatprep.mubr.bf16.mxu0 0
        %920 = vmatmul.mubr.bf16.gmra.mrb[0].mxu0 %v464
        %v921 = vpop.f32.mrb[0].mxu0
        %v922 = vadd.f32 %v490, %v921
        %v923 = vpop.f32.mrb[0].mxu0
        %v924 = vadd.f32 %v494, %v923
        %v925 = vpop.f32.mrb[0].mxu0
        %v926 = vadd.f32 %v490, %v925
        %v927 = vpop.f32.mrb[0].mxu0
        %v928 = vadd.f32 %v494, %v927
        %929 = vdwg.mxu0
        %v930 = vtanh.pop %v612
        %v931 = vtanh.pop %v614
        %v932 = vtanh.pop %v616
        %v933 = vtanh.pop %v618
        %v934 = vtanh.pop %v622
        %v935 = vtanh.pop %v624
        %v936 = vtanh.pop %v626
        %v937 = vtanh.pop %v628
        %v938 = vtanh.pop %v632
        %v939 = vtanh.pop %v634
        %v940 = vtanh.pop %v636
        %v941 = vtanh.pop %v638
        %v942 = vtanh.pop %v642
        %v943 = vtanh.pop %v644
        %v944 = vtanh.pop %v646
        %v945 = vtanh.pop %v648
        %v946 = vtanh.pop %v652
        %v947 = vtanh.pop %v654
        %v948 = vtanh.pop %v656
        %v949 = vtanh.pop %v658
        %v950 = vtanh.pop %v662
        %v951 = vtanh.pop %v664
        %v952 = vtanh.pop %v666
        %v953 = vtanh.pop %v668
        %v954 = vtanh.pop %v672
        %v955 = vtanh.pop %v674
        %v956 = vtanh.pop %v676
        %v957 = vtanh.pop %v678
        %v958 = vtanh.pop %v682
        %v959 = vtanh.pop %v684
        %v960 = vtanh.pop %v686
        %v961 = vtanh.pop %v688
        %v962 = vtanh.pop %v692
        %v963 = vtanh.pop %v694
        %v964 = vtanh.pop %v696
        %v965 = vtanh.pop %v698
        %v966 = vtanh.pop %v702
        %v967 = vtanh.pop %v704
        %v968 = vtanh.pop %v706
        %v969 = vtanh.pop %v708
        %v970 = vtanh.pop %v712
        %v971 = vtanh.pop %v714
        %v972 = vtanh.pop %v716
        %v973 = vtanh.pop %v718
        %v974 = vtanh.pop %v722
        %v975 = vtanh.pop %v724
        %v976 = vtanh.pop %v726
        %v977 = vtanh.pop %v728
        %v978 = vtanh.pop %v732
        %v979 = vtanh.pop %v734
        %v980 = vtanh.pop %v736
        %v981 = vtanh.pop %v738
        %v982 = vtanh.pop %v742
        %v983 = vtanh.pop %v744
        %v984 = vtanh.pop %v746
        %v985 = vtanh.pop %v748
        %v986 = vtanh.pop %v752
        %v987 = vtanh.pop %v754
        %v988 = vtanh.pop %v756
        %v989 = vtanh.pop %v758
        %v990 = vtanh.pop %v762
        %v991 = vtanh.pop %v764
        %v992 = vtanh.pop %v766
        %v993 = vtanh.pop %v768
        %v994 = vtanh.pop %v772
        %v995 = vtanh.pop %v774
        %v996 = vtanh.pop %v776
        %v997 = vtanh.pop %v778
        %v998 = vtanh.pop %v782
        %v999 = vtanh.pop %v784
        %v1000 = vtanh.pop %v786
        %v1001 = vtanh.pop %v788
        %v1002 = vtanh.pop %v792
        %v1003 = vtanh.pop %v794
        %v1004 = vtanh.pop %v796
        %v1005 = vtanh.pop %v798
        %v1006 = vtanh.pop %v802
        %v1007 = vtanh.pop %v804
        %v1008 = vtanh.pop %v806
        %v1009 = vtanh.pop %v808
        %v1010 = vtanh.pop %v812
        %v1011 = vtanh.pop %v814
        %v1012 = vtanh.pop %v816
        %v1013 = vtanh.pop %v818
        %v1014 = vtanh.pop %v822
        %v1015 = vtanh.pop %v824
        %v1016 = vtanh.pop %v826
        %v1017 = vtanh.pop %v828
        %v1018 = vtanh.pop %v832
        %v1019 = vtanh.pop %v834
        %v1020 = vtanh.pop %v836
        %v1021 = vtanh.pop %v838
        %v1022 = vtanh.pop %v842
        %v1023 = vtanh.pop %v844
        %v1024 = vtanh.pop %v846
        %v1025 = vtanh.pop %v848
        %v1026 = vtanh.pop %v852
        %v1027 = vtanh.pop %v854
        %v1028 = vtanh.pop %v856
        %v1029 = vtanh.pop %v858
        %v1030 = vtanh.pop %v862
        %v1031 = vtanh.pop %v864
        %v1032 = vtanh.pop %v866
        %v1033 = vtanh.pop %v868
        %v1034 = vtanh.pop %v872
        %v1035 = vtanh.pop %v874
        %v1036 = vtanh.pop %v876
        %v1037 = vtanh.pop %v878
        %v1038 = vtanh.pop %v882
        %v1039 = vtanh.pop %v884
        %v1040 = vtanh.pop %v886
        %v1041 = vtanh.pop %v888
        %v1042 = vtanh.pop %v892
        %v1043 = vtanh.pop %v894
        %v1044 = vtanh.pop %v896
        %v1045 = vtanh.pop %v898
        %v1046 = vtanh.pop %v902
        %v1047 = vtanh.pop %v904
        %v1048 = vtanh.pop %v906
        %v1049 = vtanh.pop %v908
        %v1050 = vtanh.pop %v912
        %v1051 = vtanh.pop %v914
        %v1052 = vtanh.pop %v916
        %v1053 = vtanh.pop %v918
        %v1054 = vtanh.pop %v922
        %v1055 = vtanh.pop %v924
        %v1056 = vtanh.pop %v926
        %v1057 = vtanh.pop %v928
        %v1058 = vpack.c.bf16 %v932, %v930
        %v1059 = vpack.c.bf16 %v933, %v931
        %v1060 = vpack.c.bf16 %v936, %v934
        %v1061 = vpack.c.bf16 %v937, %v935
        %v1062 = vpack.c.bf16 %v940, %v938
        %v1063 = vpack.c.bf16 %v941, %v939
        %v1064 = vpack.c.bf16 %v944, %v942
        %v1065 = vpack.c.bf16 %v945, %v943
        %v1066 = vpack.c.bf16 %v948, %v946
        %v1067 = vpack.c.bf16 %v949, %v947
        %v1068 = vpack.c.bf16 %v952, %v950
        %v1069 = vpack.c.bf16 %v953, %v951
        %v1070 = vpack.c.bf16 %v956, %v954
        %v1071 = vpack.c.bf16 %v957, %v955
        %v1072 = vpack.c.bf16 %v960, %v958
        %v1073 = vpack.c.bf16 %v961, %v959
        %v1074 = vpack.c.bf16 %v964, %v962
        %v1075 = vpack.c.bf16 %v965, %v963
        %v1076 = vpack.c.bf16 %v968, %v966
        %v1077 = vpack.c.bf16 %v969, %v967
        %v1078 = vpack.c.bf16 %v972, %v970
        %v1079 = vpack.c.bf16 %v973, %v971
        %v1080 = vpack.c.bf16 %v976, %v974
        %v1081 = vpack.c.bf16 %v977, %v975
        %v1082 = vpack.c.bf16 %v980, %v978
        %v1083 = vpack.c.bf16 %v981, %v979
        %v1084 = vpack.c.bf16 %v984, %v982
        %v1085 = vpack.c.bf16 %v985, %v983
        %v1086 = vpack.c.bf16 %v988, %v986
        %v1087 = vpack.c.bf16 %v989, %v987
        %v1088 = vpack.c.bf16 %v992, %v990
        %v1089 = vpack.c.bf16 %v993, %v991
        %v1090 = vpack.c.bf16 %v996, %v994
        %v1091 = vpack.c.bf16 %v997, %v995
        %v1092 = vpack.c.bf16 %v1000, %v998
        %v1093 = vpack.c.bf16 %v1001, %v999
        %v1094 = vpack.c.bf16 %v1004, %v1002
        %v1095 = vpack.c.bf16 %v1005, %v1003
        %v1096 = vpack.c.bf16 %v1008, %v1006
        %v1097 = vpack.c.bf16 %v1009, %v1007
        %v1098 = vpack.c.bf16 %v1012, %v1010
        %v1099 = vpack.c.bf16 %v1013, %v1011
        %v1100 = vpack.c.bf16 %v1016, %v1014
        %v1101 = vpack.c.bf16 %v1017, %v1015
        %v1102 = vpack.c.bf16 %v1020, %v1018
        %v1103 = vpack.c.bf16 %v1021, %v1019
        %v1104 = vpack.c.bf16 %v1024, %v1022
        %v1105 = vpack.c.bf16 %v1025, %v1023
        %v1106 = vpack.c.bf16 %v1028, %v1026
        %v1107 = vpack.c.bf16 %v1029, %v1027
        %v1108 = vpack.c.bf16 %v1032, %v1030
        %v1109 = vpack.c.bf16 %v1033, %v1031
        %v1110 = vpack.c.bf16 %v1036, %v1034
        %v1111 = vpack.c.bf16 %v1037, %v1035
        %v1112 = vpack.c.bf16 %v1040, %v1038
        %v1113 = vpack.c.bf16 %v1041, %v1039
        %v1114 = vpack.c.bf16 %v1044, %v1042
        %v1115 = vpack.c.bf16 %v1045, %v1043
        %v1116 = vpack.c.bf16 %v1048, %v1046
        %v1117 = vpack.c.bf16 %v1049, %v1047
        %v1118 = vpack.c.bf16 %v1052, %v1050
        %v1119 = vpack.c.bf16 %v1053, %v1051
        %v1120 = vpack.c.bf16 %v1056, %v1054
        %v1121 = vpack.c.bf16 %v1057, %v1055
        %v1122 = vld [vmem:[#allocation11] sm:$0xf]
        %v1123 = vld [vmem:[#allocation11 + $0x4] sm:$0xf]
        %v1124 = vld [vmem:[#allocation11 + $0x8] sm:$0xf]
        %v1125 = vld [vmem:[#allocation11 + $0xc] sm:$0xf]
        %v1126 = vld [vmem:[#allocation11 + $0x10] sm:$0xf]
        %v1127 = vld [vmem:[#allocation11 + $0x14] sm:$0xf]
        %v1128 = vld [vmem:[#allocation11 + $0x18] sm:$0xf]
        %v1129 = vld [vmem:[#allocation11 + $0x1c] sm:$0xf]
        %v1130 = vld [vmem:[#allocation11 + $0x20] sm:$0xf]
        %v1131 = vld [vmem:[#allocation11 + $0x24] sm:$0xf]
        %v1132 = vld [vmem:[#allocation11 + $0x28] sm:$0xf]
        %v1133 = vld [vmem:[#allocation11 + $0x2c] sm:$0xf]
        %v1134 = vld [vmem:[#allocation11 + $0x30] sm:$0xf]
        %v1135 = vld [vmem:[#allocation11 + $0x34] sm:$0xf]
        %v1136 = vld [vmem:[#allocation11 + $0x38] sm:$0xf]
        %v1137 = vld [vmem:[#allocation11 + $0x3c] sm:$0xf]
        %v1138 = vld [vmem:[#allocation11 + $0x40] sm:$0xf]
        %v1139 = vld [vmem:[#allocation11 + $0x44] sm:$0xf]
        %v1140 = vld [vmem:[#allocation11 + $0x48] sm:$0xf]
        %v1141 = vld [vmem:[#allocation11 + $0x4c] sm:$0xf]
        %v1142 = vld [vmem:[#allocation11 + $0x50] sm:$0xf]
        %v1143 = vld [vmem:[#allocation11 + $0x54] sm:$0xf]
        %v1144 = vld [vmem:[#allocation11 + $0x58] sm:$0xf]
        %v1145 = vld [vmem:[#allocation11 + $0x5c] sm:$0xf]
        %v1146 = vld [vmem:[#allocation11 + $0x60] sm:$0xf]
        %v1147 = vld [vmem:[#allocation11 + $0x64] sm:$0xf]
        %v1148 = vld [vmem:[#allocation11 + $0x68] sm:$0xf]
        %v1149 = vld [vmem:[#allocation11 + $0x6c] sm:$0xf]
        %v1150 = vld [vmem:[#allocation11 + $0x70] sm:$0xf]
        %v1151 = vld [vmem:[#allocation11 + $0x74] sm:$0xf]
        %v1152 = vld [vmem:[#allocation11 + $0x78] sm:$0xf]
        %v1153 = vld [vmem:[#allocation11 + $0x7c] sm:$0xf]
        %v1154 = vld [vmem:[#allocation12] sm:$0x1]
        %v1156 = vlaneseq
        %v1157 = vshrl.u32 %v1156, 7
        %v1158 = vsub.s32 0, %v1157
        %v1159 = vrot.slane %v1154, %v1158
        %v1193 = vunpack.c.l.b16 %v1122
        %v1194 = vunpack.c.l.b16 %v1123
        %v1195 = vunpack.c.l.b16 %v1124
        %v1196 = vunpack.c.l.b16 %v1125
        %v1197 = vunpack.c.l.b16 %v1126
        %v1198 = vunpack.c.l.b16 %v1127
        %v1199 = vunpack.c.l.b16 %v1128
        %v1200 = vunpack.c.l.b16 %v1129
        %v1201 = vunpack.c.l.b16 %v1130
        %v1202 = vunpack.c.l.b16 %v1131
        %v1203 = vunpack.c.l.b16 %v1132
        %v1204 = vunpack.c.l.b16 %v1133
        %v1205 = vunpack.c.l.b16 %v1134
        %v1206 = vunpack.c.l.b16 %v1135
        %v1207 = vunpack.c.l.b16 %v1136
        %v1208 = vunpack.c.l.b16 %v1137
        %v1209 = vunpack.c.l.b16 %v1138
        %v1210 = vunpack.c.l.b16 %v1139
        %v1211 = vunpack.c.l.b16 %v1140
        %v1212 = vunpack.c.l.b16 %v1141
        %v1213 = vunpack.c.l.b16 %v1142
        %v1214 = vunpack.c.l.b16 %v1143
        %v1215 = vunpack.c.l.b16 %v1144
        %v1216 = vunpack.c.l.b16 %v1145
        %v1217 = vunpack.c.l.b16 %v1146
        %v1218 = vunpack.c.l.b16 %v1147
        %v1219 = vunpack.c.l.b16 %v1148
        %v1220 = vunpack.c.l.b16 %v1149
        %v1221 = vunpack.c.l.b16 %v1150
        %v1222 = vunpack.c.l.b16 %v1151
        %v1223 = vunpack.c.l.b16 %v1152
        %v1224 = vunpack.c.l.b16 %v1153
        %v1225 = vpack.c.b16 %v1194, %v1193
        %v1226 = vpack.c.b16 %v1196, %v1195
        %v1227 = vpack.c.b16 %v1198, %v1197
        %v1228 = vpack.c.b16 %v1200, %v1199
        %v1229 = vpack.c.b16 %v1202, %v1201
        %v1230 = vpack.c.b16 %v1204, %v1203
        %v1231 = vpack.c.b16 %v1206, %v1205
        %v1232 = vpack.c.b16 %v1208, %v1207
        %v1233 = vpack.c.b16 %v1210, %v1209
        %v1234 = vpack.c.b16 %v1212, %v1211
        %v1235 = vpack.c.b16 %v1214, %v1213
        %v1236 = vpack.c.b16 %v1216, %v1215
        %v1237 = vpack.c.b16 %v1218, %v1217
        %v1238 = vpack.c.b16 %v1220, %v1219
        %v1239 = vpack.c.b16 %v1222, %v1221
        %v1240 = vpack.c.b16 %v1224, %v1223
        %1257 = vmatprep.subr.bf16.mxu0 0
        %1258 = vmatpush1.bf16.msra.mxu0 %v1225
        %1259 = vmatprep.subr.bf16.mxu0 0
        %1260 = vmatpush1.bf16.msra.mxu0 %v1226
        %1261 = vmatprep.subr.bf16.mxu0 0
        %1262 = vmatpush1.bf16.msra.mxu0 %v1227
        %1263 = vmatprep.subr.bf16.mxu0 0
        %1264 = vmatpush1.bf16.msra.mxu0 %v1228
        %1265 = vmatprep.subr.bf16.mxu0 0
        %1266 = vmatpush1.bf16.msra.mxu0 %v1229
        %1267 = vmatprep.subr.bf16.mxu0 0
        %1268 = vmatpush1.bf16.msra.mxu0 %v1230
        %1269 = vmatprep.subr.bf16.mxu0 0
        %1270 = vmatpush1.bf16.msra.mxu0 %v1231
        %1271 = vmatprep.subr.bf16.mxu0 0
        %1272 = vmatpush1.bf16.msra.mxu0 %v1232
        %1273 = vmatprep.subr.bf16.mxu0 0
        %1274 = vmatpush1.bf16.msra.mxu0 %v1233
        %1275 = vmatprep.subr.bf16.mxu0 0
        %1276 = vmatpush1.bf16.msra.mxu0 %v1234
        %1277 = vmatprep.subr.bf16.mxu0 0
        %1278 = vmatpush1.bf16.msra.mxu0 %v1235
        %1279 = vmatprep.subr.bf16.mxu0 0
        %1280 = vmatpush1.bf16.msra.mxu0 %v1236
        %1281 = vmatprep.subr.bf16.mxu0 0
        %1282 = vmatpush1.bf16.msra.mxu0 %v1237
        %1283 = vmatprep.subr.bf16.mxu0 0
        %1284 = vmatpush1.bf16.msra.mxu0 %v1238
        %1285 = vmatprep.subr.bf16.mxu0 0
        %1286 = vmatpush1.bf16.msra.mxu0 %v1239
        %1287 = vmatprep.subr.bf16.mxu0 0
        %1288 = vmatpush1.bf16.msra.mxu0 %v1240
        %1289 = vmatprep.mubr.bf16.mxu0 %v1059
        %1290 = vmatmul.mubr.bf16.gmra.mrb[0].mxu0 %v1058
        %v1291 = vpop.f32.mrb[0].mxu0
        %v1292 = vadd.f32 %v1159, %v1291
        %v1293 = vpop.f32.mrb[0].mxu0
        %v1294 = vpop.f32.mrb[0].mxu0
        %v1295 = vadd.f32 %v1159, %v1294
        %v1296 = vpop.f32.mrb[0].mxu0
        %1297 = vmatprep.mubr.bf16.mxu0 %v1061
        %1298 = vmatmul.mubr.bf16.gmra.mrb[0].mxu0 %v1060
        %v1299 = vpop.f32.mrb[0].mxu0
        %v1300 = vadd.f32 %v1159, %v1299
        %v1301 = vpop.f32.mrb[0].mxu0
        %v1302 = vpop.f32.mrb[0].mxu0
        %v1303 = vadd.f32 %v1159, %v1302
        %v1304 = vpop.f32.mrb[0].mxu0
        %1305 = vmatprep.mubr.bf16.mxu0 %v1063
        %1306 = vmatmul.mubr.bf16.gmra.mrb[0].mxu0 %v1062
        %v1307 = vpop.f32.mrb[0].mxu0
        %v1308 = vadd.f32 %v1159, %v1307
        %v1309 = vpop.f32.mrb[0].mxu0
        %v1310 = vpop.f32.mrb[0].mxu0
        %v1311 = vadd.f32 %v1159, %v1310
        %v1312 = vpop.f32.mrb[0].mxu0
        %1313 = vmatprep.mubr.bf16.mxu0 %v1065
        %1314 = vmatmul.mubr.bf16.gmra.mrb[0].mxu0 %v1064
        %v1315 = vpop.f32.mrb[0].mxu0
        %v1316 = vadd.f32 %v1159, %v1315
        %v1317 = vpop.f32.mrb[0].mxu0
        %v1318 = vpop.f32.mrb[0].mxu0
        %v1319 = vadd.f32 %v1159, %v1318
        %v1320 = vpop.f32.mrb[0].mxu0
        %1321 = vmatprep.mubr.bf16.mxu0 %v1067
        %1322 = vmatmul.mubr.bf16.gmra.mrb[0].mxu0 %v1066
        %v1323 = vpop.f32.mrb[0].mxu0
        %v1324 = vadd.f32 %v1159, %v1323
        %v1325 = vpop.f32.mrb[0].mxu0
        %v1326 = vpop.f32.mrb[0].mxu0
        %v1327 = vadd.f32 %v1159, %v1326
        %v1328 = vpop.f32.mrb[0].mxu0
        %1329 = vmatprep.mubr.bf16.mxu0 %v1069
        %1330 = vmatmul.mubr.bf16.gmra.mrb[0].mxu0 %v1068
        %v1331 = vpop.f32.mrb[0].mxu0
        %v1332 = vadd.f32 %v1159, %v1331
        %v1333 = vpop.f32.mrb[0].mxu0
        %v1334 = vpop.f32.mrb[0].mxu0
        %v1335 = vadd.f32 %v1159, %v1334
        %v1336 = vpop.f32.mrb[0].mxu0
        %1337 = vmatprep.mubr.bf16.mxu0 %v1071
        %1338 = vmatmul.mubr.bf16.gmra.mrb[0].mxu0 %v1070
        %v1339 = vpop.f32.mrb[0].mxu0
        %v1340 = vadd.f32 %v1159, %v1339
        %v1341 = vpop.f32.mrb[0].mxu0
        %v1342 = vpop.f32.mrb[0].mxu0
        %v1343 = vadd.f32 %v1159, %v1342
        %v1344 = vpop.f32.mrb[0].mxu0
        %1345 = vmatprep.mubr.bf16.mxu0 %v1073
        %1346 = vmatmul.mubr.bf16.gmra.mrb[0].mxu0 %v1072
        %v1347 = vpop.f32.mrb[0].mxu0
        %v1348 = vadd.f32 %v1159, %v1347
        %v1349 = vpop.f32.mrb[0].mxu0
        %v1350 = vpop.f32.mrb[0].mxu0
        %v1351 = vadd.f32 %v1159, %v1350
        %v1352 = vpop.f32.mrb[0].mxu0
        %1353 = vmatprep.mubr.bf16.mxu0 %v1075
        %1354 = vmatmul.mubr.bf16.gmra.mrb[0].mxu0 %v1074
        %v1355 = vpop.f32.mrb[0].mxu0
        %v1356 = vadd.f32 %v1159, %v1355
        %v1357 = vpop.f32.mrb[0].mxu0
        %v1358 = vpop.f32.mrb[0].mxu0
        %v1359 = vadd.f32 %v1159, %v1358
        %v1360 = vpop.f32.mrb[0].mxu0
        %1361 = vmatprep.mubr.bf16.mxu0 %v1077
        %1362 = vmatmul.mubr.bf16.gmra.mrb[0].mxu0 %v1076
        %v1363 = vpop.f32.mrb[0].mxu0
        %v1364 = vadd.f32 %v1159, %v1363
        %v1365 = vpop.f32.mrb[0].mxu0
        %v1366 = vpop.f32.mrb[0].mxu0
        %v1367 = vadd.f32 %v1159, %v1366
        %v1368 = vpop.f32.mrb[0].mxu0
        %1369 = vmatprep.mubr.bf16.mxu0 %v1079
        %1370 = vmatmul.mubr.bf16.gmra.mrb[0].mxu0 %v1078
        %v1371 = vpop.f32.mrb[0].mxu0
        %v1372 = vadd.f32 %v1159, %v1371
        %v1373 = vpop.f32.mrb[0].mxu0
        %v1374 = vpop.f32.mrb[0].mxu0
        %v1375 = vadd.f32 %v1159, %v1374
        %v1376 = vpop.f32.mrb[0].mxu0
        %1377 = vmatprep.mubr.bf16.mxu0 %v1081
        %1378 = vmatmul.mubr.bf16.gmra.mrb[0].mxu0 %v1080
        %v1379 = vpop.f32.mrb[0].mxu0
        %v1380 = vadd.f32 %v1159, %v1379
        %v1381 = vpop.f32.mrb[0].mxu0
        %v1382 = vpop.f32.mrb[0].mxu0
        %v1383 = vadd.f32 %v1159, %v1382
        %v1384 = vpop.f32.mrb[0].mxu0
        %1385 = vmatprep.mubr.bf16.mxu0 %v1083
        %1386 = vmatmul.mubr.bf16.gmra.mrb[0].mxu0 %v1082
        %v1387 = vpop.f32.mrb[0].mxu0
        %v1388 = vadd.f32 %v1159, %v1387
        %v1389 = vpop.f32.mrb[0].mxu0
        %v1390 = vpop.f32.mrb[0].mxu0
        %v1391 = vadd.f32 %v1159, %v1390
        %v1392 = vpop.f32.mrb[0].mxu0
        %1393 = vmatprep.mubr.bf16.mxu0 %v1085
        %1394 = vmatmul.mubr.bf16.gmra.mrb[0].mxu0 %v1084
        %v1395 = vpop.f32.mrb[0].mxu0
        %v1396 = vadd.f32 %v1159, %v1395
        %v1397 = vpop.f32.mrb[0].mxu0
        %v1398 = vpop.f32.mrb[0].mxu0
        %v1399 = vadd.f32 %v1159, %v1398
        %v1400 = vpop.f32.mrb[0].mxu0
        %1401 = vmatprep.mubr.bf16.mxu0 %v1087
        %1402 = vmatmul.mubr.bf16.gmra.mrb[0].mxu0 %v1086
        %v1403 = vpop.f32.mrb[0].mxu0
        %v1404 = vadd.f32 %v1159, %v1403
        %v1405 = vpop.f32.mrb[0].mxu0
        %v1406 = vpop.f32.mrb[0].mxu0
        %v1407 = vadd.f32 %v1159, %v1406
        %v1408 = vpop.f32.mrb[0].mxu0
        %1409 = vmatprep.mubr.bf16.mxu0 %v1089
        %1410 = vmatmul.mubr.bf16.gmra.mrb[0].mxu0 %v1088
        %v1411 = vpop.f32.mrb[0].mxu0
        %v1412 = vadd.f32 %v1159, %v1411
        %v1413 = vpop.f32.mrb[0].mxu0
        %v1414 = vpop.f32.mrb[0].mxu0
        %v1415 = vadd.f32 %v1159, %v1414
        %v1416 = vpop.f32.mrb[0].mxu0
        %1417 = vmatprep.mubr.bf16.mxu0 %v1091
        %1418 = vmatmul.mubr.bf16.gmra.mrb[0].mxu0 %v1090
        %v1419 = vpop.f32.mrb[0].mxu0
        %v1420 = vadd.f32 %v1159, %v1419
        %v1421 = vpop.f32.mrb[0].mxu0
        %v1422 = vpop.f32.mrb[0].mxu0
        %v1423 = vadd.f32 %v1159, %v1422
        %v1424 = vpop.f32.mrb[0].mxu0
        %1425 = vmatprep.mubr.bf16.mxu0 %v1093
        %1426 = vmatmul.mubr.bf16.gmra.mrb[0].mxu0 %v1092
        %v1427 = vpop.f32.mrb[0].mxu0
        %v1428 = vadd.f32 %v1159, %v1427
        %v1429 = vpop.f32.mrb[0].mxu0
        %v1430 = vpop.f32.mrb[0].mxu0
        %v1431 = vadd.f32 %v1159, %v1430
        %v1432 = vpop.f32.mrb[0].mxu0
        %1433 = vmatprep.mubr.bf16.mxu0 %v1095
        %1434 = vmatmul.mubr.bf16.gmra.mrb[0].mxu0 %v1094
        %v1435 = vpop.f32.mrb[0].mxu0
        %v1436 = vadd.f32 %v1159, %v1435
        %v1437 = vpop.f32.mrb[0].mxu0
        %v1438 = vpop.f32.mrb[0].mxu0
        %v1439 = vadd.f32 %v1159, %v1438
        %v1440 = vpop.f32.mrb[0].mxu0
        %1441 = vmatprep.mubr.bf16.mxu0 %v1097
        %1442 = vmatmul.mubr.bf16.gmra.mrb[0].mxu0 %v1096
        %v1443 = vpop.f32.mrb[0].mxu0
        %v1444 = vadd.f32 %v1159, %v1443
        %v1445 = vpop.f32.mrb[0].mxu0
        %v1446 = vpop.f32.mrb[0].mxu0
        %v1447 = vadd.f32 %v1159, %v1446
        %v1448 = vpop.f32.mrb[0].mxu0
        %1449 = vmatprep.mubr.bf16.mxu0 %v1099
        %1450 = vmatmul.mubr.bf16.gmra.mrb[0].mxu0 %v1098
        %v1451 = vpop.f32.mrb[0].mxu0
        %v1452 = vadd.f32 %v1159, %v1451
        %v1453 = vpop.f32.mrb[0].mxu0
        %v1454 = vpop.f32.mrb[0].mxu0
        %v1455 = vadd.f32 %v1159, %v1454
        %v1456 = vpop.f32.mrb[0].mxu0
        %1457 = vmatprep.mubr.bf16.mxu0 %v1101
        %1458 = vmatmul.mubr.bf16.gmra.mrb[0].mxu0 %v1100
        %v1459 = vpop.f32.mrb[0].mxu0
        %v1460 = vadd.f32 %v1159, %v1459
        %v1461 = vpop.f32.mrb[0].mxu0
        %v1462 = vpop.f32.mrb[0].mxu0
        %v1463 = vadd.f32 %v1159, %v1462
        %v1464 = vpop.f32.mrb[0].mxu0
        %1465 = vmatprep.mubr.bf16.mxu0 %v1103
        %1466 = vmatmul.mubr.bf16.gmra.mrb[0].mxu0 %v1102
        %v1467 = vpop.f32.mrb[0].mxu0
        %v1468 = vadd.f32 %v1159, %v1467
        %v1469 = vpop.f32.mrb[0].mxu0
        %v1470 = vpop.f32.mrb[0].mxu0
        %v1471 = vadd.f32 %v1159, %v1470
        %v1472 = vpop.f32.mrb[0].mxu0
        %1473 = vmatprep.mubr.bf16.mxu0 %v1105
        %1474 = vmatmul.mubr.bf16.gmra.mrb[0].mxu0 %v1104
        %v1475 = vpop.f32.mrb[0].mxu0
        %v1476 = vadd.f32 %v1159, %v1475
        %v1477 = vpop.f32.mrb[0].mxu0
        %v1478 = vpop.f32.mrb[0].mxu0
        %v1479 = vadd.f32 %v1159, %v1478
        %v1480 = vpop.f32.mrb[0].mxu0
        %1481 = vmatprep.mubr.bf16.mxu0 %v1107
        %1482 = vmatmul.mubr.bf16.gmra.mrb[0].mxu0 %v1106
        %v1483 = vpop.f32.mrb[0].mxu0
        %v1484 = vadd.f32 %v1159, %v1483
        %v1485 = vpop.f32.mrb[0].mxu0
        %v1486 = vpop.f32.mrb[0].mxu0
        %v1487 = vadd.f32 %v1159, %v1486
        %v1488 = vpop.f32.mrb[0].mxu0
        %1489 = vmatprep.mubr.bf16.mxu0 %v1109
        %1490 = vmatmul.mubr.bf16.gmra.mrb[0].mxu0 %v1108
        %v1491 = vpop.f32.mrb[0].mxu0
        %v1492 = vadd.f32 %v1159, %v1491
        %v1493 = vpop.f32.mrb[0].mxu0
        %v1494 = vpop.f32.mrb[0].mxu0
        %v1495 = vadd.f32 %v1159, %v1494
        %v1496 = vpop.f32.mrb[0].mxu0
        %1497 = vmatprep.mubr.bf16.mxu0 %v1111
        %1498 = vmatmul.mubr.bf16.gmra.mrb[0].mxu0 %v1110
        %v1499 = vpop.f32.mrb[0].mxu0
        %v1500 = vadd.f32 %v1159, %v1499
        %v1501 = vpop.f32.mrb[0].mxu0
        %v1502 = vpop.f32.mrb[0].mxu0
        %v1503 = vadd.f32 %v1159, %v1502
        %v1504 = vpop.f32.mrb[0].mxu0
        %1505 = vmatprep.mubr.bf16.mxu0 %v1113
        %1506 = vmatmul.mubr.bf16.gmra.mrb[0].mxu0 %v1112
        %v1507 = vpop.f32.mrb[0].mxu0
        %v1508 = vadd.f32 %v1159, %v1507
        %v1509 = vpop.f32.mrb[0].mxu0
        %v1510 = vpop.f32.mrb[0].mxu0
        %v1511 = vadd.f32 %v1159, %v1510
        %v1512 = vpop.f32.mrb[0].mxu0
        %1513 = vmatprep.mubr.bf16.mxu0 %v1115
        %1514 = vmatmul.mubr.bf16.gmra.mrb[0].mxu0 %v1114
        %v1515 = vpop.f32.mrb[0].mxu0
        %v1516 = vadd.f32 %v1159, %v1515
        %v1517 = vpop.f32.mrb[0].mxu0
        %v1518 = vpop.f32.mrb[0].mxu0
        %v1519 = vadd.f32 %v1159, %v1518
        %v1520 = vpop.f32.mrb[0].mxu0
        %1521 = vmatprep.mubr.bf16.mxu0 %v1117
        %1522 = vmatmul.mubr.bf16.gmra.mrb[0].mxu0 %v1116
        %v1523 = vpop.f32.mrb[0].mxu0
        %v1524 = vadd.f32 %v1159, %v1523
        %v1525 = vpop.f32.mrb[0].mxu0
        %v1526 = vpop.f32.mrb[0].mxu0
        %v1527 = vadd.f32 %v1159, %v1526
        %v1528 = vpop.f32.mrb[0].mxu0
        %1529 = vmatprep.mubr.bf16.mxu0 %v1119
        %1530 = vmatmul.mubr.bf16.gmra.mrb[0].mxu0 %v1118
        %v1531 = vpop.f32.mrb[0].mxu0
        %v1532 = vadd.f32 %v1159, %v1531
        %v1533 = vpop.f32.mrb[0].mxu0
        %v1534 = vpop.f32.mrb[0].mxu0
        %v1535 = vadd.f32 %v1159, %v1534
        %v1536 = vpop.f32.mrb[0].mxu0
        %1537 = vmatprep.mubr.bf16.mxu0 %v1121
        %1538 = vmatmul.mubr.bf16.gmra.mrb[0].mxu0 %v1120
        %v1539 = vpop.f32.mrb[0].mxu0
        %v1540 = vadd.f32 %v1159, %v1539
        %v1541 = vpop.f32.mrb[0].mxu0
        %v1542 = vpop.f32.mrb[0].mxu0
        %v1543 = vadd.f32 %v1159, %v1542
        %v1544 = vpop.f32.mrb[0].mxu0
        %1545 = vdwg.mxu0
        %1546 = vst [vmem:[%s364] sm:$0xff] %v1292
        %1547 = vst [vmem:[%s364 + $0x8] sm:$0xff] %v1295
        %1548 = vst [vmem:[%s364 + $0x10] sm:$0xff] %v1300
        %1549 = vst [vmem:[%s364 + $0x18] sm:$0xff] %v1303
        %1550 = vst [vmem:[%s364 + $0x20] sm:$0xff] %v1308
        %1551 = vst [vmem:[%s364 + $0x28] sm:$0xff] %v1311
        %1552 = vst [vmem:[%s364 + $0x30] sm:$0xff] %v1316
        %1553 = vst [vmem:[%s364 + $0x38] sm:$0xff] %v1319
        %1554 = vst [vmem:[%s364 + $0x40] sm:$0xff] %v1324
        %1555 = vst [vmem:[%s364 + $0x48] sm:$0xff] %v1327
        %1556 = vst [vmem:[%s364 + $0x50] sm:$0xff] %v1332
        %1557 = vst [vmem:[%s364 + $0x58] sm:$0xff] %v1335
        %1558 = vst [vmem:[%s364 + $0x60] sm:$0xff] %v1340
        %1559 = vst [vmem:[%s364 + $0x68] sm:$0xff] %v1343
        %1560 = vst [vmem:[%s364 + $0x70] sm:$0xff] %v1348
        %1561 = vst [vmem:[%s364 + $0x78] sm:$0xff] %v1351
        %1562 = vst [vmem:[%s364 + $0x80] sm:$0xff] %v1356
        %1563 = vst [vmem:[%s364 + $0x88] sm:$0xff] %v1359
        %1564 = vst [vmem:[%s364 + $0x90] sm:$0xff] %v1364
        %1565 = vst [vmem:[%s364 + $0x98] sm:$0xff] %v1367
        %1566 = vst [vmem:[%s364 + $0xa0] sm:$0xff] %v1372
        %1567 = vst [vmem:[%s364 + $0xa8] sm:$0xff] %v1375
        %1568 = vst [vmem:[%s364 + $0xb0] sm:$0xff] %v1380
        %1569 = vst [vmem:[%s364 + $0xb8] sm:$0xff] %v1383
        %1570 = vst [vmem:[%s364 + $0xc0] sm:$0xff] %v1388
        %1571 = vst [vmem:[%s364 + $0xc8] sm:$0xff] %v1391
        %1572 = vst [vmem:[%s364 + $0xd0] sm:$0xff] %v1396
        %1573 = vst [vmem:[%s364 + $0xd8] sm:$0xff] %v1399
        %1574 = vst [vmem:[%s364 + $0xe0] sm:$0xff] %v1404
        %1575 = vst [vmem:[%s364 + $0xe8] sm:$0xff] %v1407
        %1576 = vst [vmem:[%s364 + $0xf0] sm:$0xff] %v1412
        %1577 = vst [vmem:[%s364 + $0xf8] sm:$0xff] %v1415
        %1578 = vst [vmem:[%s364 + $0x100] sm:$0xff] %v1420
        %1579 = vst [vmem:[%s364 + $0x108] sm:$0xff] %v1423
        %1580 = vst [vmem:[%s364 + $0x110] sm:$0xff] %v1428
        %1581 = vst [vmem:[%s364 + $0x118] sm:$0xff] %v1431
        %1582 = vst [vmem:[%s364 + $0x120] sm:$0xff] %v1436
        %1583 = vst [vmem:[%s364 + $0x128] sm:$0xff] %v1439
        %1584 = vst [vmem:[%s364 + $0x130] sm:$0xff] %v1444
        %1585 = vst [vmem:[%s364 + $0x138] sm:$0xff] %v1447
        %1586 = vst [vmem:[%s364 + $0x140] sm:$0xff] %v1452
        %1587 = vst [vmem:[%s364 + $0x148] sm:$0xff] %v1455
        %1588 = vst [vmem:[%s364 + $0x150] sm:$0xff] %v1460
        %1589 = vst [vmem:[%s364 + $0x158] sm:$0xff] %v1463
        %1590 = vst [vmem:[%s364 + $0x160] sm:$0xff] %v1468
        %1591 = vst [vmem:[%s364 + $0x168] sm:$0xff] %v1471
        %1592 = vst [vmem:[%s364 + $0x170] sm:$0xff] %v1476
        %1593 = vst [vmem:[%s364 + $0x178] sm:$0xff] %v1479
        %1594 = vst [vmem:[%s364 + $0x180] sm:$0xff] %v1484
        %1595 = vst [vmem:[%s364 + $0x188] sm:$0xff] %v1487
        %1596 = vst [vmem:[%s364 + $0x190] sm:$0xff] %v1492
        %1597 = vst [vmem:[%s364 + $0x198] sm:$0xff] %v1495
        %1598 = vst [vmem:[%s364 + $0x1a0] sm:$0xff] %v1500
        %1599 = vst [vmem:[%s364 + $0x1a8] sm:$0xff] %v1503
        %1600 = vst [vmem:[%s364 + $0x1b0] sm:$0xff] %v1508
        %1601 = vst [vmem:[%s364 + $0x1b8] sm:$0xff] %v1511
        %1602 = vst [vmem:[%s364 + $0x1c0] sm:$0xff] %v1516
        %1603 = vst [vmem:[%s364 + $0x1c8] sm:$0xff] %v1519
        %1604 = vst [vmem:[%s364 + $0x1d0] sm:$0xff] %v1524
        %1605 = vst [vmem:[%s364 + $0x1d8] sm:$0xff] %v1527
        %1606 = vst [vmem:[%s364 + $0x1e0] sm:$0xff] %v1532
        %1607 = vst [vmem:[%s364 + $0x1e8] sm:$0xff] %v1535
        %1608 = vst [vmem:[%s364 + $0x1f0] sm:$0xff] %v1540
        %1609 = vst [vmem:[%s364 + $0x1f8] sm:$0xff] %v1543
        %s1610 = sand.u32 %s188, 1
        %s1611 = scalar_lea.sflag [#allocation5], %s1610
        %s1612 = sand.u32 %s188, 1
        %s1613 = smul.addr %s1612, 512
        %s1614 = scalar_lea.vmem [#allocation14], %s1613
        // Predicated region
        $region73: #{_time_derivative_call.1} parent=47 // pred_check
          %p1615 = pneg %p198
        $region74: #{_time_derivative_call.1} parent=47 // pred_check_branch
          %1617 = sbr.rel (%p1615) target = $region76
        $region75: #{_time_derivative_call.1} parent=47 // pred_region
          %s1618 = smul.u32 64, %s28
          %s1620 = ssub.s32 8192, 8192
          %1621 = vsyncadd %s1611, %s1620
          %s1622 = smul.addr %s1618, 128
          %s1623 = scalar_lea.hbm %s7, %s1622
          %s1624 = sshll.u32 %s1614, 4
          %s1625 = int_to_ptr.vmem [resolvable:$true] %s1624
          %1630 = dma.vmem_to_hbm [thread:$0]  %s1625, 8192, %s1623, %s1611, 128, 128, 8
        $region76: #{_time_derivative_call.1} parent=47 // pred_fallthru
          _
      $region48: #{_time_derivative_call.1} parent=5 // pred_fallthru
        _
      %p1631 = scmp.le.s32.totalorder 2, %s23
      // Predicated region
      $region77: #{_time_derivative_call.1} parent=5 // pred_check
        %p1632 = pneg %p1631
      $region78: #{_time_derivative_call.1} parent=5 // pred_check_branch
        %1634 = sbr.rel (%p1632) target = $region80
      $region79: #{_time_derivative_call.1} parent=5 // pred_region
        %s1635 = ssub.s32 %s23, 2
        // Predicated region
        $region81: #{_time_derivative_call.1} parent=79 // pred_check
          %p1636 = pneg %p204
        $region82: #{_time_derivative_call.1} parent=79 // pred_check_branch
          %1638 = sbr.rel (%p1636) target = $region84
        $region83: #{_time_derivative_call.1} parent=79 // pred_region
          %s1639 = sand.u32 %s189, 1
          %s1640 = scalar_lea.sflag [#allocation5], %s1639
          %s1641 = sand.u32 %s189, 1
          %s1642 = smul.addr %s1641, 512
          %s1643 = scalar_lea.vmem [#allocation14], %s1642
          %1644 = dma.done %s1640, 8192
        $region84: #{_time_derivative_call.1} parent=79 // pred_fallthru
          _
      $region80: #{_time_derivative_call.1} parent=5 // pred_fallthru
        _
    $region6: #{_time_derivative_call.1} parent=1 // loop_footer
      %s27 = sadd.s32 1, %s23
    $region7: #{_time_derivative_call.1} parent=1 // loop_footer_branch
      %22 = sbr.rel target = $region3
    $region8: #{_time_derivative_call.1} parent=1 // loop_exit
      _
    %1645 = vsyncpa [#allocation4], 1
    %s1646 = scalar_lea.sflag [#allocation4], 1
    %1647 = vsyncpa %s1646, 1
    %1648 = vsyncpa [#allocation7], 1
    %1649 = vsyncpa [#allocation10], 1
    %1650 = vsyncpa [#allocation13], 1
    %1651 = vsyncpa [#allocation5], 1
    %s1652 = scalar_lea.sflag [#allocation5], 1
    %1653 = vsyncpa %s1652, 1

// kernel: _time_derivative_call.1
$region0: #{_time_derivative_call.1}
  #allocation0 [shape = 'u32[]', space=smem, size = 0x4, offset = 0x4, fixed_abs, tag = 'smem constant byte address 0x4 - core index']
  #allocation1 [shape = 'u32[144,128]{1,0:T(1,128)}', space=vmem, size = 0x12000, scoped, tag = 'internal scratch']
  #allocation2 [shape = 'f32[1]{0:T(128)S(6)}', space=smem, size = 0x200, scoped, tag = 'scoped memory for _time_derivative_call.1']
  %s0 = inlined_call_operand.<no memory space> [shape: f32[1], index: 0, kind: input, shape index: {}]
  %s1 = inlined_call_operand.hbm [shape: f32[4096,128], index: 1, kind: input, shape index: {}]
  %s2 = inlined_call_operand.hbm [shape: bf16[128,256], index: 2, kind: input, shape index: {}]
  %s3 = inlined_call_operand.hbm [shape: f32[1,256], index: 3, kind: input, shape index: {}]
  %s4 = inlined_call_operand.hbm [shape: f32[1,256], index: 4, kind: input, shape index: {}]
  %s5 = inlined_call_operand.hbm [shape: bf16[256,128], index: 5, kind: input, shape index: {}]
  %s6 = inlined_call_operand.hbm [shape: f32[1,128], index: 6, kind: input, shape index: {}]
  %s7 = inlined_call_operand.hbm [shape: f32[4096,128], index: 7, kind: output, shape index: {}]
  %s8 = sld [smem:[#allocation0]]
  $region85: #{_time_derivative_call.1} parent=0
    _
  %s10 = ssub.s32 1, %s8
  %s11 = scalar_select 0, %s10, %s8
  %12 = sst [smem:[#allocation2]] %s0
  $region1: #{_time_derivative_call.1} parent=0
    #allocation3 [shape = 'u8[524288]{0}', space=vmem, size = 0x80000, scoped, tag = 'input window, operand 1']
    #allocation4 [shape = 's32[2]{0}', space=sflag, size = 0x8, scoped, tag = 'scoped memory for _time_derivative_call.1']
    #allocation5 [shape = 's32[2]{0}', space=sflag, size = 0x8, scoped, tag = 'scoped memory for _time_derivative_call.1']
    #allocation6 [shape = 'u8[65536]{0}', space=vmem, size = 0x10000, scoped, tag = 'input window, operand 2, single buffered']
    #allocation7 [shape = 's32[1]{0}', space=sflag, size = 0x4, scoped, tag = 'scoped memory for _time_derivative_call.1']
    #allocation8 [shape = 'u8[1024]{0}', space=vmem, size = 0x400, scoped, tag = 'input window, operand 3, single buffered']
    #allocation9 [shape = 'u8[1024]{0}', space=vmem, size = 0x400, scoped, tag = 'input window, operand 4, single buffered']
    #allocation10 [shape = 's32[1]{0}', space=sflag, size = 0x4, scoped, tag = 'scoped memory for _time_derivative_call.1']
    #allocation11 [shape = 'u8[65536]{0}', space=vmem, size = 0x10000, scoped, tag = 'input window, operand 5, single buffered']
    #allocation12 [shape = 'u8[512]{0}', space=vmem, size = 0x400, scoped, tag = 'input window, operand 6, single buffered']
    #allocation13 [shape = 's32[1]{0}', space=sflag, size = 0x4, scoped, tag = 'scoped memory for _time_derivative_call.1']
    #allocation14 [shape = 'u8[524288]{0}', space=vmem, size = 0x80000, scoped, tag = 'output window, operand 0']
    %13 = vsyncpa [#allocation4], 0
    %s14 = scalar_lea.sflag [#allocation4], 1
    %15 = vsyncpa %s14, 0
    %16 = vsyncpa [#allocation7], 0
    %17 = vsyncpa [#allocation10], 0
    %18 = vsyncpa [#allocation13], 0
    %19 = vsyncpa [#allocation5], 0
    %s20 = scalar_lea.sflag [#allocation5], 1
    %21 = vsyncpa %s20, 0
    loop: start=0, step=1, limit=10
    $region2: #{_time_derivative_call.1} parent=1 // loop_pre_header
      _
    $region3: #{_time_derivative_call.1} parent=1 // loop_header
      %s23 = sphi 0, %s27
      %p24 = scmp.ge.s32.totalorder %s23, 10
      %s31 = sphi 0, %s31
      %s33 = sphi 0, %s31
      %s34 = sphi 0, %s33
      %s48 = sphi 0, %s34
      %s54 = sphi 0, %s56
      %s57 = sphi 0, %s54
      %s58 = sphi 0, %s57
      %s74 = sphi 0, %s58
      %s78 = sphi 0, %s78
      %s80 = sphi 0, %s78
      %s81 = sphi 0, %s80
      %s95 = sphi 0, %s81
      %s99 = sphi 0, %s99
      %s101 = sphi 0, %s99
      %s102 = sphi 0, %s101
      %s116 = sphi 0, %s102
      %s120 = sphi 0, %s120
      %s122 = sphi 0, %s120
      %s123 = sphi 0, %s122
      %s137 = sphi 0, %s123
      %s141 = sphi 0, %s141
      %s143 = sphi 0, %s141
      %s144 = sphi 0, %s143
      %s158 = sphi 0, %s144
      %s162 = sphi 0, %s162
      %s164 = sphi 0, %s162
      %s165 = sphi 0, %s164
      %s179 = sphi 0, %s165
      %s185 = sphi 0, %s187
      %s188 = sphi 0, %s185
      %s189 = sphi 0, %s188
      %s205 = sphi 0, %s189
    $region4: #{_time_derivative_call.1} parent=1 // loop_header_branch
      %26 = sbr.rel (%p24) target = $region8
    $region5: #{_time_derivative_call.1} parent=1 // loop_body
      %s28 = ssub.s32 %s23, 1
      %s29 = ssub.s32 %s23, 2
      %s30 = sadd.s32 %s23, 1
      %s32 = sadd.s32 %s31, 1
      %p35 = scmp.eq.s32.totalorder %s23, 7
      %p36 = scmp.ne.s32.totalorder %s31, %s33
      %p37 = scmp.eq.s32.totalorder %s23, 0
      %p38 = por %p36, %p37
      %p39 = scmp.ne.s32.totalorder %s31, %s33
      %p40 = scmp.eq.s32.totalorder %s28, 7
      %p41 = por %p39, %p40
      %p42 = scmp.ne.s32.totalorder %s33, %s34
      %p43 = scmp.eq.s32.totalorder %s28, 0
      %p44 = por %p42, %p43
      %p45 = scmp.ne.s32.totalorder %s33, %s34
      %p46 = scmp.eq.s32.totalorder %s29, 7
      %p47 = por %p45, %p46
      %p49 = scmp.ne.s32.totalorder %s34, %s48
      %p50 = scmp.eq.s32.totalorder %s29, 0
      %p51 = por %p49, %p50
      %s52 = ssub.s32 %s23, %s30
      %p53 = scmp.eq.s32.totalorder %s52, 0
      %s55 = sadd.s32 %s54, 1
      %s56 = scalar_select %p53, %s54, %s55
      %p59 = pneg %p53
      %p60 = scmp.eq.s32.totalorder %s23, 7
      %p61 = por %p59, %p60
      %p62 = scmp.ne.s32.totalorder %s54, %s57
      %p63 = scmp.eq.s32.totalorder %s23, 0
      %p64 = por %p62, %p63
      %p65 = scmp.ne.s32.totalorder %s54, %s57
      %p66 = scmp.eq.s32.totalorder %s28, 7
      %p67 = por %p65, %p66
      %p68 = scmp.ne.s32.totalorder %s57, %s58
      %p69 = scmp.eq.s32.totalorder %s28, 0
      %p70 = por %p68, %p69
      %p71 = scmp.ne.s32.totalorder %s57, %s58
      %p72 = scmp.eq.s32.totalorder %s29, 7
      %p73 = por %p71, %p72
      %p75 = scmp.ne.s32.totalorder %s58, %s74
      %p76 = scmp.eq.s32.totalorder %s29, 0
      %p77 = por %p75, %p76
      %s79 = sadd.s32 %s78, 1
      %p82 = scmp.eq.s32.totalorder %s23, 7
      %p83 = scmp.ne.s32.totalorder %s78, %s80
      %p84 = scmp.eq.s32.totalorder %s23, 0
      %p85 = por %p83, %p84
      %p86 = scmp.ne.s32.totalorder %s78, %s80
      %p87 = scmp.eq.s32.totalorder %s28, 7
      %p88 = por %p86, %p87
      %p89 = scmp.ne.s32.totalorder %s80, %s81
      %p90 = scmp.eq.s32.totalorder %s28, 0
      %p91 = por %p89, %p90
      %p92 = scmp.ne.s32.totalorder %s80, %s81
      %p93 = scmp.eq.s32.totalorder %s29, 7
      %p94 = por %p92, %p93
      %p96 = scmp.ne.s32.totalorder %s81, %s95
      %p97 = scmp.eq.s32.totalorder %s29, 0
      %p98 = por %p96, %p97
      %s100 = sadd.s32 %s99, 1
      %p103 = scmp.eq.s32.totalorder %s23, 7
      %p104 = scmp.ne.s32.totalorder %s99, %s101
      %p105 = scmp.eq.s32.totalorder %s23, 0
      %p106 = por %p104, %p105
      %p107 = scmp.ne.s32.totalorder %s99, %s101
      %p108 = scmp.eq.s32.totalorder %s28, 7
      %p109 = por %p107, %p108
      %p110 = scmp.ne.s32.totalorder %s101, %s102
      %p111 = scmp.eq.s32.totalorder %s28, 0
      %p112 = por %p110, %p111
      %p113 = scmp.ne.s32.totalorder %s101, %s102
      %p114 = scmp.eq.s32.totalorder %s29, 7
      %p115 = por %p113, %p114
      %p117 = scmp.ne.s32.totalorder %s102, %s116
      %p118 = scmp.eq.s32.totalorder %s29, 0
      %p119 = por %p117, %p118
      %s121 = sadd.s32 %s120, 1
      %p124 = scmp.eq.s32.totalorder %s23, 7
      %p125 = scmp.ne.s32.totalorder %s120, %s122
      %p126 = scmp.eq.s32.totalorder %s23, 0
      %p127 = por %p125, %p126
      %p128 = scmp.ne.s32.totalorder %s120, %s122
      %p129 = scmp.eq.s32.totalorder %s28, 7
      %p130 = por %p128, %p129
      %p131 = scmp.ne.s32.totalorder %s122, %s123
      %p132 = scmp.eq.s32.totalorder %s28, 0
      %p133 = por %p131, %p132
      %p134 = scmp.ne.s32.totalorder %s122, %s123
      %p135 = scmp.eq.s32.totalorder %s29, 7
      %p136 = por %p134, %p135
      %p138 = scmp.ne.s32.totalorder %s123, %s137
      %p139 = scmp.eq.s32.totalorder %s29, 0
      %p140 = por %p138, %p139
      %s142 = sadd.s32 %s141, 1
      %p145 = scmp.eq.s32.totalorder %s23, 7
      %p146 = scmp.ne.s32.totalorder %s141, %s143
      %p147 = scmp.eq.s32.totalorder %s23, 0
      %p148 = por %p146, %p147
      %p149 = scmp.ne.s32.totalorder %s141, %s143
      %p150 = scmp.eq.s32.totalorder %s28, 7
      %p151 = por %p149, %p150
      %p152 = scmp.ne.s32.totalorder %s143, %s144
      %p153 = scmp.eq.s32.totalorder %s28, 0
      %p154 = por %p152, %p153
      %p155 = scmp.ne.s32.totalorder %s143, %s144
      %p156 = scmp.eq.s32.totalorder %s29, 7
      %p157 = por %p155, %p156
      %p159 = scmp.ne.s32.totalorder %s144, %s158
      %p160 = scmp.eq.s32.totalorder %s29, 0
      %p161 = por %p159, %p160
      %s163 = sadd.s32 %s162, 1
      %p166 = scmp.eq.s32.totalorder %s23, 7
      %p167 = scmp.ne.s32.totalorder %s162, %s164
      %p168 = scmp.eq.s32.totalorder %s23, 0
      %p169 = por %p167, %p168
      %p170 = scmp.ne.s32.totalorder %s162, %s164
      %p171 = scmp.eq.s32.totalorder %s28, 7
      %p172 = por %p170, %p171
      %p173 = scmp.ne.s32.totalorder %s164, %s165
      %p174 = scmp.eq.s32.totalorder %s28, 0
      %p175 = por %p173, %p174
      %p176 = scmp.ne.s32.totalorder %s164, %s165
      %p177 = scmp.eq.s32.totalorder %s29, 7
      %p178 = por %p176, %p177
      %p180 = scmp.ne.s32.totalorder %s165, %s179
      %p181 = scmp.eq.s32.totalorder %s29, 0
      %p182 = por %p180, %p181
      %s183 = ssub.s32 %s23, %s30
      %p184 = scmp.eq.s32.totalorder %s183, 0
      %s186 = sadd.s32 %s185, 1
      %s187 = scalar_select %p184, %s185, %s186
      %p190 = pneg %p184
      %p191 = scmp.eq.s32.totalorder %s23, 7
      %p192 = por %p190, %p191
      %p193 = scmp.ne.s32.totalorder %s185, %s188
      %p194 = scmp.eq.s32.totalorder %s23, 0
      %p195 = por %p193, %p194
      %p196 = scmp.ne.s32.totalorder %s185, %s188
      %p197 = scmp.eq.s32.totalorder %s28, 7
      %p198 = por %p196, %p197
      %p199 = scmp.ne.s32.totalorder %s188, %s189
      %p200 = scmp.eq.s32.totalorder %s28, 0
      %p201 = por %p199, %p200
      %p202 = scmp.ne.s32.totalorder %s188, %s189
      %p203 = scmp.eq.s32.totalorder %s29, 7
      %p204 = por %p202, %p203
      %p206 = scmp.ne.s32.totalorder %s189, %s205
      %p207 = scmp.eq.s32.totalorder %s29, 0
      %p208 = por %p206, %p207
      %p209 = scmp.le.s32.totalorder 1, %s23
      %p210 = scmp.lt.s32.totalorder %s23, 9
      %p211 = pnand %p209, %p210
      %p212 = pneg %p211
      // Predicated region
      $region9: #{_time_derivative_call.1} parent=5 // pred_check
        _
      $region10: #{_time_derivative_call.1} parent=5 // pred_check_branch
        %214 = sbr.rel (%p211) target = $region12
      $region11: #{_time_derivative_call.1} parent=5 // pred_region
        %s215 = ssub.s32 %s23, 1
        // Predicated region
        $region13: #{_time_derivative_call.1} parent=11 // pred_check
          %p216 = pneg %p44
        $region14: #{_time_derivative_call.1} parent=11 // pred_check_branch
          %218 = sbr.rel (%p216) target = $region16
        $region15: #{_time_derivative_call.1} parent=11 // pred_region
          _
        $region16: #{_time_derivative_call.1} parent=11 // pred_fallthru
          _
        // Predicated region
        $region17: #{_time_derivative_call.1} parent=11 // pred_check
          %p219 = pneg %p91
        $region18: #{_time_derivative_call.1} parent=11 // pred_check_branch
          %221 = sbr.rel (%p219) target = $region20
        $region19: #{_time_derivative_call.1} parent=11 // pred_region
          %s223 = ssub.s32 2048, 2048
          %224 = vsyncadd [#allocation7], %s223
          %s225 = sshll.u32 [#allocation6], 4
          %s226 = int_to_ptr.vmem [resolvable:$true] %s225
          %231 = dma.hbm_to_vmem [thread:$0]  %s2, 2048, %s226, [#allocation7], 128, 128, 8
        $region20: #{_time_derivative_call.1} parent=11 // pred_fallthru
          _
        // Predicated region
        $region21: #{_time_derivative_call.1} parent=11 // pred_check
          %p232 = pneg %p112
        $region22: #{_time_derivative_call.1} parent=11 // pred_check_branch
          %234 = sbr.rel (%p232) target = $region24
        $region23: #{_time_derivative_call.1} parent=11 // pred_region
          %s236 = ssub.s32 32, 32
          %237 = vsyncadd [#allocation7], %s236
          %s239 = sshll.u32 [#allocation8], 4
          %s240 = int_to_ptr.vmem [resolvable:$true] %s239
          %242 = dma.hbm_to_vmem [thread:$0]  %s3, 32, %s240, [#allocation7]
        $region24: #{_time_derivative_call.1} parent=11 // pred_fallthru
          _
        // Predicated region
        $region25: #{_time_derivative_call.1} parent=11 // pred_check
          %p243 = pneg %p133
        $region26: #{_time_derivative_call.1} parent=11 // pred_check_branch
          %245 = sbr.rel (%p243) target = $region28
        $region27: #{_time_derivative_call.1} parent=11 // pred_region
          %s247 = ssub.s32 32, 32
          %248 = vsyncadd [#allocation10], %s247
          %s250 = sshll.u32 [#allocation9], 4
          %s251 = int_to_ptr.vmem [resolvable:$true] %s250
          %253 = dma.hbm_to_vmem [thread:$0]  %s4, 32, %s251, [#allocation10]
        $region28: #{_time_derivative_call.1} parent=11 // pred_fallthru
          _
        // Predicated region
        $region29: #{_time_derivative_call.1} parent=11 // pred_check
          %p254 = pneg %p154
        $region30: #{_time_derivative_call.1} parent=11 // pred_check_branch
          %256 = sbr.rel (%p254) target = $region32
        $region31: #{_time_derivative_call.1} parent=11 // pred_region
          %s258 = ssub.s32 2048, 2048
          %259 = vsyncadd [#allocation10], %s258
          %s260 = sshll.u32 [#allocation11], 4
          %s261 = int_to_ptr.vmem [resolvable:$true] %s260
          %266 = dma.hbm_to_vmem [thread:$0]  %s5, 2048, %s261, [#allocation10], 64, 64, 4
        $region32: #{_time_derivative_call.1} parent=11 // pred_fallthru
          _
        // Predicated region
        $region33: #{_time_derivative_call.1} parent=11 // pred_check
          %p267 = pneg %p175
        $region34: #{_time_derivative_call.1} parent=11 // pred_check_branch
          %269 = sbr.rel (%p267) target = $region36
        $region35: #{_time_derivative_call.1} parent=11 // pred_region
          %s271 = ssub.s32 16, 16
          %272 = vsyncadd [#allocation13], %s271
          %s274 = sshll.u32 [#allocation12], 4
          %s275 = int_to_ptr.vmem [resolvable:$true] %s274
          %277 = dma.hbm_to_vmem [thread:$0]  %s6, 16, %s275, [#allocation13]
        $region36: #{_time_derivative_call.1} parent=11 // pred_fallthru
          _
      $region12: #{_time_derivative_call.1} parent=5 // pred_fallthru
        _
      %p278 = scmp.lt.s32.totalorder %s23, 8
      // Predicated region
      $region37: #{_time_derivative_call.1} parent=5 // pred_check
        %p279 = pneg %p278
      $region38: #{_time_derivative_call.1} parent=5 // pred_check_branch
        %281 = sbr.rel (%p279) target = $region40
      $region39: #{_time_derivative_call.1} parent=5 // pred_region
        // Predicated region
        $region41: #{_time_derivative_call.1} parent=39 // pred_check
          %p282 = pneg %p64
        $region42: #{_time_derivative_call.1} parent=39 // pred_check_branch
          %284 = sbr.rel (%p282) target = $region44
        $region43: #{_time_derivative_call.1} parent=39 // pred_region
          %s285 = sand.u32 %s54, 1
          %s286 = scalar_lea.sflag [#allocation4], %s285
          %s287 = sand.u32 %s54, 1
          %s288 = smul.addr %s287, 512
          %s289 = scalar_lea.vmem [#allocation3], %s288
          %s290 = smul.u32 64, %s23
          %s292 = ssub.s32 8192, 8192
          %293 = vsyncadd %s286, %s292
          %s294 = smul.addr %s290, 128
          %s295 = scalar_lea.hbm %s1, %s294
          %s296 = sshll.u32 %s289, 4
          %s297 = int_to_ptr.vmem [resolvable:$true] %s296
          %302 = dma.hbm_to_vmem [thread:$0]  %s295, 8192, %s297, %s286, 128, 128, 8
        $region44: #{_time_derivative_call.1} parent=39 // pred_fallthru
          _
      $region40: #{_time_derivative_call.1} parent=5 // pred_fallthru
        _
      %p303 = scmp.le.s32.totalorder 1, %s23
      %p304 = scmp.lt.s32.totalorder %s23, 9
      %p305 = pnand %p303, %p304
      %p306 = pneg %p305
      // Predicated region
      $region45: #{_time_derivative_call.1} parent=5 // pred_check
        _
      $region46: #{_time_derivative_call.1} parent=5 // pred_check_branch
        %308 = sbr.rel (%p305) target = $region48
      $region47: #{_time_derivative_call.1} parent=5 // pred_region
        %s309 = ssub.s32 %s23, 1
        %s310 = sand.u32 %s57, 1
        %s311 = scalar_lea.sflag [#allocation4], %s310
        %s312 = sand.u32 %s57, 1
        %s313 = smul.addr %s312, 512
        %s314 = scalar_lea.vmem [#allocation3], %s313
        // Predicated region
        $region49: #{_time_derivative_call.1} parent=47 // pred_check
          %p315 = pneg %p70
        $region50: #{_time_derivative_call.1} parent=47 // pred_check_branch
          %317 = sbr.rel (%p315) target = $region52
        $region51: #{_time_derivative_call.1} parent=47 // pred_region
          %318 = dma.done %s311, 8192
        $region52: #{_time_derivative_call.1} parent=47 // pred_fallthru
          _
        // Predicated region
        $region53: #{_time_derivative_call.1} parent=47 // pred_check
          %p319 = pneg %p91
        $region54: #{_time_derivative_call.1} parent=47 // pred_check_branch
          %321 = sbr.rel (%p319) target = $region56
        $region55: #{_time_derivative_call.1} parent=47 // pred_region
          %322 = dma.done [#allocation7], 2048
        $region56: #{_time_derivative_call.1} parent=47 // pred_fallthru
          _
        // Predicated region
        $region57: #{_time_derivative_call.1} parent=47 // pred_check
          %p323 = pneg %p112
        $region58: #{_time_derivative_call.1} parent=47 // pred_check_branch
          %325 = sbr.rel (%p323) target = $region60
        $region59: #{_time_derivative_call.1} parent=47 // pred_region
          %326 = dma.done [#allocation7], 32
        $region60: #{_time_derivative_call.1} parent=47 // pred_fallthru
          _
        // Predicated region
        $region61: #{_time_derivative_call.1} parent=47 // pred_check
          %p327 = pneg %p133
        $region62: #{_time_derivative_call.1} parent=47 // pred_check_branch
          %329 = sbr.rel (%p327) target = $region64
        $region63: #{_time_derivative_call.1} parent=47 // pred_region
          %330 = dma.done [#allocation10], 32
        $region64: #{_time_derivative_call.1} parent=47 // pred_fallthru
          _
        // Predicated region
        $region65: #{_time_derivative_call.1} parent=47 // pred_check
          %p331 = pneg %p154
        $region66: #{_time_derivative_call.1} parent=47 // pred_check_branch
          %333 = sbr.rel (%p331) target = $region68
        $region67: #{_time_derivative_call.1} parent=47 // pred_region
          %334 = dma.done [#allocation10], 2048
        $region68: #{_time_derivative_call.1} parent=47 // pred_fallthru
          _
        // Predicated region
        $region69: #{_time_derivative_call.1} parent=47 // pred_check
          %p335 = pneg %p175
        $region70: #{_time_derivative_call.1} parent=47 // pred_check_branch
          %337 = sbr.rel (%p335) target = $region72
        $region71: #{_time_derivative_call.1} parent=47 // pred_region
          %338 = dma.done [#allocation13], 16
        $region72: #{_time_derivative_call.1} parent=47 // pred_fallthru
          _
        %p339 = pneg %p44
        %p340 = pneg %p41
        %s341 = sand.u32 %s57, 1
        %s342 = scalar_lea.sflag [#allocation4], %s341
        %s343 = sand.u32 %s57, 1
        %s344 = smul.addr %s343, 512
        %s345 = scalar_lea.vmem [#allocation3], %s344
        %p346 = pneg %p70
        %p347 = pneg %p67
        %p348 = pneg %p91
        %p349 = pneg %p88
        %p350 = pneg %p112
        %p351 = pneg %p109
        %p352 = pneg %p133
        %p353 = pneg %p130
        %p354 = pneg %p154
        %p355 = pneg %p151
        %p356 = pneg %p175
        %p357 = pneg %p172
        %p358 = pneg %p201
        %p359 = pneg %p198
        %s360 = sand.u32 %s188, 1
        %s361 = scalar_lea.sflag [#allocation5], %s360
        %s362 = sand.u32 %s188, 1
        %s363 = smul.addr %s362, 512
        %s364 = scalar_lea.vmem [#allocation14], %s363
        %s365 = smul.u32 64, %s28
        %s366 = smul.u32 64, %s28
        %s368 = sld [smem:[#allocation2]]
        %v369 = vld [vmem:[%s314] sm:$0xff]
        %v370 = vld [vmem:[%s314 + $0x8] sm:$0xff]
        %v371 = vld [vmem:[%s314 + $0x10] sm:$0xff]
        %v372 = vld [vmem:[%s314 + $0x18] sm:$0xff]
        %v373 = vld [vmem:[%s314 + $0x20] sm:$0xff]
        %v374 = vld [vmem:[%s314 + $0x28] sm:$0xff]
        %v375 = vld [vmem:[%s314 + $0x30] sm:$0xff]
        %v376 = vld [vmem:[%s314 + $0x38] sm:$0xff]
        %v377 = vld [vmem:[%s314 + $0x40] sm:$0xff]
        %v378 = vld [vmem:[%s314 + $0x48] sm:$0xff]
        %v379 = vld [vmem:[%s314 + $0x50] sm:$0xff]
        %v380 = vld [vmem:[%s314 + $0x58] sm:$0xff]
        %v381 = vld [vmem:[%s314 + $0x60] sm:$0xff]
        %v382 = vld [vmem:[%s314 + $0x68] sm:$0xff]
        %v383 = vld [vmem:[%s314 + $0x70] sm:$0xff]
        %v384 = vld [vmem:[%s314 + $0x78] sm:$0xff]
        %v385 = vld [vmem:[%s314 + $0x80] sm:$0xff]
        %v386 = vld [vmem:[%s314 + $0x88] sm:$0xff]
        %v387 = vld [vmem:[%s314 + $0x90] sm:$0xff]
        %v388 = vld [vmem:[%s314 + $0x98] sm:$0xff]
        %v389 = vld [vmem:[%s314 + $0xa0] sm:$0xff]
        %v390 = vld [vmem:[%s314 + $0xa8] sm:$0xff]
        %v391 = vld [vmem:[%s314 + $0xb0] sm:$0xff]
        %v392 = vld [vmem:[%s314 + $0xb8] sm:$0xff]
        %v393 = vld [vmem:[%s314 + $0xc0] sm:$0xff]
        %v394 = vld [vmem:[%s314 + $0xc8] sm:$0xff]
        %v395 = vld [vmem:[%s314 + $0xd0] sm:$0xff]
        %v396 = vld [vmem:[%s314 + $0xd8] sm:$0xff]
        %v397 = vld [vmem:[%s314 + $0xe0] sm:$0xff]
        %v398 = vld [vmem:[%s314 + $0xe8] sm:$0xff]
        %v399 = vld [vmem:[%s314 + $0xf0] sm:$0xff]
        %v400 = vld [vmem:[%s314 + $0xf8] sm:$0xff]
        %v401 = vld [vmem:[%s314 + $0x100] sm:$0xff]
        %v402 = vld [vmem:[%s314 + $0x108] sm:$0xff]
        %v403 = vld [vmem:[%s314 + $0x110] sm:$0xff]
        %v404 = vld [vmem:[%s314 + $0x118] sm:$0xff]
        %v405 = vld [vmem:[%s314 + $0x120] sm:$0xff]
        %v406 = vld [vmem:[%s314 + $0x128] sm:$0xff]
        %v407 = vld [vmem:[%s314 + $0x130] sm:$0xff]
        %v408 = vld [vmem:[%s314 + $0x138] sm:$0xff]
        %v409 = vld [vmem:[%s314 + $0x140] sm:$0xff]
        %v410 = vld [vmem:[%s314 + $0x148] sm:$0xff]
        %v411 = vld [vmem:[%s314 + $0x150] sm:$0xff]
        %v412 = vld [vmem:[%s314 + $0x158] sm:$0xff]
        %v413 = vld [vmem:[%s314 + $0x160] sm:$0xff]
        %v414 = vld [vmem:[%s314 + $0x168] sm:$0xff]
        %v415 = vld [vmem:[%s314 + $0x170] sm:$0xff]
        %v416 = vld [vmem:[%s314 + $0x178] sm:$0xff]
        %v417 = vld [vmem:[%s314 + $0x180] sm:$0xff]
        %v418 = vld [vmem:[%s314 + $0x188] sm:$0xff]
        %v419 = vld [vmem:[%s314 + $0x190] sm:$0xff]
        %v420 = vld [vmem:[%s314 + $0x198] sm:$0xff]
        %v421 = vld [vmem:[%s314 + $0x1a0] sm:$0xff]
        %v422 = vld [vmem:[%s314 + $0x1a8] sm:$0xff]
        %v423 = vld [vmem:[%s314 + $0x1b0] sm:$0xff]
        %v424 = vld [vmem:[%s314 + $0x1b8] sm:$0xff]
        %v425 = vld [vmem:[%s314 + $0x1c0] sm:$0xff]
        %v426 = vld [vmem:[%s314 + $0x1c8] sm:$0xff]
        %v427 = vld [vmem:[%s314 + $0x1d0] sm:$0xff]
        %v428 = vld [vmem:[%s314 + $0x1d8] sm:$0xff]
        %v429 = vld [vmem:[%s314 + $0x1e0] sm:$0xff]
        %v430 = vld [vmem:[%s314 + $0x1e8] sm:$0xff]
        %v431 = vld [vmem:[%s314 + $0x1f0] sm:$0xff]
        %v432 = vld [vmem:[%s314 + $0x1f8] sm:$0xff]
        %v433 = vpack.c.bf16 %v370, %v369
        %v434 = vpack.c.bf16 %v372, %v371
        %v435 = vpack.c.bf16 %v374, %v373
        %v436 = vpack.c.bf16 %v376, %v375
        %v437 = vpack.c.bf16 %v378, %v377
        %v438 = vpack.c.bf16 %v380, %v379
        %v439 = vpack.c.bf16 %v382, %v381
        %v440 = vpack.c.bf16 %v384, %v383
        %v441 = vpack.c.bf16 %v386, %v385
        %v442 = vpack.c.bf16 %v388, %v387
        %v443 = vpack.c.bf16 %v390, %v389
        %v444 = vpack.c.bf16 %v392, %v391
        %v445 = vpack.c.bf16 %v394, %v393
        %v446 = vpack.c.bf16 %v396, %v395
        %v447 = vpack.c.bf16 %v398, %v397
        %v448 = vpack.c.bf16 %v400, %v399
        %v449 = vpack.c.bf16 %v402, %v401
        %v450 = vpack.c.bf16 %v404, %v403
        %v451 = vpack.c.bf16 %v406, %v405
        %v452 = vpack.c.bf16 %v408, %v407
        %v453 = vpack.c.bf16 %v410, %v409
        %v454 = vpack.c.bf16 %v412, %v411
        %v455 = vpack.c.bf16 %v414, %v413
        %v456 = vpack.c.bf16 %v416, %v415
        %v457 = vpack.c.bf16 %v418, %v417
        %v458 = vpack.c.bf16 %v420, %v419
        %v459 = vpack.c.bf16 %v422, %v421
        %v460 = vpack.c.bf16 %v424, %v423
        %v461 = vpack.c.bf16 %v426, %v425
        %v462 = vpack.c.bf16 %v428, %v427
        %v463 = vpack.c.bf16 %v430, %v429
        %v464 = vpack.c.bf16 %v432, %v431
        %v465 = vld [vmem:[#allocation6] sm:$0xff]
        %v466 = vld [vmem:[#allocation6 + $0x8] sm:$0xff]
        %v467 = vld [vmem:[#allocation6 + $0x10] sm:$0xff]
        %v468 = vld [vmem:[#allocation6 + $0x18] sm:$0xff]
        %v469 = vld [vmem:[#allocation6 + $0x20] sm:$0xff]
        %v470 = vld [vmem:[#allocation6 + $0x28] sm:$0xff]
        %v471 = vld [vmem:[#allocation6 + $0x30] sm:$0xff]
        %v472 = vld [vmem:[#allocation6 + $0x38] sm:$0xff]
        %v473 = vld [vmem:[#allocation6 + $0x40] sm:$0xff]
        %v474 = vld [vmem:[#allocation6 + $0x48] sm:$0xff]
        %v475 = vld [vmem:[#allocation6 + $0x50] sm:$0xff]
        %v476 = vld [vmem:[#allocation6 + $0x58] sm:$0xff]
        %v477 = vld [vmem:[#allocation6 + $0x60] sm:$0xff]
        %v478 = vld [vmem:[#allocation6 + $0x68] sm:$0xff]
        %v479 = vld [vmem:[#allocation6 + $0x70] sm:$0xff]
        %v480 = vld [vmem:[#allocation6 + $0x78] sm:$0xff]
        %v481 = vld [vmem:[#allocation8] sm:$0x3]
        %v482 = vstv %s368
        %v483 = vmul.f32 %v482, %v481
        %v484 = vld [vmem:[#allocation9] sm:$0x3]
        %v485 = vadd.f32 %v483, %v484
        %v487 = vlaneseq
        %v488 = vshrl.u32 %v487, 7
        %v489 = vsub.s32 0, %v488
        %v490 = vrot.slane %v485, %v489
        %v491 = vlaneseq
        %v492 = vshrl.u32 %v491, 7
        %v493 = vsub.s32 1, %v492
        %v494 = vrot.slane %v485, %v493
        %v513 = vunpack.c.l.b16 %v465
        %v514 = vunpack.c.h.b16 %v465
        %v515 = vunpack.c.l.b16 %v466
        %v516 = vunpack.c.h.b16 %v466
        %v517 = vunpack.c.l.b16 %v467
        %v518 = vunpack.c.h.b16 %v467
        %v519 = vunpack.c.l.b16 %v468
        %v520 = vunpack.c.h.b16 %v468
        %v521 = vunpack.c.l.b16 %v469
        %v522 = vunpack.c.h.b16 %v469
        %v523 = vunpack.c.l.b16 %v470
        %v524 = vunpack.c.h.b16 %v470
        %v525 = vunpack.c.l.b16 %v471
        %v526 = vunpack.c.h.b16 %v471
        %v527 = vunpack.c.l.b16 %v472
        %v528 = vunpack.c.h.b16 %v472
        %v529 = vunpack.c.l.b16 %v473
        %v530 = vunpack.c.h.b16 %v473
        %v531 = vunpack.c.l.b16 %v474
        %v532 = vunpack.c.h.b16 %v474
        %v533 = vunpack.c.l.b16 %v475
        %v534 = vunpack.c.h.b16 %v475
        %v535 = vunpack.c.l.b16 %v476
        %v536 = vunpack.c.h.b16 %v476
        %v537 = vunpack.c.l.b16 %v477
        %v538 = vunpack.c.h.b16 %v477
        %v539 = vunpack.c.l.b16 %v478
        %v540 = vunpack.c.h.b16 %v478
        %v541 = vunpack.c.l.b16 %v479
        %v542 = vunpack.c.h.b16 %v479
        %v543 = vunpack.c.l.b16 %v480
        %v544 = vunpack.c.h.b16 %v480
        %v545 = vpack.c.b16 %v515, %v513
        %v546 = vpack.c.b16 %v516, %v514
        %v547 = vpack.c.b16 %v519, %v517
        %v548 = vpack.c.b16 %v520, %v518
        %v549 = vpack.c.b16 %v523, %v521
        %v550 = vpack.c.b16 %v524, %v522
        %v551 = vpack.c.b16 %v527, %v525
        %v552 = vpack.c.b16 %v528, %v526
        %v553 = vpack.c.b16 %v531, %v529
        %v554 = vpack.c.b16 %v532, %v530
        %v555 = vpack.c.b16 %v535, %v533
        %v556 = vpack.c.b16 %v536, %v534
        %v557 = vpack.c.b16 %v539, %v537
        %v558 = vpack.c.b16 %v540, %v538
        %v559 = vpack.c.b16 %v543, %v541
        %v560 = vpack.c.b16 %v544, %v542
        %577 = vmatprep.subr.bf16.mxu0 %v546
        %578 = vmatpush1.bf16.msra.mxu0 %v545
        %579 = vmatprep.subr.bf16.mxu0 %v548
        %580 = vmatpush1.bf16.msra.mxu0 %v547
        %581 = vmatprep.subr.bf16.mxu0 %v550
        %582 = vmatpush1.bf16.msra.mxu0 %v549
        %583 = vmatprep.subr.bf16.mxu0 %v552
        %584 = vmatpush1.bf16.msra.mxu0 %v551
        %585 = vmatprep.subr.bf16.mxu0 %v554
        %586 = vmatpush1.bf16.msra.mxu0 %v553
        %587 = vmatprep.subr.bf16.mxu0 %v556
        %588 = vmatpush1.bf16.msra.mxu0 %v555
        %589 = vmatprep.subr.bf16.mxu0 %v558
        %590 = vmatpush1.bf16.msra.mxu0 %v557
        %591 = vmatprep.subr.bf16.mxu0 %v560
        %592 = vmatpush1.bf16.msra.mxu0 %v559
        %593 = vmatprep.subr.bf16.mxu0 0
        %594 = vmatpush1.bf16.msra.mxu0 0
        %595 = vmatprep.subr.bf16.mxu0 0
        %596 = vmatpush1.bf16.msra.mxu0 0
        %597 = vmatprep.subr.bf16.mxu0 0
        %598 = vmatpush1.bf16.msra.mxu0 0
        %599 = vmatprep.subr.bf16.mxu0 0
        %600 = vmatpush1.bf16.msra.mxu0 0
        %601 = vmatprep.subr.bf16.mxu0 0
        %602 = vmatpush1.bf16.msra.mxu0 0
        %603 = vmatprep.subr.bf16.mxu0 0
        %604 = vmatpush1.bf16.msra.mxu0 0
        %605 = vmatprep.subr.bf16.mxu0 0
        %606 = vmatpush1.bf16.msra.mxu0 0
        %607 = vmatprep.subr.bf16.mxu0 0
        %608 = vmatpush1.bf16.msra.mxu0 0
        %609 = vmatprep.mubr.bf16.mxu0 0
        %610 = vmatmul.mubr.bf16.gmra.mrb[0].mxu0 %v433
        %v611 = vpop.f32.mrb[0].mxu0
        %v612 = vadd.f32 %v490, %v611
        %v613 = vpop.f32.mrb[0].mxu0
        %v614 = vadd.f32 %v494, %v613
        %v615 = vpop.f32.mrb[0].mxu0
        %v616 = vadd.f32 %v490, %v615
        %v617 = vpop.f32.mrb[0].mxu0
        %v618 = vadd.f32 %v494, %v617
        %619 = vmatprep.mubr.bf16.mxu0 0
        %620 = vmatmul.mubr.bf16.gmra.mrb[0].mxu0 %v434
        %v621 = vpop.f32.mrb[0].mxu0
        %v622 = vadd.f32 %v490, %v621
        %v623 = vpop.f32.mrb[0].mxu0
        %v624 = vadd.f32 %v494, %v623
        %v625 = vpop.f32.mrb[0].mxu0
        %v626 = vadd.f32 %v490, %v625
        %v627 = vpop.f32.mrb[0].mxu0
        %v628 = vadd.f32 %v494, %v627
        %629 = vmatprep.mubr.bf16.mxu0 0
        %630 = vmatmul.mubr.bf16.gmra.mrb[0].mxu0 %v435
        %v631 = vpop.f32.mrb[0].mxu0
        %v632 = vadd.f32 %v490, %v631
        %v633 = vpop.f32.mrb[0].mxu0
        %v634 = vadd.f32 %v494, %v633
        %v635 = vpop.f32.mrb[0].mxu0
        %v636 = vadd.f32 %v490, %v635
        %v637 = vpop.f32.mrb[0].mxu0
        %v638 = vadd.f32 %v494, %v637
        %639 = vmatprep.mubr.bf16.mxu0 0
        %640 = vmatmul.mubr.bf16.gmra.mrb[0].mxu0 %v436
        %v641 = vpop.f32.mrb[0].mxu0
        %v642 = vadd.f32 %v490, %v641
        %v643 = vpop.f32.mrb[0].mxu0
        %v644 = vadd.f32 %v494, %v643
        %v645 = vpop.f32.mrb[0].mxu0
        %v646 = vadd.f32 %v490, %v645
        %v647 = vpop.f32.mrb[0].mxu0
        %v648 = vadd.f32 %v494, %v647
        %649 = vmatprep.mubr.bf16.mxu0 0
        %650 = vmatmul.mubr.bf16.gmra.mrb[0].mxu0 %v437
        %v651 = vpop.f32.mrb[0].mxu0
        %v652 = vadd.f32 %v490, %v651
        %v653 = vpop.f32.mrb[0].mxu0
        %v654 = vadd.f32 %v494, %v653
        %v655 = vpop.f32.mrb[0].mxu0
        %v656 = vadd.f32 %v490, %v655
        %v657 = vpop.f32.mrb[0].mxu0
        %v658 = vadd.f32 %v494, %v657
        %659 = vmatprep.mubr.bf16.mxu0 0
        %660 = vmatmul.mubr.bf16.gmra.mrb[0].mxu0 %v438
        %v661 = vpop.f32.mrb[0].mxu0
        %v662 = vadd.f32 %v490, %v661
        %v663 = vpop.f32.mrb[0].mxu0
        %v664 = vadd.f32 %v494, %v663
        %v665 = vpop.f32.mrb[0].mxu0
        %v666 = vadd.f32 %v490, %v665
        %v667 = vpop.f32.mrb[0].mxu0
        %v668 = vadd.f32 %v494, %v667
        %669 = vmatprep.mubr.bf16.mxu0 0
        %670 = vmatmul.mubr.bf16.gmra.mrb[0].mxu0 %v439
        %v671 = vpop.f32.mrb[0].mxu0
        %v672 = vadd.f32 %v490, %v671
        %v673 = vpop.f32.mrb[0].mxu0
        %v674 = vadd.f32 %v494, %v673
        %v675 = vpop.f32.mrb[0].mxu0
        %v676 = vadd.f32 %v490, %v675
        %v677 = vpop.f32.mrb[0].mxu0
        %v678 = vadd.f32 %v494, %v677
        %679 = vmatprep.mubr.bf16.mxu0 0
        %680 = vmatmul.mubr.bf16.gmra.mrb[0].mxu0 %v440
        %v681 = vpop.f32.mrb[0].mxu0
        %v682 = vadd.f32 %v490, %v681
        %v683 = vpop.f32.mrb[0].mxu0
        %v684 = vadd.f32 %v494, %v683
        %v685 = vpop.f32.mrb[0].mxu0
        %v686 = vadd.f32 %v490, %v685
        %v687 = vpop.f32.mrb[0].mxu0
        %v688 = vadd.f32 %v494, %v687
        %689 = vmatprep.mubr.bf16.mxu0 0
        %690 = vmatmul.mubr.bf16.gmra.mrb[0].mxu0 %v441
        %v691 = vpop.f32.mrb[0].mxu0
        %v692 = vadd.f32 %v490, %v691
        %v693 = vpop.f32.mrb[0].mxu0
        %v694 = vadd.f32 %v494, %v693
        %v695 = vpop.f32.mrb[0].mxu0
        %v696 = vadd.f32 %v490, %v695
        %v697 = vpop.f32.mrb[0].mxu0
        %v698 = vadd.f32 %v494, %v697
        %699 = vmatprep.mubr.bf16.mxu0 0
        %700 = vmatmul.mubr.bf16.gmra.mrb[0].mxu0 %v442
        %v701 = vpop.f32.mrb[0].mxu0
        %v702 = vadd.f32 %v490, %v701
        %v703 = vpop.f32.mrb[0].mxu0
        %v704 = vadd.f32 %v494, %v703
        %v705 = vpop.f32.mrb[0].mxu0
        %v706 = vadd.f32 %v490, %v705
        %v707 = vpop.f32.mrb[0].mxu0
        %v708 = vadd.f32 %v494, %v707
        %709 = vmatprep.mubr.bf16.mxu0 0
        %710 = vmatmul.mubr.bf16.gmra.mrb[0].mxu0 %v443
        %v711 = vpop.f32.mrb[0].mxu0
        %v712 = vadd.f32 %v490, %v711
        %v713 = vpop.f32.mrb[0].mxu0
        %v714 = vadd.f32 %v494, %v713
        %v715 = vpop.f32.mrb[0].mxu0
        %v716 = vadd.f32 %v490, %v715
        %v717 = vpop.f32.mrb[0].mxu0
        %v718 = vadd.f32 %v494, %v717
        %719 = vmatprep.mubr.bf16.mxu0 0
        %720 = vmatmul.mubr.bf16.gmra.mrb[0].mxu0 %v444
        %v721 = vpop.f32.mrb[0].mxu0
        %v722 = vadd.f32 %v490, %v721
        %v723 = vpop.f32.mrb[0].mxu0
        %v724 = vadd.f32 %v494, %v723
        %v725 = vpop.f32.mrb[0].mxu0
        %v726 = vadd.f32 %v490, %v725
        %v727 = vpop.f32.mrb[0].mxu0
        %v728 = vadd.f32 %v494, %v727
        %729 = vmatprep.mubr.bf16.mxu0 0
        %730 = vmatmul.mubr.bf16.gmra.mrb[0].mxu0 %v445
        %v731 = vpop.f32.mrb[0].mxu0
        %v732 = vadd.f32 %v490, %v731
        %v733 = vpop.f32.mrb[0].mxu0
        %v734 = vadd.f32 %v494, %v733
        %v735 = vpop.f32.mrb[0].mxu0
        %v736 = vadd.f32 %v490, %v735
        %v737 = vpop.f32.mrb[0].mxu0
        %v738 = vadd.f32 %v494, %v737
        %739 = vmatprep.mubr.bf16.mxu0 0
        %740 = vmatmul.mubr.bf16.gmra.mrb[0].mxu0 %v446
        %v741 = vpop.f32.mrb[0].mxu0
        %v742 = vadd.f32 %v490, %v741
        %v743 = vpop.f32.mrb[0].mxu0
        %v744 = vadd.f32 %v494, %v743
        %v745 = vpop.f32.mrb[0].mxu0
        %v746 = vadd.f32 %v490, %v745
        %v747 = vpop.f32.mrb[0].mxu0
        %v748 = vadd.f32 %v494, %v747
        %749 = vmatprep.mubr.bf16.mxu0 0
        %750 = vmatmul.mubr.bf16.gmra.mrb[0].mxu0 %v447
        %v751 = vpop.f32.mrb[0].mxu0
        %v752 = vadd.f32 %v490, %v751
        %v753 = vpop.f32.mrb[0].mxu0
        %v754 = vadd.f32 %v494, %v753
        %v755 = vpop.f32.mrb[0].mxu0
        %v756 = vadd.f32 %v490, %v755
        %v757 = vpop.f32.mrb[0].mxu0
        %v758 = vadd.f32 %v494, %v757
        %759 = vmatprep.mubr.bf16.mxu0 0
        %760 = vmatmul.mubr.bf16.gmra.mrb[0].mxu0 %v448
        %v761 = vpop.f32.mrb[0].mxu0
        %v762 = vadd.f32 %v490, %v761
        %v763 = vpop.f32.mrb[0].mxu0
        %v764 = vadd.f32 %v494, %v763
        %v765 = vpop.f32.mrb[0].mxu0
        %v766 = vadd.f32 %v490, %v765
        %v767 = vpop.f32.mrb[0].mxu0
        %v768 = vadd.f32 %v494, %v767
        %769 = vmatprep.mubr.bf16.mxu0 0
        %770 = vmatmul.mubr.bf16.gmra.mrb[0].mxu0 %v449
        %v771 = vpop.f32.mrb[0].mxu0
        %v772 = vadd.f32 %v490, %v771
        %v773 = vpop.f32.mrb[0].mxu0
        %v774 = vadd.f32 %v494, %v773
        %v775 = vpop.f32.mrb[0].mxu0
        %v776 = vadd.f32 %v490, %v775
        %v777 = vpop.f32.mrb[0].mxu0
        %v778 = vadd.f32 %v494, %v777
        %779 = vmatprep.mubr.bf16.mxu0 0
        %780 = vmatmul.mubr.bf16.gmra.mrb[0].mxu0 %v450
        %v781 = vpop.f32.mrb[0].mxu0
        %v782 = vadd.f32 %v490, %v781
        %v783 = vpop.f32.mrb[0].mxu0
        %v784 = vadd.f32 %v494, %v783
        %v785 = vpop.f32.mrb[0].mxu0
        %v786 = vadd.f32 %v490, %v785
        %v787 = vpop.f32.mrb[0].mxu0
        %v788 = vadd.f32 %v494, %v787
        %789 = vmatprep.mubr.bf16.mxu0 0
        %790 = vmatmul.mubr.bf16.gmra.mrb[0].mxu0 %v451
        %v791 = vpop.f32.mrb[0].mxu0
        %v792 = vadd.f32 %v490, %v791
        %v793 = vpop.f32.mrb[0].mxu0
        %v794 = vadd.f32 %v494, %v793
        %v795 = vpop.f32.mrb[0].mxu0
        %v796 = vadd.f32 %v490, %v795
        %v797 = vpop.f32.mrb[0].mxu0
        %v798 = vadd.f32 %v494, %v797
        %799 = vmatprep.mubr.bf16.mxu0 0
        %800 = vmatmul.mubr.bf16.gmra.mrb[0].mxu0 %v452
        %v801 = vpop.f32.mrb[0].mxu0
        %v802 = vadd.f32 %v490, %v801
        %v803 = vpop.f32.mrb[0].mxu0
        %v804 = vadd.f32 %v494, %v803
        %v805 = vpop.f32.mrb[0].mxu0
        %v806 = vadd.f32 %v490, %v805
        %v807 = vpop.f32.mrb[0].mxu0
        %v808 = vadd.f32 %v494, %v807
        %809 = vmatprep.mubr.bf16.mxu0 0
        %810 = vmatmul.mubr.bf16.gmra.mrb[0].mxu0 %v453
        %v811 = vpop.f32.mrb[0].mxu0
        %v812 = vadd.f32 %v490, %v811
        %v813 = vpop.f32.mrb[0].mxu0
        %v814 = vadd.f32 %v494, %v813
        %v815 = vpop.f32.mrb[0].mxu0
        %v816 = vadd.f32 %v490, %v815
        %v817 = vpop.f32.mrb[0].mxu0
        %v818 = vadd.f32 %v494, %v817
        %819 = vmatprep.mubr.bf16.mxu0 0
        %820 = vmatmul.mubr.bf16.gmra.mrb[0].mxu0 %v454
        %v821 = vpop.f32.mrb[0].mxu0
        %v822 = vadd.f32 %v490, %v821
        %v823 = vpop.f32.mrb[0].mxu0
        %v824 = vadd.f32 %v494, %v823
        %v825 = vpop.f32.mrb[0].mxu0
        %v826 = vadd.f32 %v490, %v825
        %v827 = vpop.f32.mrb[0].mxu0
        %v828 = vadd.f32 %v494, %v827
        %829 = vmatprep.mubr.bf16.mxu0 0
        %830 = vmatmul.mubr.bf16.gmra.mrb[0].mxu0 %v455
        %v831 = vpop.f32.mrb[0].mxu0
        %v832 = vadd.f32 %v490, %v831
        %v833 = vpop.f32.mrb[0].mxu0
        %v834 = vadd.f32 %v494, %v833
        %v835 = vpop.f32.mrb[0].mxu0
        %v836 = vadd.f32 %v490, %v835
        %v837 = vpop.f32.mrb[0].mxu0
        %v838 = vadd.f32 %v494, %v837
        %839 = vmatprep.mubr.bf16.mxu0 0
        %840 = vmatmul.mubr.bf16.gmra.mrb[0].mxu0 %v456
        %v841 = vpop.f32.mrb[0].mxu0
        %v842 = vadd.f32 %v490, %v841
        %v843 = vpop.f32.mrb[0].mxu0
        %v844 = vadd.f32 %v494, %v843
        %v845 = vpop.f32.mrb[0].mxu0
        %v846 = vadd.f32 %v490, %v845
        %v847 = vpop.f32.mrb[0].mxu0
        %v848 = vadd.f32 %v494, %v847
        %849 = vmatprep.mubr.bf16.mxu0 0
        %850 = vmatmul.mubr.bf16.gmra.mrb[0].mxu0 %v457
        %v851 = vpop.f32.mrb[0].mxu0
        %v852 = vadd.f32 %v490, %v851
        %v853 = vpop.f32.mrb[0].mxu0
        %v854 = vadd.f32 %v494, %v853
        %v855 = vpop.f32.mrb[0].mxu0
        %v856 = vadd.f32 %v490, %v855
        %v857 = vpop.f32.mrb[0].mxu0
        %v858 = vadd.f32 %v494, %v857
        %859 = vmatprep.mubr.bf16.mxu0 0
        %860 = vmatmul.mubr.bf16.gmra.mrb[0].mxu0 %v458
        %v861 = vpop.f32.mrb[0].mxu0
        %v862 = vadd.f32 %v490, %v861
        %v863 = vpop.f32.mrb[0].mxu0
        %v864 = vadd.f32 %v494, %v863
        %v865 = vpop.f32.mrb[0].mxu0
        %v866 = vadd.f32 %v490, %v865
        %v867 = vpop.f32.mrb[0].mxu0
        %v868 = vadd.f32 %v494, %v867
        %869 = vmatprep.mubr.bf16.mxu0 0
        %870 = vmatmul.mubr.bf16.gmra.mrb[0].mxu0 %v459
        %v871 = vpop.f32.mrb[0].mxu0
        %v872 = vadd.f32 %v490, %v871
        %v873 = vpop.f32.mrb[0].mxu0
        %v874 = vadd.f32 %v494, %v873
        %v875 = vpop.f32.mrb[0].mxu0
        %v876 = vadd.f32 %v490, %v875
        %v877 = vpop.f32.mrb[0].mxu0
        %v878 = vadd.f32 %v494, %v877
        %879 = vmatprep.mubr.bf16.mxu0 0
        %880 = vmatmul.mubr.bf16.gmra.mrb[0].mxu0 %v460
        %v881 = vpop.f32.mrb[0].mxu0
        %v882 = vadd.f32 %v490, %v881
        %v883 = vpop.f32.mrb[0].mxu0
        %v884 = vadd.f32 %v494, %v883
        %v885 = vpop.f32.mrb[0].mxu0
        %v886 = vadd.f32 %v490, %v885
        %v887 = vpop.f32.mrb[0].mxu0
        %v888 = vadd.f32 %v494, %v887
        %889 = vmatprep.mubr.bf16.mxu0 0
        %890 = vmatmul.mubr.bf16.gmra.mrb[0].mxu0 %v461
        %v891 = vpop.f32.mrb[0].mxu0
        %v892 = vadd.f32 %v490, %v891
        %v893 = vpop.f32.mrb[0].mxu0
        %v894 = vadd.f32 %v494, %v893
        %v895 = vpop.f32.mrb[0].mxu0
        %v896 = vadd.f32 %v490, %v895
        %v897 = vpop.f32.mrb[0].mxu0
        %v898 = vadd.f32 %v494, %v897
        %899 = vmatprep.mubr.bf16.mxu0 0
        %900 = vmatmul.mubr.bf16.gmra.mrb[0].mxu0 %v462
        %v901 = vpop.f32.mrb[0].mxu0
        %v902 = vadd.f32 %v490, %v901
        %v903 = vpop.f32.mrb[0].mxu0
        %v904 = vadd.f32 %v494, %v903
        %v905 = vpop.f32.mrb[0].mxu0
        %v906 = vadd.f32 %v490, %v905
        %v907 = vpop.f32.mrb[0].mxu0
        %v908 = vadd.f32 %v494, %v907
        %909 = vmatprep.mubr.bf16.mxu0 0
        %910 = vmatmul.mubr.bf16.gmra.mrb[0].mxu0 %v463
        %v911 = vpop.f32.mrb[0].mxu0
        %v912 = vadd.f32 %v490, %v911
        %v913 = vpop.f32.mrb[0].mxu0
        %v914 = vadd.f32 %v494, %v913
        %v915 = vpop.f32.mrb[0].mxu0
        %v916 = vadd.f32 %v490, %v915
        %v917 = vpop.f32.mrb[0].mxu0
        %v918 = vadd.f32 %v494, %v917
        %919 = vmatprep.mubr.bf16.mxu0 0
        %920 = vmatmul.mubr.bf16.gmra.mrb[0].mxu0 %v464
        %v921 = vpop.f32.mrb[0].mxu0
        %v922 = vadd.f32 %v490, %v921
        %v923 = vpop.f32.mrb[0].mxu0
        %v924 = vadd.f32 %v494, %v923
        %v925 = vpop.f32.mrb[0].mxu0
        %v926 = vadd.f32 %v490, %v925
        %v927 = vpop.f32.mrb[0].mxu0
        %v928 = vadd.f32 %v494, %v927
        %929 = vdwg.mxu0
        %v930 = vtanh.pop %v612
        %v931 = vtanh.pop %v614
        %v932 = vtanh.pop %v616
        %v933 = vtanh.pop %v618
        %v934 = vtanh.pop %v622
        %v935 = vtanh.pop %v624
        %v936 = vtanh.pop %v626
        %v937 = vtanh.pop %v628
        %v938 = vtanh.pop %v632
        %v939 = vtanh.pop %v634
        %v940 = vtanh.pop %v636
        %v941 = vtanh.pop %v638
        %v942 = vtanh.pop %v642
        %v943 = vtanh.pop %v644
        %v944 = vtanh.pop %v646
        %v945 = vtanh.pop %v648
        %v946 = vtanh.pop %v652
        %v947 = vtanh.pop %v654
        %v948 = vtanh.pop %v656
        %v949 = vtanh.pop %v658
        %v950 = vtanh.pop %v662
        %v951 = vtanh.pop %v664
        %v952 = vtanh.pop %v666
        %v953 = vtanh.pop %v668
        %v954 = vtanh.pop %v672
        %v955 = vtanh.pop %v674
        %v956 = vtanh.pop %v676
        %v957 = vtanh.pop %v678
        %v958 = vtanh.pop %v682
        %v959 = vtanh.pop %v684
        %v960 = vtanh.pop %v686
        %v961 = vtanh.pop %v688
        %v962 = vtanh.pop %v692
        %v963 = vtanh.pop %v694
        %v964 = vtanh.pop %v696
        %v965 = vtanh.pop %v698
        %v966 = vtanh.pop %v702
        %v967 = vtanh.pop %v704
        %v968 = vtanh.pop %v706
        %v969 = vtanh.pop %v708
        %v970 = vtanh.pop %v712
        %v971 = vtanh.pop %v714
        %v972 = vtanh.pop %v716
        %v973 = vtanh.pop %v718
        %v974 = vtanh.pop %v722
        %v975 = vtanh.pop %v724
        %v976 = vtanh.pop %v726
        %v977 = vtanh.pop %v728
        %v978 = vtanh.pop %v732
        %v979 = vtanh.pop %v734
        %v980 = vtanh.pop %v736
        %v981 = vtanh.pop %v738
        %v982 = vtanh.pop %v742
        %v983 = vtanh.pop %v744
        %v984 = vtanh.pop %v746
        %v985 = vtanh.pop %v748
        %v986 = vtanh.pop %v752
        %v987 = vtanh.pop %v754
        %v988 = vtanh.pop %v756
        %v989 = vtanh.pop %v758
        %v990 = vtanh.pop %v762
        %v991 = vtanh.pop %v764
        %v992 = vtanh.pop %v766
        %v993 = vtanh.pop %v768
        %v994 = vtanh.pop %v772
        %v995 = vtanh.pop %v774
        %v996 = vtanh.pop %v776
        %v997 = vtanh.pop %v778
        %v998 = vtanh.pop %v782
        %v999 = vtanh.pop %v784
        %v1000 = vtanh.pop %v786
        %v1001 = vtanh.pop %v788
        %v1002 = vtanh.pop %v792
        %v1003 = vtanh.pop %v794
        %v1004 = vtanh.pop %v796
        %v1005 = vtanh.pop %v798
        %v1006 = vtanh.pop %v802
        %v1007 = vtanh.pop %v804
        %v1008 = vtanh.pop %v806
        %v1009 = vtanh.pop %v808
        %v1010 = vtanh.pop %v812
        %v1011 = vtanh.pop %v814
        %v1012 = vtanh.pop %v816
        %v1013 = vtanh.pop %v818
        %v1014 = vtanh.pop %v822
        %v1015 = vtanh.pop %v824
        %v1016 = vtanh.pop %v826
        %v1017 = vtanh.pop %v828
        %v1018 = vtanh.pop %v832
        %v1019 = vtanh.pop %v834
        %v1020 = vtanh.pop %v836
        %v1021 = vtanh.pop %v838
        %v1022 = vtanh.pop %v842
        %v1023 = vtanh.pop %v844
        %v1024 = vtanh.pop %v846
        %v1025 = vtanh.pop %v848
        %v1026 = vtanh.pop %v852
        %v1027 = vtanh.pop %v854
        %v1028 = vtanh.pop %v856
        %v1029 = vtanh.pop %v858
        %v1030 = vtanh.pop %v862
        %v1031 = vtanh.pop %v864
        %v1032 = vtanh.pop %v866
        %v1033 = vtanh.pop %v868
        %v1034 = vtanh.pop %v872
        %v1035 = vtanh.pop %v874
        %v1036 = vtanh.pop %v876
        %v1037 = vtanh.pop %v878
        %v1038 = vtanh.pop %v882
        %v1039 = vtanh.pop %v884
        %v1040 = vtanh.pop %v886
        %v1041 = vtanh.pop %v888
        %v1042 = vtanh.pop %v892
        %v1043 = vtanh.pop %v894
        %v1044 = vtanh.pop %v896
        %v1045 = vtanh.pop %v898
        %v1046 = vtanh.pop %v902
        %v1047 = vtanh.pop %v904
        %v1048 = vtanh.pop %v906
        %v1049 = vtanh.pop %v908
        %v1050 = vtanh.pop %v912
        %v1051 = vtanh.pop %v914
        %v1052 = vtanh.pop %v916
        %v1053 = vtanh.pop %v918
        %v1054 = vtanh.pop %v922
        %v1055 = vtanh.pop %v924
        %v1056 = vtanh.pop %v926
        %v1057 = vtanh.pop %v928
        %v1058 = vpack.c.bf16 %v932, %v930
        %v1059 = vpack.c.bf16 %v933, %v931
        %v1060 = vpack.c.bf16 %v936, %v934
        %v1061 = vpack.c.bf16 %v937, %v935
        %v1062 = vpack.c.bf16 %v940, %v938
        %v1063 = vpack.c.bf16 %v941, %v939
        %v1064 = vpack.c.bf16 %v944, %v942
        %v1065 = vpack.c.bf16 %v945, %v943
        %v1066 = vpack.c.bf16 %v948, %v946
        %v1067 = vpack.c.bf16 %v949, %v947
        %v1068 = vpack.c.bf16 %v952, %v950
        %v1069 = vpack.c.bf16 %v953, %v951
        %v1070 = vpack.c.bf16 %v956, %v954
        %v1071 = vpack.c.bf16 %v957, %v955
        %v1072 = vpack.c.bf16 %v960, %v958
        %v1073 = vpack.c.bf16 %v961, %v959
        %v1074 = vpack.c.bf16 %v964, %v962
        %v1075 = vpack.c.bf16 %v965, %v963
        %v1076 = vpack.c.bf16 %v968, %v966
        %v1077 = vpack.c.bf16 %v969, %v967
        %v1078 = vpack.c.bf16 %v972, %v970
        %v1079 = vpack.c.bf16 %v973, %v971
        %v1080 = vpack.c.bf16 %v976, %v974
        %v1081 = vpack.c.bf16 %v977, %v975
        %v1082 = vpack.c.bf16 %v980, %v978
        %v1083 = vpack.c.bf16 %v981, %v979
        %v1084 = vpack.c.bf16 %v984, %v982
        %v1085 = vpack.c.bf16 %v985, %v983
        %v1086 = vpack.c.bf16 %v988, %v986
        %v1087 = vpack.c.bf16 %v989, %v987
        %v1088 = vpack.c.bf16 %v992, %v990
        %v1089 = vpack.c.bf16 %v993, %v991
        %v1090 = vpack.c.bf16 %v996, %v994
        %v1091 = vpack.c.bf16 %v997, %v995
        %v1092 = vpack.c.bf16 %v1000, %v998
        %v1093 = vpack.c.bf16 %v1001, %v999
        %v1094 = vpack.c.bf16 %v1004, %v1002
        %v1095 = vpack.c.bf16 %v1005, %v1003
        %v1096 = vpack.c.bf16 %v1008, %v1006
        %v1097 = vpack.c.bf16 %v1009, %v1007
        %v1098 = vpack.c.bf16 %v1012, %v1010
        %v1099 = vpack.c.bf16 %v1013, %v1011
        %v1100 = vpack.c.bf16 %v1016, %v1014
        %v1101 = vpack.c.bf16 %v1017, %v1015
        %v1102 = vpack.c.bf16 %v1020, %v1018
        %v1103 = vpack.c.bf16 %v1021, %v1019
        %v1104 = vpack.c.bf16 %v1024, %v1022
        %v1105 = vpack.c.bf16 %v1025, %v1023
        %v1106 = vpack.c.bf16 %v1028, %v1026
        %v1107 = vpack.c.bf16 %v1029, %v1027
        %v1108 = vpack.c.bf16 %v1032, %v1030
        %v1109 = vpack.c.bf16 %v1033, %v1031
        %v1110 = vpack.c.bf16 %v1036, %v1034
        %v1111 = vpack.c.bf16 %v1037, %v1035
        %v1112 = vpack.c.bf16 %v1040, %v1038
        %v1113 = vpack.c.bf16 %v1041, %v1039
        %v1114 = vpack.c.bf16 %v1044, %v1042
        %v1115 = vpack.c.bf16 %v1045, %v1043
        %v1116 = vpack.c.bf16 %v1048, %v1046
        %v1117 = vpack.c.bf16 %v1049, %v1047
        %v1118 = vpack.c.bf16 %v1052, %v1050
        %v1119 = vpack.c.bf16 %v1053, %v1051
        %v1120 = vpack.c.bf16 %v1056, %v1054
        %v1121 = vpack.c.bf16 %v1057, %v1055
        %v1122 = vld [vmem:[#allocation11] sm:$0xf]
        %v1123 = vld [vmem:[#allocation11 + $0x4] sm:$0xf]
        %v1124 = vld [vmem:[#allocation11 + $0x8] sm:$0xf]
        %v1125 = vld [vmem:[#allocation11 + $0xc] sm:$0xf]
        %v1126 = vld [vmem:[#allocation11 + $0x10] sm:$0xf]
        %v1127 = vld [vmem:[#allocation11 + $0x14] sm:$0xf]
        %v1128 = vld [vmem:[#allocation11 + $0x18] sm:$0xf]
        %v1129 = vld [vmem:[#allocation11 + $0x1c] sm:$0xf]
        %v1130 = vld [vmem:[#allocation11 + $0x20] sm:$0xf]
        %v1131 = vld [vmem:[#allocation11 + $0x24] sm:$0xf]
        %v1132 = vld [vmem:[#allocation11 + $0x28] sm:$0xf]
        %v1133 = vld [vmem:[#allocation11 + $0x2c] sm:$0xf]
        %v1134 = vld [vmem:[#allocation11 + $0x30] sm:$0xf]
        %v1135 = vld [vmem:[#allocation11 + $0x34] sm:$0xf]
        %v1136 = vld [vmem:[#allocation11 + $0x38] sm:$0xf]
        %v1137 = vld [vmem:[#allocation11 + $0x3c] sm:$0xf]
        %v1138 = vld [vmem:[#allocation11 + $0x40] sm:$0xf]
        %v1139 = vld [vmem:[#allocation11 + $0x44] sm:$0xf]
        %v1140 = vld [vmem:[#allocation11 + $0x48] sm:$0xf]
        %v1141 = vld [vmem:[#allocation11 + $0x4c] sm:$0xf]
        %v1142 = vld [vmem:[#allocation11 + $0x50] sm:$0xf]
        %v1143 = vld [vmem:[#allocation11 + $0x54] sm:$0xf]
        %v1144 = vld [vmem:[#allocation11 + $0x58] sm:$0xf]
        %v1145 = vld [vmem:[#allocation11 + $0x5c] sm:$0xf]
        %v1146 = vld [vmem:[#allocation11 + $0x60] sm:$0xf]
        %v1147 = vld [vmem:[#allocation11 + $0x64] sm:$0xf]
        %v1148 = vld [vmem:[#allocation11 + $0x68] sm:$0xf]
        %v1149 = vld [vmem:[#allocation11 + $0x6c] sm:$0xf]
        %v1150 = vld [vmem:[#allocation11 + $0x70] sm:$0xf]
        %v1151 = vld [vmem:[#allocation11 + $0x74] sm:$0xf]
        %v1152 = vld [vmem:[#allocation11 + $0x78] sm:$0xf]
        %v1153 = vld [vmem:[#allocation11 + $0x7c] sm:$0xf]
        %v1154 = vld [vmem:[#allocation12] sm:$0x1]
        %v1156 = vlaneseq
        %v1157 = vshrl.u32 %v1156, 7
        %v1158 = vsub.s32 0, %v1157
        %v1159 = vrot.slane %v1154, %v1158
        %v1193 = vunpack.c.l.b16 %v1122
        %v1194 = vunpack.c.l.b16 %v1123
        %v1195 = vunpack.c.l.b16 %v1124
        %v1196 = vunpack.c.l.b16 %v1125
        %v1197 = vunpack.c.l.b16 %v1126
        %v1198 = vunpack.c.l.b16 %v1127
        %v1199 = vunpack.c.l.b16 %v1128
        %v1200 = vunpack.c.l.b16 %v1129
        %v1201 = vunpack.c.l.b16 %v1130
        %v1202 = vunpack.c.l.b16 %v1131
        %v1203 = vunpack.c.l.b16 %v1132
        %v1204 = vunpack.c.l.b16 %v1133
        %v1205 = vunpack.c.l.b16 %v1134
        %v1206 = vunpack.c.l.b16 %v1135
        %v1207 = vunpack.c.l.b16 %v1136
        %v1208 = vunpack.c.l.b16 %v1137
        %v1209 = vunpack.c.l.b16 %v1138
        %v1210 = vunpack.c.l.b16 %v1139
        %v1211 = vunpack.c.l.b16 %v1140
        %v1212 = vunpack.c.l.b16 %v1141
        %v1213 = vunpack.c.l.b16 %v1142
        %v1214 = vunpack.c.l.b16 %v1143
        %v1215 = vunpack.c.l.b16 %v1144
        %v1216 = vunpack.c.l.b16 %v1145
        %v1217 = vunpack.c.l.b16 %v1146
        %v1218 = vunpack.c.l.b16 %v1147
        %v1219 = vunpack.c.l.b16 %v1148
        %v1220 = vunpack.c.l.b16 %v1149
        %v1221 = vunpack.c.l.b16 %v1150
        %v1222 = vunpack.c.l.b16 %v1151
        %v1223 = vunpack.c.l.b16 %v1152
        %v1224 = vunpack.c.l.b16 %v1153
        %v1225 = vpack.c.b16 %v1194, %v1193
        %v1226 = vpack.c.b16 %v1196, %v1195
        %v1227 = vpack.c.b16 %v1198, %v1197
        %v1228 = vpack.c.b16 %v1200, %v1199
        %v1229 = vpack.c.b16 %v1202, %v1201
        %v1230 = vpack.c.b16 %v1204, %v1203
        %v1231 = vpack.c.b16 %v1206, %v1205
        %v1232 = vpack.c.b16 %v1208, %v1207
        %v1233 = vpack.c.b16 %v1210, %v1209
        %v1234 = vpack.c.b16 %v1212, %v1211
        %v1235 = vpack.c.b16 %v1214, %v1213
        %v1236 = vpack.c.b16 %v1216, %v1215
        %v1237 = vpack.c.b16 %v1218, %v1217
        %v1238 = vpack.c.b16 %v1220, %v1219
        %v1239 = vpack.c.b16 %v1222, %v1221
        %v1240 = vpack.c.b16 %v1224, %v1223
        %1257 = vmatprep.subr.bf16.mxu0 0
        %1258 = vmatpush1.bf16.msra.mxu0 %v1225
        %1259 = vmatprep.subr.bf16.mxu0 0
        %1260 = vmatpush1.bf16.msra.mxu0 %v1226
        %1261 = vmatprep.subr.bf16.mxu0 0
        %1262 = vmatpush1.bf16.msra.mxu0 %v1227
        %1263 = vmatprep.subr.bf16.mxu0 0
        %1264 = vmatpush1.bf16.msra.mxu0 %v1228
        %1265 = vmatprep.subr.bf16.mxu0 0
        %1266 = vmatpush1.bf16.msra.mxu0 %v1229
        %1267 = vmatprep.subr.bf16.mxu0 0
        %1268 = vmatpush1.bf16.msra.mxu0 %v1230
        %1269 = vmatprep.subr.bf16.mxu0 0
        %1270 = vmatpush1.bf16.msra.mxu0 %v1231
        %1271 = vmatprep.subr.bf16.mxu0 0
        %1272 = vmatpush1.bf16.msra.mxu0 %v1232
        %1273 = vmatprep.subr.bf16.mxu0 0
        %1274 = vmatpush1.bf16.msra.mxu0 %v1233
        %1275 = vmatprep.subr.bf16.mxu0 0
        %1276 = vmatpush1.bf16.msra.mxu0 %v1234
        %1277 = vmatprep.subr.bf16.mxu0 0
        %1278 = vmatpush1.bf16.msra.mxu0 %v1235
        %1279 = vmatprep.subr.bf16.mxu0 0
        %1280 = vmatpush1.bf16.msra.mxu0 %v1236
        %1281 = vmatprep.subr.bf16.mxu0 0
        %1282 = vmatpush1.bf16.msra.mxu0 %v1237
        %1283 = vmatprep.subr.bf16.mxu0 0
        %1284 = vmatpush1.bf16.msra.mxu0 %v1238
        %1285 = vmatprep.subr.bf16.mxu0 0
        %1286 = vmatpush1.bf16.msra.mxu0 %v1239
        %1287 = vmatprep.subr.bf16.mxu0 0
        %1288 = vmatpush1.bf16.msra.mxu0 %v1240
        %1289 = vmatprep.mubr.bf16.mxu0 %v1059
        %1290 = vmatmul.mubr.bf16.gmra.mrb[0].mxu0 %v1058
        %v1291 = vpop.f32.mrb[0].mxu0
        %v1292 = vadd.f32 %v1159, %v1291
        %v1293 = vpop.f32.mrb[0].mxu0
        %v1294 = vpop.f32.mrb[0].mxu0
        %v1295 = vadd.f32 %v1159, %v1294
        %v1296 = vpop.f32.mrb[0].mxu0
        %1297 = vmatprep.mubr.bf16.mxu0 %v1061
        %1298 = vmatmul.mubr.bf16.gmra.mrb[0].mxu0 %v1060
        %v1299 = vpop.f32.mrb[0].mxu0
        %v1300 = vadd.f32 %v1159, %v1299
        %v1301 = vpop.f32.mrb[0].mxu0
        %v1302 = vpop.f32.mrb[0].mxu0
        %v1303 = vadd.f32 %v1159, %v1302
        %v1304 = vpop.f32.mrb[0].mxu0
        %1305 = vmatprep.mubr.bf16.mxu0 %v1063
        %1306 = vmatmul.mubr.bf16.gmra.mrb[0].mxu0 %v1062
        %v1307 = vpop.f32.mrb[0].mxu0
        %v1308 = vadd.f32 %v1159, %v1307
        %v1309 = vpop.f32.mrb[0].mxu0
        %v1310 = vpop.f32.mrb[0].mxu0
        %v1311 = vadd.f32 %v1159, %v1310
        %v1312 = vpop.f32.mrb[0].mxu0
        %1313 = vmatprep.mubr.bf16.mxu0 %v1065
        %1314 = vmatmul.mubr.bf16.gmra.mrb[0].mxu0 %v1064
        %v1315 = vpop.f32.mrb[0].mxu0
        %v1316 = vadd.f32 %v1159, %v1315
        %v1317 = vpop.f32.mrb[0].mxu0
        %v1318 = vpop.f32.mrb[0].mxu0
        %v1319 = vadd.f32 %v1159, %v1318
        %v1320 = vpop.f32.mrb[0].mxu0
        %1321 = vmatprep.mubr.bf16.mxu0 %v1067
        %1322 = vmatmul.mubr.bf16.gmra.mrb[0].mxu0 %v1066
        %v1323 = vpop.f32.mrb[0].mxu0
        %v1324 = vadd.f32 %v1159, %v1323
        %v1325 = vpop.f32.mrb[0].mxu0
        %v1326 = vpop.f32.mrb[0].mxu0
        %v1327 = vadd.f32 %v1159, %v1326
        %v1328 = vpop.f32.mrb[0].mxu0
        %1329 = vmatprep.mubr.bf16.mxu0 %v1069
        %1330 = vmatmul.mubr.bf16.gmra.mrb[0].mxu0 %v1068
        %v1331 = vpop.f32.mrb[0].mxu0
        %v1332 = vadd.f32 %v1159, %v1331
        %v1333 = vpop.f32.mrb[0].mxu0
        %v1334 = vpop.f32.mrb[0].mxu0
        %v1335 = vadd.f32 %v1159, %v1334
        %v1336 = vpop.f32.mrb[0].mxu0
        %1337 = vmatprep.mubr.bf16.mxu0 %v1071
        %1338 = vmatmul.mubr.bf16.gmra.mrb[0].mxu0 %v1070
        %v1339 = vpop.f32.mrb[0].mxu0
        %v1340 = vadd.f32 %v1159, %v1339
        %v1341 = vpop.f32.mrb[0].mxu0
        %v1342 = vpop.f32.mrb[0].mxu0
        %v1343 = vadd.f32 %v1159, %v1342
        %v1344 = vpop.f32.mrb[0].mxu0
        %1345 = vmatprep.mubr.bf16.mxu0 %v1073
        %1346 = vmatmul.mubr.bf16.gmra.mrb[0].mxu0 %v1072
        %v1347 = vpop.f32.mrb[0].mxu0
        %v1348 = vadd.f32 %v1159, %v1347
        %v1349 = vpop.f32.mrb[0].mxu0
        %v1350 = vpop.f32.mrb[0].mxu0
        %v1351 = vadd.f32 %v1159, %v1350
        %v1352 = vpop.f32.mrb[0].mxu0
        %1353 = vmatprep.mubr.bf16.mxu0 %v1075
        %1354 = vmatmul.mubr.bf16.gmra.mrb[0].mxu0 %v1074
        %v1355 = vpop.f32.mrb[0].mxu0
        %v1356 = vadd.f32 %v1159, %v1355
        %v1357 = vpop.f32.mrb[0].mxu0
        %v1358 = vpop.f32.mrb[0].mxu0
        %v1359 = vadd.f32 %v1159, %v1358
        %v1360 = vpop.f32.mrb[0].mxu0
        %1361 = vmatprep.mubr.bf16.mxu0 %v1077
        %1362 = vmatmul.mubr.bf16.gmra.mrb[0].mxu0 %v1076
        %v1363 = vpop.f32.mrb[0].mxu0
        %v1364 = vadd.f32 %v1159, %v1363
        %v1365 = vpop.f32.mrb[0].mxu0
        %v1366 = vpop.f32.mrb[0].mxu0
        %v1367 = vadd.f32 %v1159, %v1366
        %v1368 = vpop.f32.mrb[0].mxu0
        %1369 = vmatprep.mubr.bf16.mxu0 %v1079
        %1370 = vmatmul.mubr.bf16.gmra.mrb[0].mxu0 %v1078
        %v1371 = vpop.f32.mrb[0].mxu0
        %v1372 = vadd.f32 %v1159, %v1371
        %v1373 = vpop.f32.mrb[0].mxu0
        %v1374 = vpop.f32.mrb[0].mxu0
        %v1375 = vadd.f32 %v1159, %v1374
        %v1376 = vpop.f32.mrb[0].mxu0
        %1377 = vmatprep.mubr.bf16.mxu0 %v1081
        %1378 = vmatmul.mubr.bf16.gmra.mrb[0].mxu0 %v1080
        %v1379 = vpop.f32.mrb[0].mxu0
        %v1380 = vadd.f32 %v1159, %v1379
        %v1381 = vpop.f32.mrb[0].mxu0
        %v1382 = vpop.f32.mrb[0].mxu0
        %v1383 = vadd.f32 %v1159, %v1382
        %v1384 = vpop.f32.mrb[0].mxu0
        %1385 = vmatprep.mubr.bf16.mxu0 %v1083
        %1386 = vmatmul.mubr.bf16.gmra.mrb[0].mxu0 %v1082
        %v1387 = vpop.f32.mrb[0].mxu0
        %v1388 = vadd.f32 %v1159, %v1387
        %v1389 = vpop.f32.mrb[0].mxu0
        %v1390 = vpop.f32.mrb[0].mxu0
        %v1391 = vadd.f32 %v1159, %v1390
        %v1392 = vpop.f32.mrb[0].mxu0
        %1393 = vmatprep.mubr.bf16.mxu0 %v1085
        %1394 = vmatmul.mubr.bf16.gmra.mrb[0].mxu0 %v1084
        %v1395 = vpop.f32.mrb[0].mxu0
        %v1396 = vadd.f32 %v1159, %v1395
        %v1397 = vpop.f32.mrb[0].mxu0
        %v1398 = vpop.f32.mrb[0].mxu0
        %v1399 = vadd.f32 %v1159, %v1398
        %v1400 = vpop.f32.mrb[0].mxu0
        %1401 = vmatprep.mubr.bf16.mxu0 %v1087
        %1402 = vmatmul.mubr.bf16.gmra.mrb[0].mxu0 %v1086
        %v1403 = vpop.f32.mrb[0].mxu0
        %v1404 = vadd.f32 %v1159, %v1403
        %v1405 = vpop.f32.mrb[0].mxu0
        %v1406 = vpop.f32.mrb[0].mxu0
        %v1407 = vadd.f32 %v1159, %v1406
        %v1408 = vpop.f32.mrb[0].mxu0
        %1409 = vmatprep.mubr.bf16.mxu0 %v1089
        %1410 = vmatmul.mubr.bf16.gmra.mrb[0].mxu0 %v1088
        %v1411 = vpop.f32.mrb[0].mxu0
        %v1412 = vadd.f32 %v1159, %v1411
        %v1413 = vpop.f32.mrb[0].mxu0
        %v1414 = vpop.f32.mrb[0].mxu0
        %v1415 = vadd.f32 %v1159, %v1414
        %v1416 = vpop.f32.mrb[0].mxu0
        %1417 = vmatprep.mubr.bf16.mxu0 %v1091
        %1418 = vmatmul.mubr.bf16.gmra.mrb[0].mxu0 %v1090
        %v1419 = vpop.f32.mrb[0].mxu0
        %v1420 = vadd.f32 %v1159, %v1419
        %v1421 = vpop.f32.mrb[0].mxu0
        %v1422 = vpop.f32.mrb[0].mxu0
        %v1423 = vadd.f32 %v1159, %v1422
        %v1424 = vpop.f32.mrb[0].mxu0
        %1425 = vmatprep.mubr.bf16.mxu0 %v1093
        %1426 = vmatmul.mubr.bf16.gmra.mrb[0].mxu0 %v1092
        %v1427 = vpop.f32.mrb[0].mxu0
        %v1428 = vadd.f32 %v1159, %v1427
        %v1429 = vpop.f32.mrb[0].mxu0
        %v1430 = vpop.f32.mrb[0].mxu0
        %v1431 = vadd.f32 %v1159, %v1430
        %v1432 = vpop.f32.mrb[0].mxu0
        %1433 = vmatprep.mubr.bf16.mxu0 %v1095
        %1434 = vmatmul.mubr.bf16.gmra.mrb[0].mxu0 %v1094
        %v1435 = vpop.f32.mrb[0].mxu0
        %v1436 = vadd.f32 %v1159, %v1435
        %v1437 = vpop.f32.mrb[0].mxu0
        %v1438 = vpop.f32.mrb[0].mxu0
        %v1439 = vadd.f32 %v1159, %v1438
        %v1440 = vpop.f32.mrb[0].mxu0
        %1441 = vmatprep.mubr.bf16.mxu0 %v1097
        %1442 = vmatmul.mubr.bf16.gmra.mrb[0].mxu0 %v1096
        %v1443 = vpop.f32.mrb[0].mxu0
        %v1444 = vadd.f32 %v1159, %v1443
        %v1445 = vpop.f32.mrb[0].mxu0
        %v1446 = vpop.f32.mrb[0].mxu0
        %v1447 = vadd.f32 %v1159, %v1446
        %v1448 = vpop.f32.mrb[0].mxu0
        %1449 = vmatprep.mubr.bf16.mxu0 %v1099
        %1450 = vmatmul.mubr.bf16.gmra.mrb[0].mxu0 %v1098
        %v1451 = vpop.f32.mrb[0].mxu0
        %v1452 = vadd.f32 %v1159, %v1451
        %v1453 = vpop.f32.mrb[0].mxu0
        %v1454 = vpop.f32.mrb[0].mxu0
        %v1455 = vadd.f32 %v1159, %v1454
        %v1456 = vpop.f32.mrb[0].mxu0
        %1457 = vmatprep.mubr.bf16.mxu0 %v1101
        %1458 = vmatmul.mubr.bf16.gmra.mrb[0].mxu0 %v1100
        %v1459 = vpop.f32.mrb[0].mxu0
        %v1460 = vadd.f32 %v1159, %v1459
        %v1461 = vpop.f32.mrb[0].mxu0
        %v1462 = vpop.f32.mrb[0].mxu0
        %v1463 = vadd.f32 %v1159, %v1462
        %v1464 = vpop.f32.mrb[0].mxu0
        %1465 = vmatprep.mubr.bf16.mxu0 %v1103
        %1466 = vmatmul.mubr.bf16.gmra.mrb[0].mxu0 %v1102
        %v1467 = vpop.f32.mrb[0].mxu0
        %v1468 = vadd.f32 %v1159, %v1467
        %v1469 = vpop.f32.mrb[0].mxu0
        %v1470 = vpop.f32.mrb[0].mxu0
        %v1471 = vadd.f32 %v1159, %v1470
        %v1472 = vpop.f32.mrb[0].mxu0
        %1473 = vmatprep.mubr.bf16.mxu0 %v1105
        %1474 = vmatmul.mubr.bf16.gmra.mrb[0].mxu0 %v1104
        %v1475 = vpop.f32.mrb[0].mxu0
        %v1476 = vadd.f32 %v1159, %v1475
        %v1477 = vpop.f32.mrb[0].mxu0
        %v1478 = vpop.f32.mrb[0].mxu0
        %v1479 = vadd.f32 %v1159, %v1478
        %v1480 = vpop.f32.mrb[0].mxu0
        %1481 = vmatprep.mubr.bf16.mxu0 %v1107
        %1482 = vmatmul.mubr.bf16.gmra.mrb[0].mxu0 %v1106
        %v1483 = vpop.f32.mrb[0].mxu0
        %v1484 = vadd.f32 %v1159, %v1483
        %v1485 = vpop.f32.mrb[0].mxu0
        %v1486 = vpop.f32.mrb[0].mxu0
        %v1487 = vadd.f32 %v1159, %v1486
        %v1488 = vpop.f32.mrb[0].mxu0
        %1489 = vmatprep.mubr.bf16.mxu0 %v1109
        %1490 = vmatmul.mubr.bf16.gmra.mrb[0].mxu0 %v1108
        %v1491 = vpop.f32.mrb[0].mxu0
        %v1492 = vadd.f32 %v1159, %v1491
        %v1493 = vpop.f32.mrb[0].mxu0
        %v1494 = vpop.f32.mrb[0].mxu0
        %v1495 = vadd.f32 %v1159, %v1494
        %v1496 = vpop.f32.mrb[0].mxu0
        %1497 = vmatprep.mubr.bf16.mxu0 %v1111
        %1498 = vmatmul.mubr.bf16.gmra.mrb[0].mxu0 %v1110
        %v1499 = vpop.f32.mrb[0].mxu0
        %v1500 = vadd.f32 %v1159, %v1499
        %v1501 = vpop.f32.mrb[0].mxu0
        %v1502 = vpop.f32.mrb[0].mxu0
        %v1503 = vadd.f32 %v1159, %v1502
        %v1504 = vpop.f32.mrb[0].mxu0
        %1505 = vmatprep.mubr.bf16.mxu0 %v1113
        %1506 = vmatmul.mubr.bf16.gmra.mrb[0].mxu0 %v1112
        %v1507 = vpop.f32.mrb[0].mxu0
        %v1508 = vadd.f32 %v1159, %v1507
        %v1509 = vpop.f32.mrb[0].mxu0
        %v1510 = vpop.f32.mrb[0].mxu0
        %v1511 = vadd.f32 %v1159, %v1510
        %v1512 = vpop.f32.mrb[0].mxu0
        %1513 = vmatprep.mubr.bf16.mxu0 %v1115
        %1514 = vmatmul.mubr.bf16.gmra.mrb[0].mxu0 %v1114
        %v1515 = vpop.f32.mrb[0].mxu0
        %v1516 = vadd.f32 %v1159, %v1515
        %v1517 = vpop.f32.mrb[0].mxu0
        %v1518 = vpop.f32.mrb[0].mxu0
        %v1519 = vadd.f32 %v1159, %v1518
        %v1520 = vpop.f32.mrb[0].mxu0
        %1521 = vmatprep.mubr.bf16.mxu0 %v1117
        %1522 = vmatmul.mubr.bf16.gmra.mrb[0].mxu0 %v1116
        %v1523 = vpop.f32.mrb[0].mxu0
        %v1524 = vadd.f32 %v1159, %v1523
        %v1525 = vpop.f32.mrb[0].mxu0
        %v1526 = vpop.f32.mrb[0].mxu0
        %v1527 = vadd.f32 %v1159, %v1526
        %v1528 = vpop.f32.mrb[0].mxu0
        %1529 = vmatprep.mubr.bf16.mxu0 %v1119
        %1530 = vmatmul.mubr.bf16.gmra.mrb[0].mxu0 %v1118
        %v1531 = vpop.f32.mrb[0].mxu0
        %v1532 = vadd.f32 %v1159, %v1531
        %v1533 = vpop.f32.mrb[0].mxu0
        %v1534 = vpop.f32.mrb[0].mxu0
        %v1535 = vadd.f32 %v1159, %v1534
        %v1536 = vpop.f32.mrb[0].mxu0
        %1537 = vmatprep.mubr.bf16.mxu0 %v1121
        %1538 = vmatmul.mubr.bf16.gmra.mrb[0].mxu0 %v1120
        %v1539 = vpop.f32.mrb[0].mxu0
        %v1540 = vadd.f32 %v1159, %v1539
        %v1541 = vpop.f32.mrb[0].mxu0
        %v1542 = vpop.f32.mrb[0].mxu0
        %v1543 = vadd.f32 %v1159, %v1542
        %v1544 = vpop.f32.mrb[0].mxu0
        %1545 = vdwg.mxu0
        %1546 = vst [vmem:[%s364] sm:$0xff] %v1292
        %1547 = vst [vmem:[%s364 + $0x8] sm:$0xff] %v1295
        %1548 = vst [vmem:[%s364 + $0x10] sm:$0xff] %v1300
        %1549 = vst [vmem:[%s364 + $0x18] sm:$0xff] %v1303
        %1550 = vst [vmem:[%s364 + $0x20] sm:$0xff] %v1308
        %1551 = vst [vmem:[%s364 + $0x28] sm:$0xff] %v1311
        %1552 = vst [vmem:[%s364 + $0x30] sm:$0xff] %v1316
        %1553 = vst [vmem:[%s364 + $0x38] sm:$0xff] %v1319
        %1554 = vst [vmem:[%s364 + $0x40] sm:$0xff] %v1324
        %1555 = vst [vmem:[%s364 + $0x48] sm:$0xff] %v1327
        %1556 = vst [vmem:[%s364 + $0x50] sm:$0xff] %v1332
        %1557 = vst [vmem:[%s364 + $0x58] sm:$0xff] %v1335
        %1558 = vst [vmem:[%s364 + $0x60] sm:$0xff] %v1340
        %1559 = vst [vmem:[%s364 + $0x68] sm:$0xff] %v1343
        %1560 = vst [vmem:[%s364 + $0x70] sm:$0xff] %v1348
        %1561 = vst [vmem:[%s364 + $0x78] sm:$0xff] %v1351
        %1562 = vst [vmem:[%s364 + $0x80] sm:$0xff] %v1356
        %1563 = vst [vmem:[%s364 + $0x88] sm:$0xff] %v1359
        %1564 = vst [vmem:[%s364 + $0x90] sm:$0xff] %v1364
        %1565 = vst [vmem:[%s364 + $0x98] sm:$0xff] %v1367
        %1566 = vst [vmem:[%s364 + $0xa0] sm:$0xff] %v1372
        %1567 = vst [vmem:[%s364 + $0xa8] sm:$0xff] %v1375
        %1568 = vst [vmem:[%s364 + $0xb0] sm:$0xff] %v1380
        %1569 = vst [vmem:[%s364 + $0xb8] sm:$0xff] %v1383
        %1570 = vst [vmem:[%s364 + $0xc0] sm:$0xff] %v1388
        %1571 = vst [vmem:[%s364 + $0xc8] sm:$0xff] %v1391
        %1572 = vst [vmem:[%s364 + $0xd0] sm:$0xff] %v1396
        %1573 = vst [vmem:[%s364 + $0xd8] sm:$0xff] %v1399
        %1574 = vst [vmem:[%s364 + $0xe0] sm:$0xff] %v1404
        %1575 = vst [vmem:[%s364 + $0xe8] sm:$0xff] %v1407
        %1576 = vst [vmem:[%s364 + $0xf0] sm:$0xff] %v1412
        %1577 = vst [vmem:[%s364 + $0xf8] sm:$0xff] %v1415
        %1578 = vst [vmem:[%s364 + $0x100] sm:$0xff] %v1420
        %1579 = vst [vmem:[%s364 + $0x108] sm:$0xff] %v1423
        %1580 = vst [vmem:[%s364 + $0x110] sm:$0xff] %v1428
        %1581 = vst [vmem:[%s364 + $0x118] sm:$0xff] %v1431
        %1582 = vst [vmem:[%s364 + $0x120] sm:$0xff] %v1436
        %1583 = vst [vmem:[%s364 + $0x128] sm:$0xff] %v1439
        %1584 = vst [vmem:[%s364 + $0x130] sm:$0xff] %v1444
        %1585 = vst [vmem:[%s364 + $0x138] sm:$0xff] %v1447
        %1586 = vst [vmem:[%s364 + $0x140] sm:$0xff] %v1452
        %1587 = vst [vmem:[%s364 + $0x148] sm:$0xff] %v1455
        %1588 = vst [vmem:[%s364 + $0x150] sm:$0xff] %v1460
        %1589 = vst [vmem:[%s364 + $0x158] sm:$0xff] %v1463
        %1590 = vst [vmem:[%s364 + $0x160] sm:$0xff] %v1468
        %1591 = vst [vmem:[%s364 + $0x168] sm:$0xff] %v1471
        %1592 = vst [vmem:[%s364 + $0x170] sm:$0xff] %v1476
        %1593 = vst [vmem:[%s364 + $0x178] sm:$0xff] %v1479
        %1594 = vst [vmem:[%s364 + $0x180] sm:$0xff] %v1484
        %1595 = vst [vmem:[%s364 + $0x188] sm:$0xff] %v1487
        %1596 = vst [vmem:[%s364 + $0x190] sm:$0xff] %v1492
        %1597 = vst [vmem:[%s364 + $0x198] sm:$0xff] %v1495
        %1598 = vst [vmem:[%s364 + $0x1a0] sm:$0xff] %v1500
        %1599 = vst [vmem:[%s364 + $0x1a8] sm:$0xff] %v1503
        %1600 = vst [vmem:[%s364 + $0x1b0] sm:$0xff] %v1508
        %1601 = vst [vmem:[%s364 + $0x1b8] sm:$0xff] %v1511
        %1602 = vst [vmem:[%s364 + $0x1c0] sm:$0xff] %v1516
        %1603 = vst [vmem:[%s364 + $0x1c8] sm:$0xff] %v1519
        %1604 = vst [vmem:[%s364 + $0x1d0] sm:$0xff] %v1524
        %1605 = vst [vmem:[%s364 + $0x1d8] sm:$0xff] %v1527
        %1606 = vst [vmem:[%s364 + $0x1e0] sm:$0xff] %v1532
        %1607 = vst [vmem:[%s364 + $0x1e8] sm:$0xff] %v1535
        %1608 = vst [vmem:[%s364 + $0x1f0] sm:$0xff] %v1540
        %1609 = vst [vmem:[%s364 + $0x1f8] sm:$0xff] %v1543
        %s1610 = sand.u32 %s188, 1
        %s1611 = scalar_lea.sflag [#allocation5], %s1610
        %s1612 = sand.u32 %s188, 1
        %s1613 = smul.addr %s1612, 512
        %s1614 = scalar_lea.vmem [#allocation14], %s1613
        // Predicated region
        $region73: #{_time_derivative_call.1} parent=47 // pred_check
          %p1615 = pneg %p198
        $region74: #{_time_derivative_call.1} parent=47 // pred_check_branch
          %1617 = sbr.rel (%p1615) target = $region76
        $region75: #{_time_derivative_call.1} parent=47 // pred_region
          %s1618 = smul.u32 64, %s28
          %s1620 = ssub.s32 8192, 8192
          %1621 = vsyncadd %s1611, %s1620
          %s1622 = smul.addr %s1618, 128
          %s1623 = scalar_lea.hbm %s7, %s1622
          %s1624 = sshll.u32 %s1614, 4
          %s1625 = int_to_ptr.vmem [resolvable:$true] %s1624
          %1630 = dma.vmem_to_hbm [thread:$0]  %s1625, 8192, %s1623, %s1611, 128, 128, 8
        $region76: #{_time_derivative_call.1} parent=47 // pred_fallthru
          _
      $region48: #{_time_derivative_call.1} parent=5 // pred_fallthru
        _
      %p1631 = scmp.le.s32.totalorder 2, %s23
      // Predicated region
      $region77: #{_time_derivative_call.1} parent=5 // pred_check
        %p1632 = pneg %p1631
      $region78: #{_time_derivative_call.1} parent=5 // pred_check_branch
        %1634 = sbr.rel (%p1632) target = $region80
      $region79: #{_time_derivative_call.1} parent=5 // pred_region
        %s1635 = ssub.s32 %s23, 2
        // Predicated region
        $region81: #{_time_derivative_call.1} parent=79 // pred_check
          %p1636 = pneg %p204
        $region82: #{_time_derivative_call.1} parent=79 // pred_check_branch
          %1638 = sbr.rel (%p1636) target = $region84
        $region83: #{_time_derivative_call.1} parent=79 // pred_region
          %s1639 = sand.u32 %s189, 1
          %s1640 = scalar_lea.sflag [#allocation5], %s1639
          %s1641 = sand.u32 %s189, 1
          %s1642 = smul.addr %s1641, 512
          %s1643 = scalar_lea.vmem [#allocation14], %s1642
          %1644 = dma.done %s1640, 8192
        $region84: #{_time_derivative_call.1} parent=79 // pred_fallthru
          _
      $region80: #{_time_derivative_call.1} parent=5 // pred_fallthru
        _
    $region6: #{_time_derivative_call.1} parent=1 // loop_footer
      %s27 = sadd.s32 1, %s23
    $region7: #{_time_derivative_call.1} parent=1 // loop_footer_branch
      %22 = sbr.rel target = $region3
    $region8: #{_time_derivative_call.1} parent=1 // loop_exit
      _
    %1645 = vsyncpa [#allocation4], 1
    %s1646 = scalar_lea.sflag [#allocation4], 1
    %1647 = vsyncpa %s1646, 1
    %1648 = vsyncpa [#allocation7], 1
    %1649 = vsyncpa [#allocation10], 1
    %1650 = vsyncpa [#allocation13], 1
    %1651 = vsyncpa [#allocation5], 1
    %s1652 = scalar_lea.sflag [#allocation5], 1
    %1653 = vsyncpa %s1652, 1

</llo_original>
